<compile_context>
chip_gen: v5e
topology: v5e:2x2
jax: 0.10.0
libtpu: 0.0.40
codegen_flags: <defaults>
</compile_context>

<pallas_src>
import functools
import math

import jax
import jax.numpy as jnp
from jax.experimental import pallas as pl
from jax.experimental.pallas import tpu as pltpu

HIDDEN = 512
K_L1 = 7 * 7 * 64          # 3136 flattened conv features per tower
K_L1_PAD = 3200            # padded up to a multiple of 128 lanes
TK_L1 = 640                # K tile for the l1 reduction (5 chunks, 128-aligned)


def _round_up(x, m):
    return ((x + m - 1) // m) * m


# ---------------------------------------------------------------------------
# Pallas kernel 1: M-tiled fused  out = act(x @ w + b)   (conv layers)
# ---------------------------------------------------------------------------
def _mm_bias_act_kernel(x_ref, w_ref, b_ref, o_ref, *, act):
    y = jnp.dot(x_ref[...], w_ref[...], preferred_element_type=jnp.float32)
    y = y + b_ref[...]                       # (1, N) broadcasts over rows
    if act == "relu":
        y = jnp.maximum(y, 0.0)
    elif act == "leaky_relu":                # nn.LeakyReLU default slope 0.01
        y = jnp.where(y >= 0.0, y, 0.01 * y)
    o_ref[...] = y.astype(o_ref.dtype)


def matmul_bias_act(x, w, b, act="none", tm_max=512):
    """x: (M, K) -> (Mp, N) f32, Mp = 8-aligned row-padded M, tiled over rows."""
    M, K = x.shape
    Kw, N = w.shape
    assert K == Kw, (K, Kw)

    n_tiles = max(1, -(-M // tm_max))        # ceil-div
    tm = _round_up(-(-M // n_tiles), 8)      # per-tile rows, sublane aligned
    Mp = tm * n_tiles
    if Mp != M:
        x = jnp.pad(x, ((0, Mp - M), (0, 0)))
    x = x.astype(jnp.bfloat16)

    return pl.pallas_call(
        functools.partial(_mm_bias_act_kernel, act=act),
        out_shape=jax.ShapeDtypeStruct((Mp, N), jnp.float32),
        grid=(n_tiles,),
        in_specs=[
            pl.BlockSpec((tm, K), lambda i: (i, 0)),
            pl.BlockSpec((K, N), lambda i: (0, 0)),
            pl.BlockSpec((1, N), lambda i: (0, 0)),
        ],
        out_specs=pl.BlockSpec((tm, N), lambda i: (i, 0)),
        compiler_params=pltpu.CompilerParams(
            dimension_semantics=("parallel",)),
    )(x, w, b.reshape(1, N))


# ---------------------------------------------------------------------------
# Pallas kernel 2: both towers' full linear stacks in one pipelined call.
#   grid = (tower, k_chunk).  tower 0 = predictor (l1->relu->l2->relu->l3),
#   tower 1 = target (l1 only).  The l1 weights stream K-chunk by K-chunk
#   (double-buffered by the Pallas pipeline); l2/l3 weights are resident.
# ---------------------------------------------------------------------------
def _towers_linear_kernel(h_ref, w1_ref, b1_ref, w2_ref, b2_ref, w3_ref, b3_ref,
                          o_ref, acc_ref):
    t = pl.program_id(0)          # 0 = predictor tower, 1 = target tower
    k = pl.program_id(1)          # chunk of the K_L1_PAD-wide l1 reduction

    @pl.when(k == 0)
    def _():
        acc_ref[...] = jnp.zeros_like(acc_ref)

    acc_ref[...] += jnp.dot(h_ref[...], w1_ref[...],
                            preferred_element_type=jnp.float32)

    @pl.when(k == pl.num_programs(1) - 1)
    def _():
        y1 = acc_ref[...] + b1_ref[...]

        @pl.when(t == 0)          # predictor: ReLU -> l2 -> ReLU -> l3
        def _():
            h1 = jnp.maximum(y1, 0.0).astype(jnp.bfloat16)
            y2 = jnp.dot(h1, w2_ref[...],
                         preferred_element_type=jnp.float32) + b2_ref[...]
            h2 = jnp.maximum(y2, 0.0).astype(jnp.bfloat16)
            o_ref[...] = jnp.dot(h2, w3_ref[...],
                                 preferred_element_type=jnp.float32) + b3_ref[...]

        @pl.when(t == 1)          # target: single linear head, no activation
        def _():
            o_ref[...] = y1


def towers_linear(h_stacked, lin):
    """h_stacked: (2, Mp, K_L1_PAD) bf16 -> (2, Mp, 512) f32 (pred, targ)."""
    _, Mp, Kp = h_stacked.shape
    nk = Kp // TK_L1
    return pl.pallas_call(
        _towers_linear_kernel,
        out_shape=jax.ShapeDtypeStruct((2, Mp, HIDDEN), jnp.float32),
        grid=(2, nk),
        in_specs=[
            pl.BlockSpec((pl.Squeezed(), Mp, TK_L1), lambda t, k: (t, 0, k)),
            pl.BlockSpec((pl.Squeezed(), TK_L1, HIDDEN), lambda t, k: (t, k, 0)),
            pl.BlockSpec((pl.Squeezed(), 1, HIDDEN), lambda t, k: (t, 0, 0)),
            pl.BlockSpec((HIDDEN, HIDDEN), lambda t, k: (0, 0)),
            pl.BlockSpec((1, HIDDEN), lambda t, k: (0, 0)),
            pl.BlockSpec((HIDDEN, HIDDEN), lambda t, k: (0, 0)),
            pl.BlockSpec((1, HIDDEN), lambda t, k: (0, 0)),
        ],
        out_specs=pl.BlockSpec((pl.Squeezed(), Mp, HIDDEN),
                               lambda t, k: (t, 0, 0)),
        scratch_shapes=[pltpu.VMEM((Mp, HIDDEN), jnp.float32)],
        compiler_params=pltpu.CompilerParams(
            dimension_semantics=("parallel", "arbitrary")),
    )(h_stacked, lin["w1"], lin["b1"], lin["w2"], lin["b2"],
      lin["w3"], lin["b3"])


# ---------------------------------------------------------------------------
# Channels-last im2col (plain-JAX glue) + conv wrapper.
# ---------------------------------------------------------------------------
def _im2col_nhwc(x, k, s):
    """x: (B, H, W, C) -> (B*OH*OW, k*k*C) with feature order (kh, kw, c)."""
    B, H, W, C = x.shape
    OH = (H - k) // s + 1
    OW = (W - k) // s + 1
    cols = []
    for kh in range(k):
        for kw in range(k):
            cols.append(x[:, kh: kh + (OH - 1) * s + 1: s,
                             kw: kw + (OW - 1) * s + 1: s, :])
    patches = jnp.stack(cols, axis=3)                 # (B, OH, OW, k*k, C)
    return patches.reshape(B * OH * OW, k * k * C), OH, OW


def conv_fused(x, w, b, k, stride):
    """Channels-last conv for both towers fused along Cout."""
    B = x.shape[0]
    cout = w.shape[1]
    patches, OH, OW = _im2col_nhwc(x, k, stride)
    y = matmul_bias_act(patches, w, b, act="leaky_relu")
    return y[: B * OH * OW].reshape(B, OH, OW, cout)


# ---------------------------------------------------------------------------
# Parameter construction (orthogonal init, gain=sqrt(2), zero biases — mirrors
# the PyTorch __init__), transformed into the fused kernel layouts.
# ---------------------------------------------------------------------------
def _conv_w_kkc(w):
    """(Cout, Cin, k, k) -> (k*k*Cin, Cout); rows ordered (kh, kw, cin)."""
    cout, cin, k, _ = w.shape
    return jnp.transpose(w, (2, 3, 1, 0)).reshape(k * k * cin, cout)


def _fuse_cout(wp, wt, pad_to=None):
    """Two convs sharing the same input: concat along Cout (optionally lane-pad)."""
    fused = jnp.concatenate([_conv_w_kkc(wp), _conv_w_kkc(wt)], axis=1)
    if pad_to is not None and fused.shape[1] < pad_to:
        fused = jnp.pad(fused, ((0, 0), (0, pad_to - fused.shape[1])))
    return fused


def _fuse_blockdiag(wp, wt):
    """Two convs on the channel-concatenated tower activations: block-diag."""
    cout, cin, k, _ = wp.shape
    wpt = jnp.transpose(wp, (2, 3, 1, 0))             # (k, k, cin, cout)
    wtt = jnp.transpose(wt, (2, 3, 1, 0))
    top = jnp.concatenate([wpt, jnp.zeros_like(wpt)], axis=3)
    bot = jnp.concatenate([jnp.zeros_like(wtt), wtt], axis=3)
    return jnp.concatenate([top, bot], axis=2).reshape(k * k * 2 * cin, 2 * cout)


def _lin_w_hwc(w, c, h, wd):
    """PyTorch (out, c*h*w) Linear weight (NCHW flatten) -> (h*w*c, out) rows
    matching our channels-last flatten, zero-padded to K_L1_PAD rows."""
    out = w.shape[0]
    wr = jnp.transpose(w.reshape(out, c, h, wd), (2, 3, 1, 0))
    wr = wr.reshape(h * wd * c, out)
    return jnp.pad(wr, ((0, K_L1_PAD - h * wd * c), (0, 0)))


def _make_params(key, input_size):
    gain = math.sqrt(2.0)
    ortho = jax.nn.initializers.orthogonal(scale=gain)

    def conv_w(k_, cout, cin, ksz):
        # PyTorch nn.init.orthogonal_ flattens conv weight to (cout, cin*k*k)
        w2d = ortho(k_, (cout, cin * ksz * ksz), jnp.float32)
        return w2d.reshape(cout, cin, ksz, ksz)

    def lin_w(k_, fout, fin):
        return ortho(k_, (fout, fin), jnp.float32)    # PyTorch layout (out, in)

    ks = jax.random.split(key, 10)
    p_c1, t_c1 = conv_w(ks[0], 32, input_size, 8), conv_w(ks[1], 32, input_size, 8)
    p_c2, t_c2 = conv_w(ks[2], 64, 32, 4), conv_w(ks[3], 64, 32, 4)
    p_c3, t_c3 = conv_w(ks[4], 64, 64, 2), conv_w(ks[5], 64, 64, 2)
    p_l1, t_l1 = lin_w(ks[6], HIDDEN, K_L1), lin_w(ks[7], HIDDEN, K_L1)
    p_l2, p_l3 = lin_w(ks[8], HIDDEN, HIDDEN), lin_w(ks[9], HIDDEN, HIDDEN)

    bf = jnp.bfloat16
    conv = {
        # conv1 output padded 64 -> 128 lanes (zero weight cols); real channels
        # 0..63 are sliced back out in the wrapper before conv2's im2col.
        "w1": _fuse_cout(p_c1, t_c1, pad_to=128).astype(bf),  # (8*8*Cin, 128)
        "b1": jnp.zeros((128,), jnp.float32),
        "w2": _fuse_blockdiag(p_c2, t_c2).astype(bf),         # (4*4*64, 128)
        "b2": jnp.zeros((128,), jnp.float32),
        "w3": _fuse_blockdiag(p_c3, t_c3).astype(bf),         # (2*2*128, 128)
        "b3": jnp.zeros((128,), jnp.float32),
    }
    lin = {
        "w1": jnp.stack([_lin_w_hwc(p_l1, 64, 7, 7),
                         _lin_w_hwc(t_l1, 64, 7, 7)], axis=0).astype(bf),
        "b1": jnp.zeros((2, 1, HIDDEN), jnp.float32),
        "w2": p_l2.T.astype(bf),                       # (512, 512), x @ w layout
        "b2": jnp.zeros((1, HIDDEN), jnp.float32),
        "w3": p_l3.T.astype(bf),
        "b3": jnp.zeros((1, HIDDEN), jnp.float32),
    }
    return {"conv": conv, "lin": lin}


# ---------------------------------------------------------------------------
# Forward pass
# ---------------------------------------------------------------------------
def rnd_forward(params, x):
    """x: (B, C, H, W) f32 (PyTorch NCHW). Returns (predict, target), (B, 512)."""
    B = x.shape[0]
    conv, lin = params["conv"], params["lin"]

    xh = jnp.transpose(x, (0, 2, 3, 1))                        # NCHW -> NHWC once
    a = conv_fused(xh, conv["w1"], conv["b1"], k=8, stride=4)  # (B, 18, 18, 128)
    a = a[..., :64]                                            # drop lane padding
    a = conv_fused(a, conv["w2"], conv["b2"], k=4, stride=2)   # (B, 8, 8, 128)
    a = conv_fused(a, conv["w3"], conv["b3"], k=2, stride=1)   # (B, 7, 7, 128)

    # Channels 0..63 = predictor tower, 64..127 = target tower.
    hp = a[..., :64].reshape(B, -1)                            # (B, 3136), (h,w,c)
    ht = a[..., 64:].reshape(B, -1)
    Mp = _round_up(B, 8)
    h = jnp.stack([hp, ht], axis=0)                            # (2, B, 3136)
    h = jnp.pad(h, ((0, 0), (0, Mp - B), (0, K_L1_PAD - K_L1)))
    h = h.astype(jnp.bfloat16)

    out = towers_linear(h, lin)                                # (2, Mp, 512) f32
    return out[0, :B], out[1, :B]


if __name__ == "__main__":
    # Spatial size is fixed by the 7*7*64 Flatten->Linear:
    # 76 -> conv(8,4) -> 18 -> conv(4,2) -> 8 -> conv(2,1) -> 7.
    B, C, H, W = 2, 4, 76, 76
    key = jax.random.PRNGKey(0)
    kx, kp = jax.random.split(key)
    x = jax.random.normal(kx, (B, C, H, W), dtype=jnp.float32)

    params = _make_params(kp, input_size=C)

    fwd = jax.jit(rnd_forward)
    predict, target = fwd(params, x)
    jax.block_until_ready((predict, target))

    assert predict.shape == (B, HIDDEN) and target.shape == (B, HIDDEN)
    assert bool(jnp.all(jnp.isfinite(predict)))
    assert bool(jnp.all(jnp.isfinite(target)))
    print("KERNEL_OK")
</pallas_src>

<mosaic_0001>
module attributes {stable_mosaic.version = 11 : i64} {
  func.func @_mm_bias_act_kernel(%arg0: i32, %arg1: memref<328x256xbf16, #tpu.memory_space<vmem>>, %arg2: memref<256x128xbf16, #tpu.memory_space<vmem>>, %arg3: memref<1x128xf32, #tpu.memory_space<vmem>>, %arg4: memref<328x128xf32, #tpu.memory_space<vmem>>) attributes {dimension_semantics = [#tpu.dimension_semantics<parallel>], iteration_bounds = array<i64: 2>, scalar_prefetch = 0 : i64, scratch_operands = 0 : i64, tpu.core_type = #tpu.core_type<tc>, window_params = [{transform_indices = @transform_0, window_bounds = array<i64: 328, 256>}, {pipeline_mode = #tpu.pipeline_mode<synchronous>, transform_indices = @transform_1, window_bounds = array<i64: 256, 128>}, {pipeline_mode = #tpu.pipeline_mode<synchronous>, transform_indices = @transform_2, window_bounds = array<i64: 1, 128>}, {transform_indices = @transform_3, window_bounds = array<i64: 328, 128>}]} {
    %c0 = arith.constant 0 : index
    %c0_0 = arith.constant 0 : index
    %0 = vector.load %arg1[%c0, %c0_0] : memref<328x256xbf16, #tpu.memory_space<vmem>>, vector<328x256xbf16>
    %c0_1 = arith.constant 0 : index
    %c0_2 = arith.constant 0 : index
    %1 = vector.load %arg2[%c0_1, %c0_2] : memref<256x128xbf16, #tpu.memory_space<vmem>>, vector<256x128xbf16>
    %cst = arith.constant dense<0.000000e+00> : vector<328x128xf32>
    %2 = tpu.matmul %0, %1, %cst {dimension_numbers = #tpu.dot_dimension_numbers<[1], [0], [0], [1], [0, 0, 1, 1], [], []>} : vector<328x256xbf16>, vector<256x128xbf16>, vector<328x128xf32> -> vector<328x128xf32>
    %c0_3 = arith.constant 0 : index
    %c0_4 = arith.constant 0 : index
    %3 = vector.load %arg3[%c0_3, %c0_4] : memref<1x128xf32, #tpu.memory_space<vmem>>, vector<1x128xf32>
    %4 = vector.broadcast %3 : vector<1x128xf32> to vector<328x128xf32>
    %5 = arith.addf %2, %4 : vector<328x128xf32>
    %cst_5 = arith.constant 0.000000e+00 : f32
    %6 = vector.broadcast %cst_5 : f32 to vector<328x128xf32>
    %7 = arith.cmpf oge, %5, %6 : vector<328x128xf32>
    %cst_6 = arith.constant 0.00999999977 : f32
    %8 = vector.broadcast %cst_6 : f32 to vector<328x128xf32>
    %9 = arith.mulf %8, %5 : vector<328x128xf32>
    %10 = arith.select %7, %5, %9 : vector<328x128xi1>, vector<328x128xf32>
    %c0_7 = arith.constant 0 : index
    %c0_8 = arith.constant 0 : index
    %11 = vector.load %arg4[%c0_7, %c0_8] : memref<328x128xf32, #tpu.memory_space<vmem>>, vector<328x128xf32>
    tpu.vector_store %arg4[%c0_7, %c0_8], %10 {strides = array<i32>} : memref<328x128xf32, #tpu.memory_space<vmem>>, vector<328x128xf32>,
    return
  }
  func.func @transform_0(%arg0: i32) -> (i32, i32) {
    %c0_i32 = arith.constant 0 : i32
    %c0_i32_0 = arith.constant 0 : i32
    return %arg0, %c0_i32 : i32, i32
  }
  func.func @transform_1(%arg0: i32) -> (i32, i32) {
    %c0_i32 = arith.constant 0 : i32
    %c0_i32_0 = arith.constant 0 : i32
    %c0_i32_1 = arith.constant 0 : i32
    return %c0_i32, %c0_i32_0 : i32, i32
  }
  func.func @transform_2(%arg0: i32) -> (i32, i32) {
    %c0_i32 = arith.constant 0 : i32
    %c0_i32_0 = arith.constant 0 : i32
    %c0_i32_1 = arith.constant 0 : i32
    return %c0_i32, %c0_i32_0 : i32, i32
  }
  func.func @transform_3(%arg0: i32) -> (i32, i32) {
    %c0_i32 = arith.constant 0 : i32
    %c0_i32_0 = arith.constant 0 : i32
    return %arg0, %c0_i32 : i32, i32
  }
}

module attributes {stable_mosaic.version = 11 : i64} {
  func.func @_mm_bias_act_kernel(%arg0: i32, %arg1: memref<128x1024xbf16, #tpu.memory_space<vmem>>, %arg2: memref<1024x128xbf16, #tpu.memory_space<vmem>>, %arg3: memref<1x128xf32, #tpu.memory_space<vmem>>, %arg4: memref<128x128xf32, #tpu.memory_space<vmem>>) attributes {dimension_semantics = [#tpu.dimension_semantics<parallel>], iteration_bounds = array<i64: 1>, scalar_prefetch = 0 : i64, scratch_operands = 0 : i64, tpu.core_type = #tpu.core_type<tc>, window_params = [{transform_indices = @transform_0, window_bounds = array<i64: 128, 1024>}, {pipeline_mode = #tpu.pipeline_mode<synchronous>, transform_indices = @transform_1, window_bounds = array<i64: 1024, 128>}, {pipeline_mode = #tpu.pipeline_mode<synchronous>, transform_indices = @transform_2, window_bounds = array<i64: 1, 128>}, {transform_indices = @transform_3, window_bounds = array<i64: 128, 128>}]} {
    %c0 = arith.constant 0 : index
    %c0_0 = arith.constant 0 : index
    %0 = vector.load %arg1[%c0, %c0_0] : memref<128x1024xbf16, #tpu.memory_space<vmem>>, vector<128x1024xbf16>
    %c0_1 = arith.constant 0 : index
    %c0_2 = arith.constant 0 : index
    %1 = vector.load %arg2[%c0_1, %c0_2] : memref<1024x128xbf16, #tpu.memory_space<vmem>>, vector<1024x128xbf16>
    %cst = arith.constant dense<0.000000e+00> : vector<128x128xf32>
    %2 = tpu.matmul %0, %1, %cst {dimension_numbers = #tpu.dot_dimension_numbers<[1], [0], [0], [1], [0, 0, 1, 1], [], []>} : vector<128x1024xbf16>, vector<1024x128xbf16>, vector<128x128xf32> -> vector<128x128xf32>
    %c0_3 = arith.constant 0 : index
    %c0_4 = arith.constant 0 : index
    %3 = vector.load %arg3[%c0_3, %c0_4] : memref<1x128xf32, #tpu.memory_space<vmem>>, vector<1x128xf32>
    %4 = vector.broadcast %3 : vector<1x128xf32> to vector<128x128xf32>
    %5 = arith.addf %2, %4 : vector<128x128xf32>
    %cst_5 = arith.constant 0.000000e+00 : f32
    %6 = vector.broadcast %cst_5 : f32 to vector<128x128xf32>
    %7 = arith.cmpf oge, %5, %6 : vector<128x128xf32>
    %cst_6 = arith.constant 0.00999999977 : f32
    %8 = vector.broadcast %cst_6 : f32 to vector<128x128xf32>
    %9 = arith.mulf %8, %5 : vector<128x128xf32>
    %10 = arith.select %7, %5, %9 : vector<128x128xi1>, vector<128x128xf32>
    %c0_7 = arith.constant 0 : index
    %c0_8 = arith.constant 0 : index
    %11 = vector.load %arg4[%c0_7, %c0_8] : memref<128x128xf32, #tpu.memory_space<vmem>>, vector<128x128xf32>
    tpu.vector_store %arg4[%c0_7, %c0_8], %10 {strides = array<i32>} : memref<128x128xf32, #tpu.memory_space<vmem>>, vector<128x128xf32>,
    return
  }
  func.func @transform_0(%arg0: i32) -> (i32, i32) {
    %c0_i32 = arith.constant 0 : i32
    %c0_i32_0 = arith.constant 0 : i32
    return %arg0, %c0_i32 : i32, i32
  }
  func.func @transform_1(%arg0: i32) -> (i32, i32) {
    %c0_i32 = arith.constant 0 : i32
    %c0_i32_0 = arith.constant 0 : i32
    %c0_i32_1 = arith.constant 0 : i32
    return %c0_i32, %c0_i32_0 : i32, i32
  }
  func.func @transform_2(%arg0: i32) -> (i32, i32) {
    %c0_i32 = arith.constant 0 : i32
    %c0_i32_0 = arith.constant 0 : i32
    %c0_i32_1 = arith.constant 0 : i32
    return %c0_i32, %c0_i32_0 : i32, i32
  }
  func.func @transform_3(%arg0: i32) -> (i32, i32) {
    %c0_i32 = arith.constant 0 : i32
    %c0_i32_0 = arith.constant 0 : i32
    return %arg0, %c0_i32 : i32, i32
  }
}

module attributes {stable_mosaic.version = 11 : i64} {
  func.func @_mm_bias_act_kernel(%arg0: i32, %arg1: memref<104x512xbf16, #tpu.memory_space<vmem>>, %arg2: memref<512x128xbf16, #tpu.memory_space<vmem>>, %arg3: memref<1x128xf32, #tpu.memory_space<vmem>>, %arg4: memref<104x128xf32, #tpu.memory_space<vmem>>) attributes {dimension_semantics = [#tpu.dimension_semantics<parallel>], iteration_bounds = array<i64: 1>, scalar_prefetch = 0 : i64, scratch_operands = 0 : i64, tpu.core_type = #tpu.core_type<tc>, window_params = [{transform_indices = @transform_0, window_bounds = array<i64: 104, 512>}, {pipeline_mode = #tpu.pipeline_mode<synchronous>, transform_indices = @transform_1, window_bounds = array<i64: 512, 128>}, {pipeline_mode = #tpu.pipeline_mode<synchronous>, transform_indices = @transform_2, window_bounds = array<i64: 1, 128>}, {transform_indices = @transform_3, window_bounds = array<i64: 104, 128>}]} {
    %c0 = arith.constant 0 : index
    %c0_0 = arith.constant 0 : index
    %0 = vector.load %arg1[%c0, %c0_0] : memref<104x512xbf16, #tpu.memory_space<vmem>>, vector<104x512xbf16>
    %c0_1 = arith.constant 0 : index
    %c0_2 = arith.constant 0 : index
    %1 = vector.load %arg2[%c0_1, %c0_2] : memref<512x128xbf16, #tpu.memory_space<vmem>>, vector<512x128xbf16>
    %cst = arith.constant dense<0.000000e+00> : vector<104x128xf32>
    %2 = tpu.matmul %0, %1, %cst {dimension_numbers = #tpu.dot_dimension_numbers<[1], [0], [0], [1], [0, 0, 1, 1], [], []>} : vector<104x512xbf16>, vector<512x128xbf16>, vector<104x128xf32> -> vector<104x128xf32>
    %c0_3 = arith.constant 0 : index
    %c0_4 = arith.constant 0 : index
    %3 = vector.load %arg3[%c0_3, %c0_4] : memref<1x128xf32, #tpu.memory_space<vmem>>, vector<1x128xf32>
    %4 = vector.broadcast %3 : vector<1x128xf32> to vector<104x128xf32>
    %5 = arith.addf %2, %4 : vector<104x128xf32>
    %cst_5 = arith.constant 0.000000e+00 : f32
    %6 = vector.broadcast %cst_5 : f32 to vector<104x128xf32>
    %7 = arith.cmpf oge, %5, %6 : vector<104x128xf32>
    %cst_6 = arith.constant 0.00999999977 : f32
    %8 = vector.broadcast %cst_6 : f32 to vector<104x128xf32>
    %9 = arith.mulf %8, %5 : vector<104x128xf32>
    %10 = arith.select %7, %5, %9 : vector<104x128xi1>, vector<104x128xf32>
    %c0_7 = arith.constant 0 : index
    %c0_8 = arith.constant 0 : index
    %11 = vector.load %arg4[%c0_7, %c0_8] : memref<104x128xf32, #tpu.memory_space<vmem>>, vector<104x128xf32>
    tpu.vector_store %arg4[%c0_7, %c0_8], %10 {strides = array<i32>} : memref<104x128xf32, #tpu.memory_space<vmem>>, vector<104x128xf32>,
    return
  }
  func.func @transform_0(%arg0: i32) -> (i32, i32) {
    %c0_i32 = arith.constant 0 : i32
    %c0_i32_0 = arith.constant 0 : i32
    return %arg0, %c0_i32 : i32, i32
  }
  func.func @transform_1(%arg0: i32) -> (i32, i32) {
    %c0_i32 = arith.constant 0 : i32
    %c0_i32_0 = arith.constant 0 : i32
    %c0_i32_1 = arith.constant 0 : i32
    return %c0_i32, %c0_i32_0 : i32, i32
  }
  func.func @transform_2(%arg0: i32) -> (i32, i32) {
    %c0_i32 = arith.constant 0 : i32
    %c0_i32_0 = arith.constant 0 : i32
    %c0_i32_1 = arith.constant 0 : i32
    return %c0_i32, %c0_i32_0 : i32, i32
  }
  func.func @transform_3(%arg0: i32) -> (i32, i32) {
    %c0_i32 = arith.constant 0 : i32
    %c0_i32_0 = arith.constant 0 : i32
    return %arg0, %c0_i32 : i32, i32
  }
}

module attributes {stable_mosaic.version = 11 : i64} {
  func.func @_towers_linear_kernel(%arg0: i32, %arg1: i32, %arg2: memref<1x8x640xbf16, #tpu.memory_space<vmem>>, %arg3: memref<1x640x512xbf16, #tpu.memory_space<vmem>>, %arg4: memref<1x1x512xf32, #tpu.memory_space<vmem>>, %arg5: memref<512x512xbf16, #tpu.memory_space<vmem>>, %arg6: memref<1x512xf32, #tpu.memory_space<vmem>>, %arg7: memref<512x512xbf16, #tpu.memory_space<vmem>>, %arg8: memref<1x512xf32, #tpu.memory_space<vmem>>, %arg9: memref<1x8x512xf32, #tpu.memory_space<vmem>>, %arg10: memref<8x512xf32, #tpu.memory_space<vmem>>) attributes {dimension_semantics = [#tpu.dimension_semantics<parallel>, #tpu.dimension_semantics<arbitrary>], iteration_bounds = array<i64: 2, 5>, scalar_prefetch = 0 : i64, scratch_operands = 1 : i64, tpu.core_type = #tpu.core_type<tc>, window_params = [{transform_indices = @transform_0, window_bounds = array<i64: 1, 8, 640>}, {transform_indices = @transform_1, window_bounds = array<i64: 1, 640, 512>}, {transform_indices = @transform_2, window_bounds = array<i64: 1, 1, 512>}, {pipeline_mode = #tpu.pipeline_mode<synchronous>, transform_indices = @transform_3, window_bounds = array<i64: 512, 512>}, {pipeline_mode = #tpu.pipeline_mode<synchronous>, transform_indices = @transform_4, window_bounds = array<i64: 1, 512>}, {pipeline_mode = #tpu.pipeline_mode<synchronous>, transform_indices = @transform_5, window_bounds = array<i64: 512, 512>}, {pipeline_mode = #tpu.pipeline_mode<synchronous>, transform_indices = @transform_6, window_bounds = array<i64: 1, 512>}, {transform_indices = @transform_7, window_bounds = array<i64: 1, 8, 512>}]} {
    %c0_i32 = arith.constant 0 : i32
    %0 = arith.cmpi eq, %arg1, %c0_i32 : i32
    %1 = arith.extui %0 : i1 to i32
    %c0_i32_0 = arith.constant 0 : i32
    %2 = arith.cmpi ne, %1, %c0_i32_0 : i32
    scf.if %2 {
      %cst_11 = arith.constant 0.000000e+00 : f32
      %14 = vector.broadcast %cst_11 : f32 to vector<8x512xf32>
      %c0_12 = arith.constant 0 : index
      %c0_13 = arith.constant 0 : index
      %15 = vector.load %arg10[%c0_12, %c0_13] : memref<8x512xf32, #tpu.memory_space<vmem>>, vector<8x512xf32>
      tpu.vector_store %arg10[%c0_12, %c0_13], %14 {strides = array<i32>} : memref<8x512xf32, #tpu.memory_space<vmem>>, vector<8x512xf32>,
    } else {
    }
    %c0 = arith.constant 0 : index
    %c0_1 = arith.constant 0 : index
    %3 = vector.load %arg10[%c0, %c0_1] : memref<8x512xf32, #tpu.memory_space<vmem>>, vector<8x512xf32>
    %c0_2 = arith.constant 0 : index
    %c0_3 = arith.constant 0 : index
    %c0_4 = arith.constant 0 : index
    %4 = vector.load %arg2[%c0_2, %c0_3, %c0_4] : memref<1x8x640xbf16, #tpu.memory_space<vmem>>, vector<1x8x640xbf16>
    %5 = vector.shape_cast %4 : vector<1x8x640xbf16> to vector<8x640xbf16>
    %c0_5 = arith.constant 0 : index
    %c0_6 = arith.constant 0 : index
    %c0_7 = arith.constant 0 : index
    %6 = vector.load %arg3[%c0_5, %c0_6, %c0_7] : memref<1x640x512xbf16, #tpu.memory_space<vmem>>, vector<1x640x512xbf16>
    %7 = vector.shape_cast %6 : vector<1x640x512xbf16> to vector<640x512xbf16>
    %cst = arith.constant dense<0.000000e+00> : vector<8x512xf32>
    %8 = tpu.matmul %5, %7, %cst {dimension_numbers = #tpu.dot_dimension_numbers<[1], [0], [0], [1], [0, 0, 1, 1], [], []>} : vector<8x640xbf16>, vector<640x512xbf16>, vector<8x512xf32> -> vector<8x512xf32>
    %9 = arith.addf %3, %8 : vector<8x512xf32>
    %c0_8 = arith.constant 0 : index
    %c0_9 = arith.constant 0 : index
    %10 = vector.load %arg10[%c0_8, %c0_9] : memref<8x512xf32, #tpu.memory_space<vmem>>, vector<8x512xf32>
    tpu.vector_store %arg10[%c0_8, %c0_9], %9 {strides = array<i32>} : memref<8x512xf32, #tpu.memory_space<vmem>>, vector<8x512xf32>,
    %c4_i32 = arith.constant 4 : i32
    %11 = arith.cmpi eq, %arg1, %c4_i32 : i32
    %12 = arith.extui %11 : i1 to i32
    %c0_i32_10 = arith.constant 0 : i32
    %13 = arith.cmpi ne, %12, %c0_i32_10 : i32
    scf.if %13 {
      %c0_11 = arith.constant 0 : index
      %c0_12 = arith.constant 0 : index
      %14 = vector.load %arg10[%c0_11, %c0_12] : memref<8x512xf32, #tpu.memory_space<vmem>>, vector<8x512xf32>
      %c0_13 = arith.constant 0 : index
      %c0_14 = arith.constant 0 : index
      %c0_15 = arith.constant 0 : index
      %15 = vector.load %arg4[%c0_13, %c0_14, %c0_15] : memref<1x1x512xf32, #tpu.memory_space<vmem>>, vector<1x1x512xf32>
      %16 = vector.shape_cast %15 : vector<1x1x512xf32> to vector<1x512xf32>
      %17 = vector.broadcast %16 : vector<1x512xf32> to vector<8x512xf32>
      %18 = arith.addf %14, %17 : vector<8x512xf32>
      %c0_i32_16 = arith.constant 0 : i32
      %19 = arith.cmpi eq, %arg0, %c0_i32_16 : i32
      %20 = arith.extui %19 : i1 to i32
      %c0_i32_17 = arith.constant 0 : i32
      %21 = arith.cmpi ne, %20, %c0_i32_17 : i32
      scf.if %21 {
        %cst_19 = arith.constant 0.000000e+00 : f32
        %25 = vector.broadcast %cst_19 : f32 to vector<8x512xf32>
        %26 = arith.maximumf %18, %25 : vector<8x512xf32>
        %27 = arith.truncf %26 : vector<8x512xf32> to vector<8x512xbf16>
        %c0_20 = arith.constant 0 : index
        %c0_21 = arith.constant 0 : index
        %28 = vector.load %arg5[%c0_20, %c0_21] : memref<512x512xbf16, #tpu.memory_space<vmem>>, vector<512x512xbf16>
        %cst_22 = arith.constant dense<0.000000e+00> : vector<8x512xf32>
        %29 = tpu.matmul %27, %28, %cst_22 {dimension_numbers = #tpu.dot_dimension_numbers<[1], [0], [0], [1], [0, 0, 1, 1], [], []>} : vector<8x512xbf16>, vector<512x512xbf16>, vector<8x512xf32> -> vector<8x512xf32>
        %c0_23 = arith.constant 0 : index
        %c0_24 = arith.constant 0 : index
        %30 = vector.load %arg6[%c0_23, %c0_24] : memref<1x512xf32, #tpu.memory_space<vmem>>, vector<1x512xf32>
        %31 = vector.broadcast %30 : vector<1x512xf32> to vector<8x512xf32>
        %32 = arith.addf %29, %31 : vector<8x512xf32>
        %cst_25 = arith.constant 0.000000e+00 : f32
        %33 = vector.broadcast %cst_25 : f32 to vector<8x512xf32>
        %34 = arith.maximumf %32, %33 : vector<8x512xf32>
        %35 = arith.truncf %34 : vector<8x512xf32> to vector<8x512xbf16>
        %c0_26 = arith.constant 0 : index
        %c0_27 = arith.constant 0 : index
        %36 = vector.load %arg7[%c0_26, %c0_27] : memref<512x512xbf16, #tpu.memory_space<vmem>>, vector<512x512xbf16>
        %cst_28 = arith.constant dense<0.000000e+00> : vector<8x512xf32>
        %37 = tpu.matmul %35, %36, %cst_28 {dimension_numbers = #tpu.dot_dimension_numbers<[1], [0], [0], [1], [0, 0, 1, 1], [], []>} : vector<8x512xbf16>, vector<512x512xbf16>, vector<8x512xf32> -> vector<8x512xf32>
        %c0_29 = arith.constant 0 : index
        %c0_30 = arith.constant 0 : index
        %38 = vector.load %arg8[%c0_29, %c0_30] : memref<1x512xf32, #tpu.memory_space<vmem>>, vector<1x512xf32>
        %39 = vector.broadcast %38 : vector<1x512xf32> to vector<8x512xf32>
        %40 = arith.addf %37, %39 : vector<8x512xf32>
        %c0_31 = arith.constant 0 : index
        %c0_32 = arith.constant 0 : index
        %c0_33 = arith.constant 0 : index
        %41 = vector.load %arg9[%c0_31, %c0_32, %c0_33] : memref<1x8x512xf32, #tpu.memory_space<vmem>>, vector<1x8x512xf32>
        %42 = vector.shape_cast %41 : vector<1x8x512xf32> to vector<8x512xf32>
        %43 = vector.shape_cast %40 : vector<8x512xf32> to vector<1x8x512xf32>
        tpu.vector_store %arg9[%c0_31, %c0_32, %c0_33], %43 {strides = array<i32>} : memref<1x8x512xf32, #tpu.memory_space<vmem>>, vector<1x8x512xf32>,
      } else {
      }
      %c1_i32 = arith.constant 1 : i32
      %22 = arith.cmpi eq, %arg0, %c1_i32 : i32
      %23 = arith.extui %22 : i1 to i32
      %c0_i32_18 = arith.constant 0 : i32
      %24 = arith.cmpi ne, %23, %c0_i32_18 : i32
      scf.if %24 {
        %c0_19 = arith.constant 0 : index
        %c0_20 = arith.constant 0 : index
        %c0_21 = arith.constant 0 : index
        %25 = vector.load %arg9[%c0_19, %c0_20, %c0_21] : memref<1x8x512xf32, #tpu.memory_space<vmem>>, vector<1x8x512xf32>
        %26 = vector.shape_cast %25 : vector<1x8x512xf32> to vector<8x512xf32>
        %27 = vector.shape_cast %18 : vector<8x512xf32> to vector<1x8x512xf32>
        tpu.vector_store %arg9[%c0_19, %c0_20, %c0_21], %27 {strides = array<i32>} : memref<1x8x512xf32, #tpu.memory_space<vmem>>, vector<1x8x512xf32>,
      } else {
      }
    } else {
    }
    return
  }
  func.func @transform_0(%arg0: i32, %arg1: i32) -> (i32, i32, i32) {
    %c0_i32 = arith.constant 0 : i32
    %c0_i32_0 = arith.constant 0 : i32
    return %arg0, %c0_i32, %arg1 : i32, i32, i32
  }
  func.func @transform_1(%arg0: i32, %arg1: i32) -> (i32, i32, i32) {
    %c0_i32 = arith.constant 0 : i32
    %c0_i32_0 = arith.constant 0 : i32
    return %arg0, %arg1, %c0_i32 : i32, i32, i32
  }
  func.func @transform_2(%arg0: i32, %arg1: i32) -> (i32, i32, i32) {
    %c0_i32 = arith.constant 0 : i32
    %c0_i32_0 = arith.constant 0 : i32
    %c0_i32_1 = arith.constant 0 : i32
    return %arg0, %c0_i32, %c0_i32_0 : i32, i32, i32
  }
  func.func @transform_3(%arg0: i32, %arg1: i32) -> (i32, i32) {
    %c0_i32 = arith.constant 0 : i32
    %c0_i32_0 = arith.constant 0 : i32
    %c0_i32_1 = arith.constant 0 : i32
    return %c0_i32, %c0_i32_0 : i32, i32
  }
  func.func @transform_4(%arg0: i32, %arg1: i32) -> (i32, i32) {
    %c0_i32 = arith.constant 0 : i32
    %c0_i32_0 = arith.constant 0 : i32
    %c0_i32_1 = arith.constant 0 : i32
    return %c0_i32, %c0_i32_0 : i32, i32
  }
  func.func @transform_5(%arg0: i32, %arg1: i32) -> (i32, i32) {
    %c0_i32 = arith.constant 0 : i32
    %c0_i32_0 = arith.constant 0 : i32
    %c0_i32_1 = arith.constant 0 : i32
    return %c0_i32, %c0_i32_0 : i32, i32
  }
  func.func @transform_6(%arg0: i32, %arg1: i32) -> (i32, i32) {
    %c0_i32 = arith.constant 0 : i32
    %c0_i32_0 = arith.constant 0 : i32
    %c0_i32_1 = arith.constant 0 : i32
    return %c0_i32, %c0_i32_0 : i32, i32
  }
  func.func @transform_7(%arg0: i32, %arg1: i32) -> (i32, i32, i32) {
    %c0_i32 = arith.constant 0 : i32
    %c0_i32_0 = arith.constant 0 : i32
    %c0_i32_1 = arith.constant 0 : i32
    return %arg0, %c0_i32, %c0_i32_0 : i32, i32, i32
  }
}

</mosaic_0001>

<llo_original>
// kernel: rnd_forward.4
$region0: #{rnd_forward.4}
  #allocation0 [shape = 'u32[]', space=smem, size = 0x4, offset = 0x4, fixed_abs, tag = 'smem constant byte address 0x4 - core index']
  #allocation1 [shape = 'u32[72,128]{1,0:T(1,128)}', space=vmem, size = 0x9000, scoped, tag = 'internal scratch']
  %s0 = inlined_call_operand.vmem [shape: bf16[656,256], index: 0, kind: input, shape index: {}]
  %s1 = inlined_call_operand.vmem [shape: bf16[256,128], index: 1, kind: input, shape index: {}]
  %s2 = inlined_call_operand.vmem [shape: f32[1,128], index: 2, kind: input, shape index: {}]
  %s3 = inlined_call_operand.vmem [shape: f32[656,128], index: 3, kind: output, shape index: {}]
  %s4 = sld [smem:[#allocation0]]
  $region45: #{rnd_forward.4} parent=0
    _
  %s6 = ssub.s32 1, %s4
  %s7 = scalar_select 0, %s6, %s4
  loop: start=0, step=1, limit=4
  $region2: #{rnd_forward.4} parent=0 // loop_pre_header
    _
  $region3: #{rnd_forward.4} parent=0 // loop_header
    %s9 = sphi 0, %s13
    %p10 = scmp.ge.s32.totalorder %s9, 4
    %s19 = sphi 0, %s21
    %s22 = sphi 0, %s19
    %s23 = sphi 0, %s22
    %s39 = sphi 0, %s23
    %s43 = sphi 0, %s43
    %s45 = sphi 0, %s43
    %s46 = sphi 0, %s45
    %s60 = sphi 0, %s46
    %s64 = sphi 0, %s64
    %s66 = sphi 0, %s64
    %s67 = sphi 0, %s66
    %s81 = sphi 0, %s67
    %s87 = sphi 0, %s89
    %s90 = sphi 0, %s87
    %s91 = sphi 0, %s90
    %s107 = sphi 0, %s91
  $region4: #{rnd_forward.4} parent=0 // loop_header_branch
    %12 = sbr.rel (%p10) target = $region8
  $region5: #{rnd_forward.4} parent=0 // loop_body
    %s14 = ssub.s32 %s9, 1
    %s15 = ssub.s32 %s9, 2
    %s16 = sadd.s32 %s9, 1
    %s17 = ssub.s32 %s9, %s16
    %p18 = scmp.eq.s32.totalorder %s17, 0
    %s20 = sadd.s32 %s19, 1
    %s21 = scalar_select %p18, %s19, %s20
    %p24 = pneg %p18
    %p25 = scmp.eq.s32.totalorder %s9, 1
    %p26 = por %p24, %p25
    %p27 = scmp.ne.s32.totalorder %s19, %s22
    %p28 = scmp.eq.s32.totalorder %s9, 0
    %p29 = por %p27, %p28
    %p30 = scmp.ne.s32.totalorder %s19, %s22
    %p31 = scmp.eq.s32.totalorder %s14, 1
    %p32 = por %p30, %p31
    %p33 = scmp.ne.s32.totalorder %s22, %s23
    %p34 = scmp.eq.s32.totalorder %s14, 0
    %p35 = por %p33, %p34
    %p36 = scmp.ne.s32.totalorder %s22, %s23
    %p37 = scmp.eq.s32.totalorder %s15, 1
    %p38 = por %p36, %p37
    %p40 = scmp.ne.s32.totalorder %s23, %s39
    %p41 = scmp.eq.s32.totalorder %s15, 0
    %p42 = por %p40, %p41
    %s44 = sadd.s32 %s43, 1
    %p47 = scmp.eq.s32.totalorder %s9, 1
    %p48 = scmp.ne.s32.totalorder %s43, %s45
    %p49 = scmp.eq.s32.totalorder %s9, 0
    %p50 = por %p48, %p49
    %p51 = scmp.ne.s32.totalorder %s43, %s45
    %p52 = scmp.eq.s32.totalorder %s14, 1
    %p53 = por %p51, %p52
    %p54 = scmp.ne.s32.totalorder %s45, %s46
    %p55 = scmp.eq.s32.totalorder %s14, 0
    %p56 = por %p54, %p55
    %p57 = scmp.ne.s32.totalorder %s45, %s46
    %p58 = scmp.eq.s32.totalorder %s15, 1
    %p59 = por %p57, %p58
    %p61 = scmp.ne.s32.totalorder %s46, %s60
    %p62 = scmp.eq.s32.totalorder %s15, 0
    %p63 = por %p61, %p62
    %s65 = sadd.s32 %s64, 1
    %p68 = scmp.eq.s32.totalorder %s9, 1
    %p69 = scmp.ne.s32.totalorder %s64, %s66
    %p70 = scmp.eq.s32.totalorder %s9, 0
    %p71 = por %p69, %p70
    %p72 = scmp.ne.s32.totalorder %s64, %s66
    %p73 = scmp.eq.s32.totalorder %s14, 1
    %p74 = por %p72, %p73
    %p75 = scmp.ne.s32.totalorder %s66, %s67
    %p76 = scmp.eq.s32.totalorder %s14, 0
    %p77 = por %p75, %p76
    %p78 = scmp.ne.s32.totalorder %s66, %s67
    %p79 = scmp.eq.s32.totalorder %s15, 1
    %p80 = por %p78, %p79
    %p82 = scmp.ne.s32.totalorder %s67, %s81
    %p83 = scmp.eq.s32.totalorder %s15, 0
    %p84 = por %p82, %p83
    %s85 = ssub.s32 %s9, %s16
    %p86 = scmp.eq.s32.totalorder %s85, 0
    %s88 = sadd.s32 %s87, 1
    %s89 = scalar_select %p86, %s87, %s88
    %p92 = pneg %p86
    %p93 = scmp.eq.s32.totalorder %s9, 1
    %p94 = por %p92, %p93
    %p95 = scmp.ne.s32.totalorder %s87, %s90
    %p96 = scmp.eq.s32.totalorder %s9, 0
    %p97 = por %p95, %p96
    %p98 = scmp.ne.s32.totalorder %s87, %s90
    %p99 = scmp.eq.s32.totalorder %s14, 1
    %p100 = por %p98, %p99
    %p101 = scmp.ne.s32.totalorder %s90, %s91
    %p102 = scmp.eq.s32.totalorder %s14, 0
    %p103 = por %p101, %p102
    %p104 = scmp.ne.s32.totalorder %s90, %s91
    %p105 = scmp.eq.s32.totalorder %s15, 1
    %p106 = por %p104, %p105
    %p108 = scmp.ne.s32.totalorder %s91, %s107
    %p109 = scmp.eq.s32.totalorder %s15, 0
    %p110 = por %p108, %p109
    %p111 = scmp.le.s32.totalorder 1, %s9
    %p112 = scmp.lt.s32.totalorder %s9, 3
    %p113 = pnand %p111, %p112
    %p114 = pneg %p113
    // Predicated region
    $region9: #{rnd_forward.4} parent=5 // pred_check
      _
    $region10: #{rnd_forward.4} parent=5 // pred_check_branch
      %116 = sbr.rel (%p113) target = $region12
    $region11: #{rnd_forward.4} parent=5 // pred_region
      %s117 = ssub.s32 %s9, 1
      // Predicated region
      $region13: #{rnd_forward.4} parent=11 // pred_check
        %p118 = pneg %p56
      $region14: #{rnd_forward.4} parent=11 // pred_check_branch
        %120 = sbr.rel (%p118) target = $region16
      $region15: #{rnd_forward.4} parent=11 // pred_region
        _
      $region16: #{rnd_forward.4} parent=11 // pred_fallthru
        _
      // Predicated region
      $region17: #{rnd_forward.4} parent=11 // pred_check
        %p121 = pneg %p77
      $region18: #{rnd_forward.4} parent=11 // pred_check_branch
        %123 = sbr.rel (%p121) target = $region20
      $region19: #{rnd_forward.4} parent=11 // pred_region
        _
      $region20: #{rnd_forward.4} parent=11 // pred_fallthru
        _
    $region12: #{rnd_forward.4} parent=5 // pred_fallthru
      _
    %p124 = scmp.lt.s32.totalorder %s9, 2
    // Predicated region
    $region21: #{rnd_forward.4} parent=5 // pred_check
      %p125 = pneg %p124
    $region22: #{rnd_forward.4} parent=5 // pred_check_branch
      %127 = sbr.rel (%p125) target = $region24
    $region23: #{rnd_forward.4} parent=5 // pred_region
      // Predicated region
      $region25: #{rnd_forward.4} parent=23 // pred_check
        %p128 = pneg %p29
      $region26: #{rnd_forward.4} parent=23 // pred_check_branch
        %130 = sbr.rel (%p128) target = $region28
      $region27: #{rnd_forward.4} parent=23 // pred_region
        %s131 = smul.u32 41, %s9
        %p132 = scmp.lt.s32.totalorder %s131, 81
        %s133 = scalar_select %p132, %s131, 81
        %s134 = smul.addr %s133, 2
        %s135 = smul.addr %s134, 4
        %s136 = scalar_lea.vmem %s0, %s135
        %s137 = smul.u32 41, %s9
      $region28: #{rnd_forward.4} parent=23 // pred_fallthru
        _
    $region24: #{rnd_forward.4} parent=5 // pred_fallthru
      _
    %p138 = scmp.le.s32.totalorder 1, %s9
    %p139 = scmp.lt.s32.totalorder %s9, 3
    %p140 = pnand %p138, %p139
    %p141 = pneg %p140
    // Predicated region
    $region29: #{rnd_forward.4} parent=5 // pred_check
      _
    $region30: #{rnd_forward.4} parent=5 // pred_check_branch
      %143 = sbr.rel (%p140) target = $region32
    $region31: #{rnd_forward.4} parent=5 // pred_region
      %s144 = ssub.s32 %s9, 1
      %s145 = smul.u32 41, %s14
      %p146 = scmp.lt.s32.totalorder %s145, 81
      %s147 = scalar_select %p146, %s145, 81
      %s148 = smul.addr %s147, 2
      %s149 = smul.addr %s148, 4
      %s150 = scalar_lea.vmem %s0, %s149
      %p151 = pneg %p35
      %p152 = pneg %p32
      %p153 = pneg %p56
      %p154 = pneg %p53
      %p155 = pneg %p77
      %p156 = pneg %p74
      %p157 = pneg %p103
      %p158 = pneg %p100
      %s159 = smul.u32 41, %s14
      %p160 = scmp.lt.s32.totalorder %s159, 81
      %s161 = scalar_select %p160, %s159, 81
      %s162 = smul.addr %s161, 8
      %s163 = scalar_lea.vmem %s3, %s162
      %s164 = smul.u32 41, %s14
      %p165 = scmp.lt.s32.totalorder %s164, 81
      %s166 = scalar_select %p165, %s164, 81
      %s167 = smul.addr %s166, 2
      %s168 = smul.addr %s167, 4
      %s169 = scalar_lea.vmem %s0, %s168
      %s170 = smul.u32 41, %s14
      %s171 = smul.u32 41, %s14
      %p172 = scmp.lt.s32.totalorder %s171, 81
      %s173 = scalar_select %p172, %s171, 81
      %s174 = smul.addr %s173, 8
      %s175 = scalar_lea.vmem %s3, %s174
      %s176 = smul.u32 41, %s14
      %v177 = vld [vmem:[%s169] sm:$0xff]
      %v178 = vld [vmem:[%s169 + $0x8] sm:$0xff]
      %v179 = vld [vmem:[%s169 + $0x10] sm:$0xff]
      %v180 = vld [vmem:[%s169 + $0x18] sm:$0xff]
      %v181 = vld [vmem:[%s169 + $0x20] sm:$0xff]
      %v182 = vld [vmem:[%s169 + $0x28] sm:$0xff]
      %v183 = vld [vmem:[%s169 + $0x30] sm:$0xff]
      %v184 = vld [vmem:[%s169 + $0x38] sm:$0xff]
      %v185 = vld [vmem:[%s169 + $0x40] sm:$0xff]
      %v186 = vld [vmem:[%s169 + $0x48] sm:$0xff]
      %v187 = vld [vmem:[%s169 + $0x50] sm:$0xff]
      %v188 = vld [vmem:[%s169 + $0x58] sm:$0xff]
      %v189 = vld [vmem:[%s169 + $0x60] sm:$0xff]
      %v190 = vld [vmem:[%s169 + $0x68] sm:$0xff]
      %v191 = vld [vmem:[%s169 + $0x70] sm:$0xff]
      %v192 = vld [vmem:[%s169 + $0x78] sm:$0xff]
      %v193 = vld [vmem:[%s169 + $0x80] sm:$0xff]
      %v194 = vld [vmem:[%s169 + $0x88] sm:$0xff]
      %v195 = vld [vmem:[%s169 + $0x90] sm:$0xff]
      %v196 = vld [vmem:[%s169 + $0x98] sm:$0xff]
      %v197 = vld [vmem:[%s169 + $0xa0] sm:$0xff]
      %v198 = vld [vmem:[%s169 + $0xa8] sm:$0xff]
      %v199 = vld [vmem:[%s169 + $0xb0] sm:$0xff]
      %v200 = vld [vmem:[%s169 + $0xb8] sm:$0xff]
      %v201 = vld [vmem:[%s169 + $0xc0] sm:$0xff]
      %v202 = vld [vmem:[%s169 + $0xc8] sm:$0xff]
      %v203 = vld [vmem:[%s169 + $0xd0] sm:$0xff]
      %v204 = vld [vmem:[%s169 + $0xd8] sm:$0xff]
      %v205 = vld [vmem:[%s169 + $0xe0] sm:$0xff]
      %v206 = vld [vmem:[%s169 + $0xe8] sm:$0xff]
      %v207 = vld [vmem:[%s169 + $0xf0] sm:$0xff]
      %v208 = vld [vmem:[%s169 + $0xf8] sm:$0xff]
      %v209 = vld [vmem:[%s169 + $0x100] sm:$0xff]
      %v210 = vld [vmem:[%s169 + $0x108] sm:$0xff]
      %v211 = vld [vmem:[%s169 + $0x110] sm:$0xff]
      %v212 = vld [vmem:[%s169 + $0x118] sm:$0xff]
      %v213 = vld [vmem:[%s169 + $0x120] sm:$0xff]
      %v214 = vld [vmem:[%s169 + $0x128] sm:$0xff]
      %v215 = vld [vmem:[%s169 + $0x130] sm:$0xff]
      %v216 = vld [vmem:[%s169 + $0x138] sm:$0xff]
      %v217 = vld [vmem:[%s169 + $0x140] sm:$0xff]
      %v218 = vld [vmem:[%s1] sm:$0xf]
      %v219 = vld [vmem:[%s1 + $0x4] sm:$0xf]
      %v220 = vld [vmem:[%s1 + $0x8] sm:$0xf]
      %v221 = vld [vmem:[%s1 + $0xc] sm:$0xf]
      %v222 = vld [vmem:[%s1 + $0x10] sm:$0xf]
      %v223 = vld [vmem:[%s1 + $0x14] sm:$0xf]
      %v224 = vld [vmem:[%s1 + $0x18] sm:$0xf]
      %v225 = vld [vmem:[%s1 + $0x1c] sm:$0xf]
      %v226 = vld [vmem:[%s1 + $0x20] sm:$0xf]
      %v227 = vld [vmem:[%s1 + $0x24] sm:$0xf]
      %v228 = vld [vmem:[%s1 + $0x28] sm:$0xf]
      %v229 = vld [vmem:[%s1 + $0x2c] sm:$0xf]
      %v230 = vld [vmem:[%s1 + $0x30] sm:$0xf]
      %v231 = vld [vmem:[%s1 + $0x34] sm:$0xf]
      %v232 = vld [vmem:[%s1 + $0x38] sm:$0xf]
      %v233 = vld [vmem:[%s1 + $0x3c] sm:$0xf]
      %v234 = vld [vmem:[%s1 + $0x40] sm:$0xf]
      %v235 = vld [vmem:[%s1 + $0x44] sm:$0xf]
      %v236 = vld [vmem:[%s1 + $0x48] sm:$0xf]
      %v237 = vld [vmem:[%s1 + $0x4c] sm:$0xf]
      %v238 = vld [vmem:[%s1 + $0x50] sm:$0xf]
      %v239 = vld [vmem:[%s1 + $0x54] sm:$0xf]
      %v240 = vld [vmem:[%s1 + $0x58] sm:$0xf]
      %v241 = vld [vmem:[%s1 + $0x5c] sm:$0xf]
      %v242 = vld [vmem:[%s1 + $0x60] sm:$0xf]
      %v243 = vld [vmem:[%s1 + $0x64] sm:$0xf]
      %v244 = vld [vmem:[%s1 + $0x68] sm:$0xf]
      %v245 = vld [vmem:[%s1 + $0x6c] sm:$0xf]
      %v246 = vld [vmem:[%s1 + $0x70] sm:$0xf]
      %v247 = vld [vmem:[%s1 + $0x74] sm:$0xf]
      %v248 = vld [vmem:[%s1 + $0x78] sm:$0xf]
      %v249 = vld [vmem:[%s1 + $0x7c] sm:$0xf]
      %v250 = vld [vmem:[%s2] sm:$0x1]
      %v252 = vperm.slane %v250, 0
      %v295 = vunpack.c.l.b16 %v177
      %v296 = vunpack.c.h.b16 %v177
      %v297 = vunpack.c.l.b16 %v178
      %v298 = vunpack.c.h.b16 %v178
      %v299 = vunpack.c.l.b16 %v179
      %v300 = vunpack.c.h.b16 %v179
      %v301 = vunpack.c.l.b16 %v180
      %v302 = vunpack.c.h.b16 %v180
      %v303 = vunpack.c.l.b16 %v181
      %v304 = vunpack.c.h.b16 %v181
      %v305 = vunpack.c.l.b16 %v182
      %v306 = vunpack.c.h.b16 %v182
      %v307 = vunpack.c.l.b16 %v183
      %v308 = vunpack.c.h.b16 %v183
      %v309 = vunpack.c.l.b16 %v184
      %v310 = vunpack.c.h.b16 %v184
      %v311 = vunpack.c.l.b16 %v185
      %v312 = vunpack.c.h.b16 %v185
      %v313 = vunpack.c.l.b16 %v186
      %v314 = vunpack.c.h.b16 %v186
      %v315 = vunpack.c.l.b16 %v187
      %v316 = vunpack.c.h.b16 %v187
      %v317 = vunpack.c.l.b16 %v188
      %v318 = vunpack.c.h.b16 %v188
      %v319 = vunpack.c.l.b16 %v189
      %v320 = vunpack.c.h.b16 %v189
      %v321 = vunpack.c.l.b16 %v190
      %v322 = vunpack.c.h.b16 %v190
      %v323 = vunpack.c.l.b16 %v191
      %v324 = vunpack.c.h.b16 %v191
      %v325 = vunpack.c.l.b16 %v192
      %v326 = vunpack.c.h.b16 %v192
      %v327 = vunpack.c.l.b16 %v193
      %v328 = vunpack.c.h.b16 %v193
      %v329 = vunpack.c.l.b16 %v194
      %v330 = vunpack.c.h.b16 %v194
      %v331 = vunpack.c.l.b16 %v195
      %v332 = vunpack.c.h.b16 %v195
      %v333 = vunpack.c.l.b16 %v196
      %v334 = vunpack.c.h.b16 %v196
      %v335 = vunpack.c.l.b16 %v197
      %v336 = vunpack.c.h.b16 %v197
      %v337 = vunpack.c.l.b16 %v198
      %v338 = vunpack.c.h.b16 %v198
      %v339 = vunpack.c.l.b16 %v199
      %v340 = vunpack.c.h.b16 %v199
      %v341 = vunpack.c.l.b16 %v200
      %v342 = vunpack.c.h.b16 %v200
      %v343 = vunpack.c.l.b16 %v201
      %v344 = vunpack.c.h.b16 %v201
      %v345 = vunpack.c.l.b16 %v202
      %v346 = vunpack.c.h.b16 %v202
      %v347 = vunpack.c.l.b16 %v203
      %v348 = vunpack.c.h.b16 %v203
      %v349 = vunpack.c.l.b16 %v204
      %v350 = vunpack.c.h.b16 %v204
      %v351 = vunpack.c.l.b16 %v205
      %v352 = vunpack.c.h.b16 %v205
      %v353 = vunpack.c.l.b16 %v206
      %v354 = vunpack.c.h.b16 %v206
      %v355 = vunpack.c.l.b16 %v207
      %v356 = vunpack.c.h.b16 %v207
      %v357 = vunpack.c.l.b16 %v208
      %v358 = vunpack.c.h.b16 %v208
      %v359 = vunpack.c.l.b16 %v209
      %v360 = vunpack.c.h.b16 %v209
      %v361 = vunpack.c.l.b16 %v210
      %v362 = vunpack.c.h.b16 %v210
      %v363 = vunpack.c.l.b16 %v211
      %v364 = vunpack.c.h.b16 %v211
      %v365 = vunpack.c.l.b16 %v212
      %v366 = vunpack.c.h.b16 %v212
      %v367 = vunpack.c.l.b16 %v213
      %v368 = vunpack.c.h.b16 %v213
      %v369 = vunpack.c.l.b16 %v214
      %v370 = vunpack.c.h.b16 %v214
      %v371 = vunpack.c.l.b16 %v215
      %v372 = vunpack.c.h.b16 %v215
      %v373 = vunpack.c.l.b16 %v216
      %v374 = vunpack.c.h.b16 %v216
      %v375 = vunpack.c.l.b16 %v217
      %v376 = vunpack.c.h.b16 %v217
      %v377 = vpack.c.b16 %v297, %v295
      %v378 = vpack.c.b16 %v298, %v296
      %v379 = vpack.c.b16 %v301, %v299
      %v380 = vpack.c.b16 %v302, %v300
      %v381 = vpack.c.b16 %v305, %v303
      %v382 = vpack.c.b16 %v306, %v304
      %v383 = vpack.c.b16 %v309, %v307
      %v384 = vpack.c.b16 %v310, %v308
      %v385 = vpack.c.b16 %v313, %v311
      %v386 = vpack.c.b16 %v314, %v312
      %v387 = vpack.c.b16 %v317, %v315
      %v388 = vpack.c.b16 %v318, %v316
      %v389 = vpack.c.b16 %v321, %v319
      %v390 = vpack.c.b16 %v322, %v320
      %v391 = vpack.c.b16 %v325, %v323
      %v392 = vpack.c.b16 %v326, %v324
      %v393 = vpack.c.b16 %v329, %v327
      %v394 = vpack.c.b16 %v330, %v328
      %v395 = vpack.c.b16 %v333, %v331
      %v396 = vpack.c.b16 %v334, %v332
      %v397 = vpack.c.b16 %v337, %v335
      %v398 = vpack.c.b16 %v338, %v336
      %v399 = vpack.c.b16 %v341, %v339
      %v400 = vpack.c.b16 %v342, %v340
      %v401 = vpack.c.b16 %v345, %v343
      %v402 = vpack.c.b16 %v346, %v344
      %v403 = vpack.c.b16 %v349, %v347
      %v404 = vpack.c.b16 %v350, %v348
      %v405 = vpack.c.b16 %v353, %v351
      %v406 = vpack.c.b16 %v354, %v352
      %v407 = vpack.c.b16 %v357, %v355
      %v408 = vpack.c.b16 %v358, %v356
      %v409 = vpack.c.b16 %v361, %v359
      %v410 = vpack.c.b16 %v362, %v360
      %v411 = vpack.c.b16 %v365, %v363
      %v412 = vpack.c.b16 %v366, %v364
      %v413 = vpack.c.b16 %v369, %v367
      %v414 = vpack.c.b16 %v370, %v368
      %v415 = vpack.c.b16 %v373, %v371
      %v416 = vpack.c.b16 %v374, %v372
      %v417 = vpack.c.b16 %v375, %v375
      %v418 = vpack.c.b16 %v376, %v376
      %v493 = vunpack.c.l.b16 %v218
      %v494 = vunpack.c.l.b16 %v219
      %v495 = vunpack.c.l.b16 %v220
      %v496 = vunpack.c.l.b16 %v221
      %v497 = vunpack.c.l.b16 %v222
      %v498 = vunpack.c.l.b16 %v223
      %v499 = vunpack.c.l.b16 %v224
      %v500 = vunpack.c.l.b16 %v225
      %v501 = vunpack.c.l.b16 %v226
      %v502 = vunpack.c.l.b16 %v227
      %v503 = vunpack.c.l.b16 %v228
      %v504 = vunpack.c.l.b16 %v229
      %v505 = vunpack.c.l.b16 %v230
      %v506 = vunpack.c.l.b16 %v231
      %v507 = vunpack.c.l.b16 %v232
      %v508 = vunpack.c.l.b16 %v233
      %v509 = vunpack.c.l.b16 %v234
      %v510 = vunpack.c.l.b16 %v235
      %v511 = vunpack.c.l.b16 %v236
      %v512 = vunpack.c.l.b16 %v237
      %v513 = vunpack.c.l.b16 %v238
      %v514 = vunpack.c.l.b16 %v239
      %v515 = vunpack.c.l.b16 %v240
      %v516 = vunpack.c.l.b16 %v241
      %v517 = vunpack.c.l.b16 %v242
      %v518 = vunpack.c.l.b16 %v243
      %v519 = vunpack.c.l.b16 %v244
      %v520 = vunpack.c.l.b16 %v245
      %v521 = vunpack.c.l.b16 %v246
      %v522 = vunpack.c.l.b16 %v247
      %v523 = vunpack.c.l.b16 %v248
      %v524 = vunpack.c.l.b16 %v249
      %v525 = vpack.c.b16 %v494, %v493
      %v526 = vpack.c.b16 %v496, %v495
      %v527 = vpack.c.b16 %v498, %v497
      %v528 = vpack.c.b16 %v500, %v499
      %v529 = vpack.c.b16 %v502, %v501
      %v530 = vpack.c.b16 %v504, %v503
      %v531 = vpack.c.b16 %v506, %v505
      %v532 = vpack.c.b16 %v508, %v507
      %v533 = vpack.c.b16 %v510, %v509
      %v534 = vpack.c.b16 %v512, %v511
      %v535 = vpack.c.b16 %v514, %v513
      %v536 = vpack.c.b16 %v516, %v515
      %v537 = vpack.c.b16 %v518, %v517
      %v538 = vpack.c.b16 %v520, %v519
      %v539 = vpack.c.b16 %v522, %v521
      %v540 = vpack.c.b16 %v524, %v523
      %557 = vmatpush.bf16.msra.mxu0 %v532
      %558 = vmatpush.bf16.msra.mxu0 %v531
      %559 = vmatpush.bf16.msra.mxu0 %v530
      %560 = vmatpush.bf16.msra.mxu0 %v529
      %561 = vmatpush.bf16.msra.mxu0 %v528
      %562 = vmatpush.bf16.msra.mxu0 %v527
      %563 = vmatpush.bf16.msra.mxu0 %v526
      %564 = vmatpush.bf16.msra.mxu0 %v525
      %565 = vmatmul.bf16.gmra.mxu0 %v377
      %v566 = vpop.f32.mrf.mxu0
      %v567 = vadd.f32 %v252, %v566
      %v568 = vpop.f32.mrf.mxu0
      %v569 = vadd.f32 %v252, %v568
      %570 = vmatmul.bf16.gmra.mxu0 %v379
      %v571 = vpop.f32.mrf.mxu0
      %v572 = vadd.f32 %v252, %v571
      %v573 = vpop.f32.mrf.mxu0
      %v574 = vadd.f32 %v252, %v573
      %575 = vmatmul.bf16.gmra.mxu0 %v381
      %v576 = vpop.f32.mrf.mxu0
      %v577 = vadd.f32 %v252, %v576
      %v578 = vpop.f32.mrf.mxu0
      %v579 = vadd.f32 %v252, %v578
      %580 = vmatmul.bf16.gmra.mxu0 %v383
      %v581 = vpop.f32.mrf.mxu0
      %v582 = vadd.f32 %v252, %v581
      %v583 = vpop.f32.mrf.mxu0
      %v584 = vadd.f32 %v252, %v583
      %585 = vmatmul.bf16.gmra.mxu0 %v385
      %v586 = vpop.f32.mrf.mxu0
      %v587 = vadd.f32 %v252, %v586
      %v588 = vpop.f32.mrf.mxu0
      %v589 = vadd.f32 %v252, %v588
      %590 = vmatmul.bf16.gmra.mxu0 %v387
      %v591 = vpop.f32.mrf.mxu0
      %v592 = vadd.f32 %v252, %v591
      %v593 = vpop.f32.mrf.mxu0
      %v594 = vadd.f32 %v252, %v593
      %595 = vmatmul.bf16.gmra.mxu0 %v389
      %v596 = vpop.f32.mrf.mxu0
      %v597 = vadd.f32 %v252, %v596
      %v598 = vpop.f32.mrf.mxu0
      %v599 = vadd.f32 %v252, %v598
      %600 = vmatmul.bf16.gmra.mxu0 %v391
      %v601 = vpop.f32.mrf.mxu0
      %v602 = vadd.f32 %v252, %v601
      %v603 = vpop.f32.mrf.mxu0
      %v604 = vadd.f32 %v252, %v603
      %605 = vmatmul.bf16.gmra.mxu0 %v393
      %v606 = vpop.f32.mrf.mxu0
      %v607 = vadd.f32 %v252, %v606
      %v608 = vpop.f32.mrf.mxu0
      %v609 = vadd.f32 %v252, %v608
      %610 = vmatmul.bf16.gmra.mxu0 %v395
      %v611 = vpop.f32.mrf.mxu0
      %v612 = vadd.f32 %v252, %v611
      %v613 = vpop.f32.mrf.mxu0
      %v614 = vadd.f32 %v252, %v613
      %615 = vmatmul.bf16.gmra.mxu0 %v397
      %v616 = vpop.f32.mrf.mxu0
      %v617 = vadd.f32 %v252, %v616
      %v618 = vpop.f32.mrf.mxu0
      %v619 = vadd.f32 %v252, %v618
      %620 = vmatmul.bf16.gmra.mxu0 %v399
      %v621 = vpop.f32.mrf.mxu0
      %v622 = vadd.f32 %v252, %v621
      %v623 = vpop.f32.mrf.mxu0
      %v624 = vadd.f32 %v252, %v623
      %625 = vmatmul.bf16.gmra.mxu0 %v401
      %v626 = vpop.f32.mrf.mxu0
      %v627 = vadd.f32 %v252, %v626
      %v628 = vpop.f32.mrf.mxu0
      %v629 = vadd.f32 %v252, %v628
      %630 = vmatmul.bf16.gmra.mxu0 %v403
      %v631 = vpop.f32.mrf.mxu0
      %v632 = vadd.f32 %v252, %v631
      %v633 = vpop.f32.mrf.mxu0
      %v634 = vadd.f32 %v252, %v633
      %635 = vmatmul.bf16.gmra.mxu0 %v405
      %v636 = vpop.f32.mrf.mxu0
      %v637 = vadd.f32 %v252, %v636
      %v638 = vpop.f32.mrf.mxu0
      %v639 = vadd.f32 %v252, %v638
      %640 = vmatmul.bf16.gmra.mxu0 %v407
      %v641 = vpop.f32.mrf.mxu0
      %v642 = vadd.f32 %v252, %v641
      %v643 = vpop.f32.mrf.mxu0
      %v644 = vadd.f32 %v252, %v643
      %645 = vmatmul.bf16.gmra.mxu0 %v409
      %v646 = vpop.f32.mrf.mxu0
      %v647 = vadd.f32 %v252, %v646
      %v648 = vpop.f32.mrf.mxu0
      %v649 = vadd.f32 %v252, %v648
      %650 = vmatmul.bf16.gmra.mxu0 %v411
      %v651 = vpop.f32.mrf.mxu0
      %v652 = vadd.f32 %v252, %v651
      %v653 = vpop.f32.mrf.mxu0
      %v654 = vadd.f32 %v252, %v653
      %655 = vmatmul.bf16.gmra.mxu0 %v413
      %v656 = vpop.f32.mrf.mxu0
      %v657 = vadd.f32 %v252, %v656
      %v658 = vpop.f32.mrf.mxu0
      %v659 = vadd.f32 %v252, %v658
      %660 = vmatmul.bf16.gmra.mxu0 %v415
      %v661 = vpop.f32.mrf.mxu0
      %v662 = vadd.f32 %v252, %v661
      %v663 = vpop.f32.mrf.mxu0
      %v664 = vadd.f32 %v252, %v663
      %665 = vmatmul.bf16.gmra.mxu0 %v417
      %v666 = vpop.f32.mrf.mxu0
      %v667 = vadd.f32 %v252, %v666
      %v668 = vpop.f32.mrf.mxu0
      %669 = vdwg.mxu0
      %670 = vmatpush.bf16.msra.mxu0 %v540
      %671 = vmatpush.bf16.msra.mxu0 %v539
      %672 = vmatpush.bf16.msra.mxu0 %v538
      %673 = vmatpush.bf16.msra.mxu0 %v537
      %674 = vmatpush.bf16.msra.mxu0 %v536
      %675 = vmatpush.bf16.msra.mxu0 %v535
      %676 = vmatpush.bf16.msra.mxu0 %v534
      %677 = vmatpush.bf16.msra.mxu0 %v533
      %678 = vmatmul.bf16.gmra.mxu0 %v378
      %v679 = vpop.f32.mrf.mxu0
      %v680 = vadd.f32 %v567, %v679
      %v681 = vpop.f32.mrf.mxu0
      %v682 = vadd.f32 %v569, %v681
      %683 = vmatmul.bf16.gmra.mxu0 %v380
      %v684 = vpop.f32.mrf.mxu0
      %v685 = vadd.f32 %v572, %v684
      %v686 = vpop.f32.mrf.mxu0
      %v687 = vadd.f32 %v574, %v686
      %688 = vmatmul.bf16.gmra.mxu0 %v382
      %v689 = vpop.f32.mrf.mxu0
      %v690 = vadd.f32 %v577, %v689
      %v691 = vpop.f32.mrf.mxu0
      %v692 = vadd.f32 %v579, %v691
      %693 = vmatmul.bf16.gmra.mxu0 %v384
      %v694 = vpop.f32.mrf.mxu0
      %v695 = vadd.f32 %v582, %v694
      %v696 = vpop.f32.mrf.mxu0
      %v697 = vadd.f32 %v584, %v696
      %698 = vmatmul.bf16.gmra.mxu0 %v386
      %v699 = vpop.f32.mrf.mxu0
      %v700 = vadd.f32 %v587, %v699
      %v701 = vpop.f32.mrf.mxu0
      %v702 = vadd.f32 %v589, %v701
      %703 = vmatmul.bf16.gmra.mxu0 %v388
      %v704 = vpop.f32.mrf.mxu0
      %v705 = vadd.f32 %v592, %v704
      %v706 = vpop.f32.mrf.mxu0
      %v707 = vadd.f32 %v594, %v706
      %708 = vmatmul.bf16.gmra.mxu0 %v390
      %v709 = vpop.f32.mrf.mxu0
      %v710 = vadd.f32 %v597, %v709
      %v711 = vpop.f32.mrf.mxu0
      %v712 = vadd.f32 %v599, %v711
      %713 = vmatmul.bf16.gmra.mxu0 %v392
      %v714 = vpop.f32.mrf.mxu0
      %v715 = vadd.f32 %v602, %v714
      %v716 = vpop.f32.mrf.mxu0
      %v717 = vadd.f32 %v604, %v716
      %718 = vmatmul.bf16.gmra.mxu0 %v394
      %v719 = vpop.f32.mrf.mxu0
      %v720 = vadd.f32 %v607, %v719
      %v721 = vpop.f32.mrf.mxu0
      %v722 = vadd.f32 %v609, %v721
      %723 = vmatmul.bf16.gmra.mxu0 %v396
      %v724 = vpop.f32.mrf.mxu0
      %v725 = vadd.f32 %v612, %v724
      %v726 = vpop.f32.mrf.mxu0
      %v727 = vadd.f32 %v614, %v726
      %728 = vmatmul.bf16.gmra.mxu0 %v398
      %v729 = vpop.f32.mrf.mxu0
      %v730 = vadd.f32 %v617, %v729
      %v731 = vpop.f32.mrf.mxu0
      %v732 = vadd.f32 %v619, %v731
      %733 = vmatmul.bf16.gmra.mxu0 %v400
      %v734 = vpop.f32.mrf.mxu0
      %v735 = vadd.f32 %v622, %v734
      %v736 = vpop.f32.mrf.mxu0
      %v737 = vadd.f32 %v624, %v736
      %738 = vmatmul.bf16.gmra.mxu0 %v402
      %v739 = vpop.f32.mrf.mxu0
      %v740 = vadd.f32 %v627, %v739
      %v741 = vpop.f32.mrf.mxu0
      %v742 = vadd.f32 %v629, %v741
      %743 = vmatmul.bf16.gmra.mxu0 %v404
      %v744 = vpop.f32.mrf.mxu0
      %v745 = vadd.f32 %v632, %v744
      %v746 = vpop.f32.mrf.mxu0
      %v747 = vadd.f32 %v634, %v746
      %748 = vmatmul.bf16.gmra.mxu0 %v406
      %v749 = vpop.f32.mrf.mxu0
      %v750 = vadd.f32 %v637, %v749
      %v751 = vpop.f32.mrf.mxu0
      %v752 = vadd.f32 %v639, %v751
      %753 = vmatmul.bf16.gmra.mxu0 %v408
      %v754 = vpop.f32.mrf.mxu0
      %v755 = vadd.f32 %v642, %v754
      %v756 = vpop.f32.mrf.mxu0
      %v757 = vadd.f32 %v644, %v756
      %758 = vmatmul.bf16.gmra.mxu0 %v410
      %v759 = vpop.f32.mrf.mxu0
      %v760 = vadd.f32 %v647, %v759
      %v761 = vpop.f32.mrf.mxu0
      %v762 = vadd.f32 %v649, %v761
      %763 = vmatmul.bf16.gmra.mxu0 %v412
      %v764 = vpop.f32.mrf.mxu0
      %v765 = vadd.f32 %v652, %v764
      %v766 = vpop.f32.mrf.mxu0
      %v767 = vadd.f32 %v654, %v766
      %768 = vmatmul.bf16.gmra.mxu0 %v414
      %v769 = vpop.f32.mrf.mxu0
      %v770 = vadd.f32 %v657, %v769
      %v771 = vpop.f32.mrf.mxu0
      %v772 = vadd.f32 %v659, %v771
      %773 = vmatmul.bf16.gmra.mxu0 %v416
      %v774 = vpop.f32.mrf.mxu0
      %v775 = vadd.f32 %v662, %v774
      %v776 = vpop.f32.mrf.mxu0
      %v777 = vadd.f32 %v664, %v776
      %778 = vmatmul.bf16.gmra.mxu0 %v418
      %v779 = vpop.f32.mrf.mxu0
      %v780 = vadd.f32 %v667, %v779
      %v781 = vpop.f32.mrf.mxu0
      %782 = vdwg.mxu0
      %vm783 = vcmp.ge.f32.partialorder %v680, 0.0
      %vm784 = vcmp.ge.f32.partialorder %v682, 0.0
      %vm785 = vcmp.ge.f32.partialorder %v685, 0.0
      %vm786 = vcmp.ge.f32.partialorder %v687, 0.0
      %vm787 = vcmp.ge.f32.partialorder %v690, 0.0
      %vm788 = vcmp.ge.f32.partialorder %v692, 0.0
      %vm789 = vcmp.ge.f32.partialorder %v695, 0.0
      %vm790 = vcmp.ge.f32.partialorder %v697, 0.0
      %vm791 = vcmp.ge.f32.partialorder %v700, 0.0
      %vm792 = vcmp.ge.f32.partialorder %v702, 0.0
      %vm793 = vcmp.ge.f32.partialorder %v705, 0.0
      %vm794 = vcmp.ge.f32.partialorder %v707, 0.0
      %vm795 = vcmp.ge.f32.partialorder %v710, 0.0
      %vm796 = vcmp.ge.f32.partialorder %v712, 0.0
      %vm797 = vcmp.ge.f32.partialorder %v715, 0.0
      %vm798 = vcmp.ge.f32.partialorder %v717, 0.0
      %vm799 = vcmp.ge.f32.partialorder %v720, 0.0
      %vm800 = vcmp.ge.f32.partialorder %v722, 0.0
      %vm801 = vcmp.ge.f32.partialorder %v725, 0.0
      %vm802 = vcmp.ge.f32.partialorder %v727, 0.0
      %vm803 = vcmp.ge.f32.partialorder %v730, 0.0
      %vm804 = vcmp.ge.f32.partialorder %v732, 0.0
      %vm805 = vcmp.ge.f32.partialorder %v735, 0.0
      %vm806 = vcmp.ge.f32.partialorder %v737, 0.0
      %vm807 = vcmp.ge.f32.partialorder %v740, 0.0
      %vm808 = vcmp.ge.f32.partialorder %v742, 0.0
      %vm809 = vcmp.ge.f32.partialorder %v745, 0.0
      %vm810 = vcmp.ge.f32.partialorder %v747, 0.0
      %vm811 = vcmp.ge.f32.partialorder %v750, 0.0
      %vm812 = vcmp.ge.f32.partialorder %v752, 0.0
      %vm813 = vcmp.ge.f32.partialorder %v755, 0.0
      %vm814 = vcmp.ge.f32.partialorder %v757, 0.0
      %vm815 = vcmp.ge.f32.partialorder %v760, 0.0
      %vm816 = vcmp.ge.f32.partialorder %v762, 0.0
      %vm817 = vcmp.ge.f32.partialorder %v765, 0.0
      %vm818 = vcmp.ge.f32.partialorder %v767, 0.0
      %vm819 = vcmp.ge.f32.partialorder %v770, 0.0
      %vm820 = vcmp.ge.f32.partialorder %v772, 0.0
      %vm821 = vcmp.ge.f32.partialorder %v775, 0.0
      %vm822 = vcmp.ge.f32.partialorder %v777, 0.0
      %vm823 = vcmp.ge.f32.partialorder %v780, 0.0
      %v824 = vmul.f32 %v680, 0.01
      %v825 = vmul.f32 %v682, 0.01
      %v826 = vmul.f32 %v685, 0.01
      %v827 = vmul.f32 %v687, 0.01
      %v828 = vmul.f32 %v690, 0.01
      %v829 = vmul.f32 %v692, 0.01
      %v830 = vmul.f32 %v695, 0.01
      %v831 = vmul.f32 %v697, 0.01
      %v832 = vmul.f32 %v700, 0.01
      %v833 = vmul.f32 %v702, 0.01
      %v834 = vmul.f32 %v705, 0.01
      %v835 = vmul.f32 %v707, 0.01
      %v836 = vmul.f32 %v710, 0.01
      %v837 = vmul.f32 %v712, 0.01
      %v838 = vmul.f32 %v715, 0.01
      %v839 = vmul.f32 %v717, 0.01
      %v840 = vmul.f32 %v720, 0.01
      %v841 = vmul.f32 %v722, 0.01
      %v842 = vmul.f32 %v725, 0.01
      %v843 = vmul.f32 %v727, 0.01
      %v844 = vmul.f32 %v730, 0.01
      %v845 = vmul.f32 %v732, 0.01
      %v846 = vmul.f32 %v735, 0.01
      %v847 = vmul.f32 %v737, 0.01
      %v848 = vmul.f32 %v740, 0.01
      %v849 = vmul.f32 %v742, 0.01
      %v850 = vmul.f32 %v745, 0.01
      %v851 = vmul.f32 %v747, 0.01
      %v852 = vmul.f32 %v750, 0.01
      %v853 = vmul.f32 %v752, 0.01
      %v854 = vmul.f32 %v755, 0.01
      %v855 = vmul.f32 %v757, 0.01
      %v856 = vmul.f32 %v760, 0.01
      %v857 = vmul.f32 %v762, 0.01
      %v858 = vmul.f32 %v765, 0.01
      %v859 = vmul.f32 %v767, 0.01
      %v860 = vmul.f32 %v770, 0.01
      %v861 = vmul.f32 %v772, 0.01
      %v862 = vmul.f32 %v775, 0.01
      %v863 = vmul.f32 %v777, 0.01
      %v864 = vmul.f32 %v780, 0.01
      %v865 = vsel %vm783, %v680, %v824
      %v866 = vsel %vm784, %v682, %v825
      %v867 = vsel %vm785, %v685, %v826
      %v868 = vsel %vm786, %v687, %v827
      %v869 = vsel %vm787, %v690, %v828
      %v870 = vsel %vm788, %v692, %v829
      %v871 = vsel %vm789, %v695, %v830
      %v872 = vsel %vm790, %v697, %v831
      %v873 = vsel %vm791, %v700, %v832
      %v874 = vsel %vm792, %v702, %v833
      %v875 = vsel %vm793, %v705, %v834
      %v876 = vsel %vm794, %v707, %v835
      %v877 = vsel %vm795, %v710, %v836
      %v878 = vsel %vm796, %v712, %v837
      %v879 = vsel %vm797, %v715, %v838
      %v880 = vsel %vm798, %v717, %v839
      %v881 = vsel %vm799, %v720, %v840
      %v882 = vsel %vm800, %v722, %v841
      %v883 = vsel %vm801, %v725, %v842
      %v884 = vsel %vm802, %v727, %v843
      %v885 = vsel %vm803, %v730, %v844
      %v886 = vsel %vm804, %v732, %v845
      %v887 = vsel %vm805, %v735, %v846
      %v888 = vsel %vm806, %v737, %v847
      %v889 = vsel %vm807, %v740, %v848
      %v890 = vsel %vm808, %v742, %v849
      %v891 = vsel %vm809, %v745, %v850
      %v892 = vsel %vm810, %v747, %v851
      %v893 = vsel %vm811, %v750, %v852
      %v894 = vsel %vm812, %v752, %v853
      %v895 = vsel %vm813, %v755, %v854
      %v896 = vsel %vm814, %v757, %v855
      %v897 = vsel %vm815, %v760, %v856
      %v898 = vsel %vm816, %v762, %v857
      %v899 = vsel %vm817, %v765, %v858
      %v900 = vsel %vm818, %v767, %v859
      %v901 = vsel %vm819, %v770, %v860
      %v902 = vsel %vm820, %v772, %v861
      %v903 = vsel %vm821, %v775, %v862
      %v904 = vsel %vm822, %v777, %v863
      %v905 = vsel %vm823, %v780, %v864
      %906 = vst [vmem:[%s175] sm:$0xff] %v865
      %907 = vst [vmem:[%s175 + $0x8] sm:$0xff] %v866
      %908 = vst [vmem:[%s175 + $0x10] sm:$0xff] %v867
      %909 = vst [vmem:[%s175 + $0x18] sm:$0xff] %v868
      %910 = vst [vmem:[%s175 + $0x20] sm:$0xff] %v869
      %911 = vst [vmem:[%s175 + $0x28] sm:$0xff] %v870
      %912 = vst [vmem:[%s175 + $0x30] sm:$0xff] %v871
      %913 = vst [vmem:[%s175 + $0x38] sm:$0xff] %v872
      %914 = vst [vmem:[%s175 + $0x40] sm:$0xff] %v873
      %915 = vst [vmem:[%s175 + $0x48] sm:$0xff] %v874
      %916 = vst [vmem:[%s175 + $0x50] sm:$0xff] %v875
      %917 = vst [vmem:[%s175 + $0x58] sm:$0xff] %v876
      %918 = vst [vmem:[%s175 + $0x60] sm:$0xff] %v877
      %919 = vst [vmem:[%s175 + $0x68] sm:$0xff] %v878
      %920 = vst [vmem:[%s175 + $0x70] sm:$0xff] %v879
      %921 = vst [vmem:[%s175 + $0x78] sm:$0xff] %v880
      %922 = vst [vmem:[%s175 + $0x80] sm:$0xff] %v881
      %923 = vst [vmem:[%s175 + $0x88] sm:$0xff] %v882
      %924 = vst [vmem:[%s175 + $0x90] sm:$0xff] %v883
      %925 = vst [vmem:[%s175 + $0x98] sm:$0xff] %v884
      %926 = vst [vmem:[%s175 + $0xa0] sm:$0xff] %v885
      %927 = vst [vmem:[%s175 + $0xa8] sm:$0xff] %v886
      %928 = vst [vmem:[%s175 + $0xb0] sm:$0xff] %v887
      %929 = vst [vmem:[%s175 + $0xb8] sm:$0xff] %v888
      %930 = vst [vmem:[%s175 + $0xc0] sm:$0xff] %v889
      %931 = vst [vmem:[%s175 + $0xc8] sm:$0xff] %v890
      %932 = vst [vmem:[%s175 + $0xd0] sm:$0xff] %v891
      %933 = vst [vmem:[%s175 + $0xd8] sm:$0xff] %v892
      %934 = vst [vmem:[%s175 + $0xe0] sm:$0xff] %v893
      %935 = vst [vmem:[%s175 + $0xe8] sm:$0xff] %v894
      %936 = vst [vmem:[%s175 + $0xf0] sm:$0xff] %v895
      %937 = vst [vmem:[%s175 + $0xf8] sm:$0xff] %v896
      %938 = vst [vmem:[%s175 + $0x100] sm:$0xff] %v897
      %939 = vst [vmem:[%s175 + $0x108] sm:$0xff] %v898
      %940 = vst [vmem:[%s175 + $0x110] sm:$0xff] %v899
      %941 = vst [vmem:[%s175 + $0x118] sm:$0xff] %v900
      %942 = vst [vmem:[%s175 + $0x120] sm:$0xff] %v901
      %943 = vst [vmem:[%s175 + $0x128] sm:$0xff] %v902
      %944 = vst [vmem:[%s175 + $0x130] sm:$0xff] %v903
      %945 = vst [vmem:[%s175 + $0x138] sm:$0xff] %v904
      %946 = vst [vmem:[%s175 + $0x140] sm:$0xff] %v905
      %s947 = smul.u32 41, %s14
      %p948 = scmp.lt.s32.totalorder %s947, 81
      %s949 = scalar_select %p948, %s947, 81
      %s950 = smul.addr %s949, 8
      %s951 = scalar_lea.vmem %s3, %s950
      // Predicated region
      $region33: #{rnd_forward.4} parent=31 // pred_check
        %p952 = pneg %p100
      $region34: #{rnd_forward.4} parent=31 // pred_check_branch
        %954 = sbr.rel (%p952) target = $region36
      $region35: #{rnd_forward.4} parent=31 // pred_region
        %s955 = smul.u32 41, %s14
      $region36: #{rnd_forward.4} parent=31 // pred_fallthru
        _
    $region32: #{rnd_forward.4} parent=5 // pred_fallthru
      _
    %p956 = scmp.le.s32.totalorder 2, %s9
    // Predicated region
    $region37: #{rnd_forward.4} parent=5 // pred_check
      %p957 = pneg %p956
    $region38: #{rnd_forward.4} parent=5 // pred_check_branch
      %959 = sbr.rel (%p957) target = $region40
    $region39: #{rnd_forward.4} parent=5 // pred_region
      %s960 = ssub.s32 %s9, 2
      // Predicated region
      $region41: #{rnd_forward.4} parent=39 // pred_check
        %p961 = pneg %p106
      $region42: #{rnd_forward.4} parent=39 // pred_check_branch
        %963 = sbr.rel (%p961) target = $region44
      $region43: #{rnd_forward.4} parent=39 // pred_region
        %s964 = smul.u32 41, %s15
        %p965 = scmp.lt.s32.totalorder %s964, 81
        %s966 = scalar_select %p965, %s964, 81
        %s967 = smul.addr %s966, 8
        %s968 = scalar_lea.vmem %s3, %s967
      $region44: #{rnd_forward.4} parent=39 // pred_fallthru
        _
    $region40: #{rnd_forward.4} parent=5 // pred_fallthru
      _
  $region6: #{rnd_forward.4} parent=0 // loop_footer
    %s13 = sadd.s32 1, %s9
  $region7: #{rnd_forward.4} parent=0 // loop_footer_branch
    %8 = sbr.rel target = $region3
  $region8: #{rnd_forward.4} parent=0 // loop_exit
    _

// kernel: rnd_forward.5
$region0: #{rnd_forward.5}
  #allocation0 [shape = 'u32[]', space=smem, size = 0x4, offset = 0x4, fixed_abs, tag = 'smem constant byte address 0x4 - core index']
  #allocation1 [shape = 'u32[72,128]{1,0:T(1,128)}', space=vmem, size = 0x9000, scoped, tag = 'internal scratch']
  %s0 = inlined_call_operand.vmem [shape: bf16[128,1024], index: 0, kind: input, shape index: {}]
  %s1 = inlined_call_operand.vmem [shape: bf16[1024,128], index: 1, kind: input, shape index: {}]
  %s2 = inlined_call_operand.vmem [shape: f32[1,128], index: 2, kind: input, shape index: {}]
  %s3 = inlined_call_operand.vmem [shape: f32[128,128], index: 3, kind: output, shape index: {}]
  %s4 = sld [smem:[#allocation0]]
  $region22: #{rnd_forward.5} parent=0
    _
  %s6 = ssub.s32 1, %s4
  %s7 = scalar_select 0, %s6, %s4
  // Predicated region
  $region2: #{rnd_forward.5} parent=0 // pred_check
    _
  $region3: #{rnd_forward.5} parent=0 // pred_check_branch
    %9 = sbr.rel (0) target = $region5
  $region4: #{rnd_forward.5} parent=0 // pred_region
    _
  $region5: #{rnd_forward.5} parent=0 // pred_fallthru
    _
  // Predicated region
  $region6: #{rnd_forward.5} parent=0 // pred_check
    _
  $region7: #{rnd_forward.5} parent=0 // pred_check_branch
    %11 = sbr.rel (0) target = $region9
  $region8: #{rnd_forward.5} parent=0 // pred_region
    _
  $region9: #{rnd_forward.5} parent=0 // pred_fallthru
    _
  // Predicated region
  $region10: #{rnd_forward.5} parent=0 // pred_check
    _
  $region11: #{rnd_forward.5} parent=0 // pred_check_branch
    %13 = sbr.rel (0) target = $region13
  $region12: #{rnd_forward.5} parent=0 // pred_region
    _
  $region13: #{rnd_forward.5} parent=0 // pred_fallthru
    _
  %v14 = vld [vmem:[%s0] sm:$0xff]
  %v15 = vld [vmem:[%s0 + $0x8] sm:$0xff]
  %v16 = vld [vmem:[%s0 + $0x10] sm:$0xff]
  %v17 = vld [vmem:[%s0 + $0x18] sm:$0xff]
  %v18 = vld [vmem:[%s0 + $0x20] sm:$0xff]
  %v19 = vld [vmem:[%s0 + $0x28] sm:$0xff]
  %v20 = vld [vmem:[%s0 + $0x30] sm:$0xff]
  %v21 = vld [vmem:[%s0 + $0x38] sm:$0xff]
  %v22 = vld [vmem:[%s0 + $0x40] sm:$0xff]
  %v23 = vld [vmem:[%s0 + $0x48] sm:$0xff]
  %v24 = vld [vmem:[%s0 + $0x50] sm:$0xff]
  %v25 = vld [vmem:[%s0 + $0x58] sm:$0xff]
  %v26 = vld [vmem:[%s0 + $0x60] sm:$0xff]
  %v27 = vld [vmem:[%s0 + $0x68] sm:$0xff]
  %v28 = vld [vmem:[%s0 + $0x70] sm:$0xff]
  %v29 = vld [vmem:[%s0 + $0x78] sm:$0xff]
  %v30 = vld [vmem:[%s0 + $0x80] sm:$0xff]
  %v31 = vld [vmem:[%s0 + $0x88] sm:$0xff]
  %v32 = vld [vmem:[%s0 + $0x90] sm:$0xff]
  %v33 = vld [vmem:[%s0 + $0x98] sm:$0xff]
  %v34 = vld [vmem:[%s0 + $0xa0] sm:$0xff]
  %v35 = vld [vmem:[%s0 + $0xa8] sm:$0xff]
  %v36 = vld [vmem:[%s0 + $0xb0] sm:$0xff]
  %v37 = vld [vmem:[%s0 + $0xb8] sm:$0xff]
  %v38 = vld [vmem:[%s0 + $0xc0] sm:$0xff]
  %v39 = vld [vmem:[%s0 + $0xc8] sm:$0xff]
  %v40 = vld [vmem:[%s0 + $0xd0] sm:$0xff]
  %v41 = vld [vmem:[%s0 + $0xd8] sm:$0xff]
  %v42 = vld [vmem:[%s0 + $0xe0] sm:$0xff]
  %v43 = vld [vmem:[%s0 + $0xe8] sm:$0xff]
  %v44 = vld [vmem:[%s0 + $0xf0] sm:$0xff]
  %v45 = vld [vmem:[%s0 + $0xf8] sm:$0xff]
  %v46 = vld [vmem:[%s0 + $0x100] sm:$0xff]
  %v47 = vld [vmem:[%s0 + $0x108] sm:$0xff]
  %v48 = vld [vmem:[%s0 + $0x110] sm:$0xff]
  %v49 = vld [vmem:[%s0 + $0x118] sm:$0xff]
  %v50 = vld [vmem:[%s0 + $0x120] sm:$0xff]
  %v51 = vld [vmem:[%s0 + $0x128] sm:$0xff]
  %v52 = vld [vmem:[%s0 + $0x130] sm:$0xff]
  %v53 = vld [vmem:[%s0 + $0x138] sm:$0xff]
  %v54 = vld [vmem:[%s0 + $0x140] sm:$0xff]
  %v55 = vld [vmem:[%s0 + $0x148] sm:$0xff]
  %v56 = vld [vmem:[%s0 + $0x150] sm:$0xff]
  %v57 = vld [vmem:[%s0 + $0x158] sm:$0xff]
  %v58 = vld [vmem:[%s0 + $0x160] sm:$0xff]
  %v59 = vld [vmem:[%s0 + $0x168] sm:$0xff]
  %v60 = vld [vmem:[%s0 + $0x170] sm:$0xff]
  %v61 = vld [vmem:[%s0 + $0x178] sm:$0xff]
  %v62 = vld [vmem:[%s0 + $0x180] sm:$0xff]
  %v63 = vld [vmem:[%s0 + $0x188] sm:$0xff]
  %v64 = vld [vmem:[%s0 + $0x190] sm:$0xff]
  %v65 = vld [vmem:[%s0 + $0x198] sm:$0xff]
  %v66 = vld [vmem:[%s0 + $0x1a0] sm:$0xff]
  %v67 = vld [vmem:[%s0 + $0x1a8] sm:$0xff]
  %v68 = vld [vmem:[%s0 + $0x1b0] sm:$0xff]
  %v69 = vld [vmem:[%s0 + $0x1b8] sm:$0xff]
  %v70 = vld [vmem:[%s0 + $0x1c0] sm:$0xff]
  %v71 = vld [vmem:[%s0 + $0x1c8] sm:$0xff]
  %v72 = vld [vmem:[%s0 + $0x1d0] sm:$0xff]
  %v73 = vld [vmem:[%s0 + $0x1d8] sm:$0xff]
  %v74 = vld [vmem:[%s0 + $0x1e0] sm:$0xff]
  %v75 = vld [vmem:[%s0 + $0x1e8] sm:$0xff]
  %v76 = vld [vmem:[%s0 + $0x1f0] sm:$0xff]
  %v77 = vld [vmem:[%s0 + $0x1f8] sm:$0xff]
  %v78 = vld [vmem:[%s1] sm:$0xf]
  %v79 = vld [vmem:[%s1 + $0x4] sm:$0xf]
  %v80 = vld [vmem:[%s1 + $0x8] sm:$0xf]
  %v81 = vld [vmem:[%s1 + $0xc] sm:$0xf]
  %v82 = vld [vmem:[%s1 + $0x10] sm:$0xf]
  %v83 = vld [vmem:[%s1 + $0x14] sm:$0xf]
  %v84 = vld [vmem:[%s1 + $0x18] sm:$0xf]
  %v85 = vld [vmem:[%s1 + $0x1c] sm:$0xf]
  %v86 = vld [vmem:[%s1 + $0x20] sm:$0xf]
  %v87 = vld [vmem:[%s1 + $0x24] sm:$0xf]
  %v88 = vld [vmem:[%s1 + $0x28] sm:$0xf]
  %v89 = vld [vmem:[%s1 + $0x2c] sm:$0xf]
  %v90 = vld [vmem:[%s1 + $0x30] sm:$0xf]
  %v91 = vld [vmem:[%s1 + $0x34] sm:$0xf]
  %v92 = vld [vmem:[%s1 + $0x38] sm:$0xf]
  %v93 = vld [vmem:[%s1 + $0x3c] sm:$0xf]
  %v94 = vld [vmem:[%s1 + $0x40] sm:$0xf]
  %v95 = vld [vmem:[%s1 + $0x44] sm:$0xf]
  %v96 = vld [vmem:[%s1 + $0x48] sm:$0xf]
  %v97 = vld [vmem:[%s1 + $0x4c] sm:$0xf]
  %v98 = vld [vmem:[%s1 + $0x50] sm:$0xf]
  %v99 = vld [vmem:[%s1 + $0x54] sm:$0xf]
  %v100 = vld [vmem:[%s1 + $0x58] sm:$0xf]
  %v101 = vld [vmem:[%s1 + $0x5c] sm:$0xf]
  %v102 = vld [vmem:[%s1 + $0x60] sm:$0xf]
  %v103 = vld [vmem:[%s1 + $0x64] sm:$0xf]
  %v104 = vld [vmem:[%s1 + $0x68] sm:$0xf]
  %v105 = vld [vmem:[%s1 + $0x6c] sm:$0xf]
  %v106 = vld [vmem:[%s1 + $0x70] sm:$0xf]
  %v107 = vld [vmem:[%s1 + $0x74] sm:$0xf]
  %v108 = vld [vmem:[%s1 + $0x78] sm:$0xf]
  %v109 = vld [vmem:[%s1 + $0x7c] sm:$0xf]
  %v110 = vld [vmem:[%s1 + $0x80] sm:$0xf]
  %v111 = vld [vmem:[%s1 + $0x84] sm:$0xf]
  %v112 = vld [vmem:[%s1 + $0x88] sm:$0xf]
  %v113 = vld [vmem:[%s1 + $0x8c] sm:$0xf]
  %v114 = vld [vmem:[%s1 + $0x90] sm:$0xf]
  %v115 = vld [vmem:[%s1 + $0x94] sm:$0xf]
  %v116 = vld [vmem:[%s1 + $0x98] sm:$0xf]
  %v117 = vld [vmem:[%s1 + $0x9c] sm:$0xf]
  %v118 = vld [vmem:[%s1 + $0xa0] sm:$0xf]
  %v119 = vld [vmem:[%s1 + $0xa4] sm:$0xf]
  %v120 = vld [vmem:[%s1 + $0xa8] sm:$0xf]
  %v121 = vld [vmem:[%s1 + $0xac] sm:$0xf]
  %v122 = vld [vmem:[%s1 + $0xb0] sm:$0xf]
  %v123 = vld [vmem:[%s1 + $0xb4] sm:$0xf]
  %v124 = vld [vmem:[%s1 + $0xb8] sm:$0xf]
  %v125 = vld [vmem:[%s1 + $0xbc] sm:$0xf]
  %v126 = vld [vmem:[%s1 + $0xc0] sm:$0xf]
  %v127 = vld [vmem:[%s1 + $0xc4] sm:$0xf]
  %v128 = vld [vmem:[%s1 + $0xc8] sm:$0xf]
  %v129 = vld [vmem:[%s1 + $0xcc] sm:$0xf]
  %v130 = vld [vmem:[%s1 + $0xd0] sm:$0xf]
  %v131 = vld [vmem:[%s1 + $0xd4] sm:$0xf]
  %v132 = vld [vmem:[%s1 + $0xd8] sm:$0xf]
  %v133 = vld [vmem:[%s1 + $0xdc] sm:$0xf]
  %v134 = vld [vmem:[%s1 + $0xe0] sm:$0xf]
  %v135 = vld [vmem:[%s1 + $0xe4] sm:$0xf]
  %v136 = vld [vmem:[%s1 + $0xe8] sm:$0xf]
  %v137 = vld [vmem:[%s1 + $0xec] sm:$0xf]
  %v138 = vld [vmem:[%s1 + $0xf0] sm:$0xf]
  %v139 = vld [vmem:[%s1 + $0xf4] sm:$0xf]
  %v140 = vld [vmem:[%s1 + $0xf8] sm:$0xf]
  %v141 = vld [vmem:[%s1 + $0xfc] sm:$0xf]
  %v142 = vld [vmem:[%s1 + $0x100] sm:$0xf]
  %v143 = vld [vmem:[%s1 + $0x104] sm:$0xf]
  %v144 = vld [vmem:[%s1 + $0x108] sm:$0xf]
  %v145 = vld [vmem:[%s1 + $0x10c] sm:$0xf]
  %v146 = vld [vmem:[%s1 + $0x110] sm:$0xf]
  %v147 = vld [vmem:[%s1 + $0x114] sm:$0xf]
  %v148 = vld [vmem:[%s1 + $0x118] sm:$0xf]
  %v149 = vld [vmem:[%s1 + $0x11c] sm:$0xf]
  %v150 = vld [vmem:[%s1 + $0x120] sm:$0xf]
  %v151 = vld [vmem:[%s1 + $0x124] sm:$0xf]
  %v152 = vld [vmem:[%s1 + $0x128] sm:$0xf]
  %v153 = vld [vmem:[%s1 + $0x12c] sm:$0xf]
  %v154 = vld [vmem:[%s1 + $0x130] sm:$0xf]
  %v155 = vld [vmem:[%s1 + $0x134] sm:$0xf]
  %v156 = vld [vmem:[%s1 + $0x138] sm:$0xf]
  %v157 = vld [vmem:[%s1 + $0x13c] sm:$0xf]
  %v158 = vld [vmem:[%s1 + $0x140] sm:$0xf]
  %v159 = vld [vmem:[%s1 + $0x144] sm:$0xf]
  %v160 = vld [vmem:[%s1 + $0x148] sm:$0xf]
  %v161 = vld [vmem:[%s1 + $0x14c] sm:$0xf]
  %v162 = vld [vmem:[%s1 + $0x150] sm:$0xf]
  %v163 = vld [vmem:[%s1 + $0x154] sm:$0xf]
  %v164 = vld [vmem:[%s1 + $0x158] sm:$0xf]
  %v165 = vld [vmem:[%s1 + $0x15c] sm:$0xf]
  %v166 = vld [vmem:[%s1 + $0x160] sm:$0xf]
  %v167 = vld [vmem:[%s1 + $0x164] sm:$0xf]
  %v168 = vld [vmem:[%s1 + $0x168] sm:$0xf]
  %v169 = vld [vmem:[%s1 + $0x16c] sm:$0xf]
  %v170 = vld [vmem:[%s1 + $0x170] sm:$0xf]
  %v171 = vld [vmem:[%s1 + $0x174] sm:$0xf]
  %v172 = vld [vmem:[%s1 + $0x178] sm:$0xf]
  %v173 = vld [vmem:[%s1 + $0x17c] sm:$0xf]
  %v174 = vld [vmem:[%s1 + $0x180] sm:$0xf]
  %v175 = vld [vmem:[%s1 + $0x184] sm:$0xf]
  %v176 = vld [vmem:[%s1 + $0x188] sm:$0xf]
  %v177 = vld [vmem:[%s1 + $0x18c] sm:$0xf]
  %v178 = vld [vmem:[%s1 + $0x190] sm:$0xf]
  %v179 = vld [vmem:[%s1 + $0x194] sm:$0xf]
  %v180 = vld [vmem:[%s1 + $0x198] sm:$0xf]
  %v181 = vld [vmem:[%s1 + $0x19c] sm:$0xf]
  %v182 = vld [vmem:[%s1 + $0x1a0] sm:$0xf]
  %v183 = vld [vmem:[%s1 + $0x1a4] sm:$0xf]
  %v184 = vld [vmem:[%s1 + $0x1a8] sm:$0xf]
  %v185 = vld [vmem:[%s1 + $0x1ac] sm:$0xf]
  %v186 = vld [vmem:[%s1 + $0x1b0] sm:$0xf]
  %v187 = vld [vmem:[%s1 + $0x1b4] sm:$0xf]
  %v188 = vld [vmem:[%s1 + $0x1b8] sm:$0xf]
  %v189 = vld [vmem:[%s1 + $0x1bc] sm:$0xf]
  %v190 = vld [vmem:[%s1 + $0x1c0] sm:$0xf]
  %v191 = vld [vmem:[%s1 + $0x1c4] sm:$0xf]
  %v192 = vld [vmem:[%s1 + $0x1c8] sm:$0xf]
  %v193 = vld [vmem:[%s1 + $0x1cc] sm:$0xf]
  %v194 = vld [vmem:[%s1 + $0x1d0] sm:$0xf]
  %v195 = vld [vmem:[%s1 + $0x1d4] sm:$0xf]
  %v196 = vld [vmem:[%s1 + $0x1d8] sm:$0xf]
  %v197 = vld [vmem:[%s1 + $0x1dc] sm:$0xf]
  %v198 = vld [vmem:[%s1 + $0x1e0] sm:$0xf]
  %v199 = vld [vmem:[%s1 + $0x1e4] sm:$0xf]
  %v200 = vld [vmem:[%s1 + $0x1e8] sm:$0xf]
  %v201 = vld [vmem:[%s1 + $0x1ec] sm:$0xf]
  %v202 = vld [vmem:[%s1 + $0x1f0] sm:$0xf]
  %v203 = vld [vmem:[%s1 + $0x1f4] sm:$0xf]
  %v204 = vld [vmem:[%s1 + $0x1f8] sm:$0xf]
  %v205 = vld [vmem:[%s1 + $0x1fc] sm:$0xf]
  %v206 = vld [vmem:[%s2] sm:$0x1]
  %v208 = vperm.slane %v206, 0
  %v274 = vunpack.c.l.b16 %v14
  %v275 = vunpack.c.h.b16 %v14
  %v276 = vunpack.c.l.b16 %v15
  %v277 = vunpack.c.h.b16 %v15
  %v278 = vunpack.c.l.b16 %v16
  %v279 = vunpack.c.h.b16 %v16
  %v280 = vunpack.c.l.b16 %v17
  %v281 = vunpack.c.h.b16 %v17
  %v282 = vunpack.c.l.b16 %v18
  %v283 = vunpack.c.h.b16 %v18
  %v284 = vunpack.c.l.b16 %v19
  %v285 = vunpack.c.h.b16 %v19
  %v286 = vunpack.c.l.b16 %v20
  %v287 = vunpack.c.h.b16 %v20
  %v288 = vunpack.c.l.b16 %v21
  %v289 = vunpack.c.h.b16 %v21
  %v290 = vunpack.c.l.b16 %v22
  %v291 = vunpack.c.h.b16 %v22
  %v292 = vunpack.c.l.b16 %v23
  %v293 = vunpack.c.h.b16 %v23
  %v294 = vunpack.c.l.b16 %v24
  %v295 = vunpack.c.h.b16 %v24
  %v296 = vunpack.c.l.b16 %v25
  %v297 = vunpack.c.h.b16 %v25
  %v298 = vunpack.c.l.b16 %v26
  %v299 = vunpack.c.h.b16 %v26
  %v300 = vunpack.c.l.b16 %v27
  %v301 = vunpack.c.h.b16 %v27
  %v302 = vunpack.c.l.b16 %v28
  %v303 = vunpack.c.h.b16 %v28
  %v304 = vunpack.c.l.b16 %v29
  %v305 = vunpack.c.h.b16 %v29
  %v306 = vunpack.c.l.b16 %v30
  %v307 = vunpack.c.h.b16 %v30
  %v308 = vunpack.c.l.b16 %v31
  %v309 = vunpack.c.h.b16 %v31
  %v310 = vunpack.c.l.b16 %v32
  %v311 = vunpack.c.h.b16 %v32
  %v312 = vunpack.c.l.b16 %v33
  %v313 = vunpack.c.h.b16 %v33
  %v314 = vunpack.c.l.b16 %v34
  %v315 = vunpack.c.h.b16 %v34
  %v316 = vunpack.c.l.b16 %v35
  %v317 = vunpack.c.h.b16 %v35
  %v318 = vunpack.c.l.b16 %v36
  %v319 = vunpack.c.h.b16 %v36
  %v320 = vunpack.c.l.b16 %v37
  %v321 = vunpack.c.h.b16 %v37
  %v322 = vunpack.c.l.b16 %v38
  %v323 = vunpack.c.h.b16 %v38
  %v324 = vunpack.c.l.b16 %v39
  %v325 = vunpack.c.h.b16 %v39
  %v326 = vunpack.c.l.b16 %v40
  %v327 = vunpack.c.h.b16 %v40
  %v328 = vunpack.c.l.b16 %v41
  %v329 = vunpack.c.h.b16 %v41
  %v330 = vunpack.c.l.b16 %v42
  %v331 = vunpack.c.h.b16 %v42
  %v332 = vunpack.c.l.b16 %v43
  %v333 = vunpack.c.h.b16 %v43
  %v334 = vunpack.c.l.b16 %v44
  %v335 = vunpack.c.h.b16 %v44
  %v336 = vunpack.c.l.b16 %v45
  %v337 = vunpack.c.h.b16 %v45
  %v338 = vunpack.c.l.b16 %v46
  %v339 = vunpack.c.h.b16 %v46
  %v340 = vunpack.c.l.b16 %v47
  %v341 = vunpack.c.h.b16 %v47
  %v342 = vunpack.c.l.b16 %v48
  %v343 = vunpack.c.h.b16 %v48
  %v344 = vunpack.c.l.b16 %v49
  %v345 = vunpack.c.h.b16 %v49
  %v346 = vunpack.c.l.b16 %v50
  %v347 = vunpack.c.h.b16 %v50
  %v348 = vunpack.c.l.b16 %v51
  %v349 = vunpack.c.h.b16 %v51
  %v350 = vunpack.c.l.b16 %v52
  %v351 = vunpack.c.h.b16 %v52
  %v352 = vunpack.c.l.b16 %v53
  %v353 = vunpack.c.h.b16 %v53
  %v354 = vunpack.c.l.b16 %v54
  %v355 = vunpack.c.h.b16 %v54
  %v356 = vunpack.c.l.b16 %v55
  %v357 = vunpack.c.h.b16 %v55
  %v358 = vunpack.c.l.b16 %v56
  %v359 = vunpack.c.h.b16 %v56
  %v360 = vunpack.c.l.b16 %v57
  %v361 = vunpack.c.h.b16 %v57
  %v362 = vunpack.c.l.b16 %v58
  %v363 = vunpack.c.h.b16 %v58
  %v364 = vunpack.c.l.b16 %v59
  %v365 = vunpack.c.h.b16 %v59
  %v366 = vunpack.c.l.b16 %v60
  %v367 = vunpack.c.h.b16 %v60
  %v368 = vunpack.c.l.b16 %v61
  %v369 = vunpack.c.h.b16 %v61
  %v370 = vunpack.c.l.b16 %v62
  %v371 = vunpack.c.h.b16 %v62
  %v372 = vunpack.c.l.b16 %v63
  %v373 = vunpack.c.h.b16 %v63
  %v374 = vunpack.c.l.b16 %v64
  %v375 = vunpack.c.h.b16 %v64
  %v376 = vunpack.c.l.b16 %v65
  %v377 = vunpack.c.h.b16 %v65
  %v378 = vunpack.c.l.b16 %v66
  %v379 = vunpack.c.h.b16 %v66
  %v380 = vunpack.c.l.b16 %v67
  %v381 = vunpack.c.h.b16 %v67
  %v382 = vunpack.c.l.b16 %v68
  %v383 = vunpack.c.h.b16 %v68
  %v384 = vunpack.c.l.b16 %v69
  %v385 = vunpack.c.h.b16 %v69
  %v386 = vunpack.c.l.b16 %v70
  %v387 = vunpack.c.h.b16 %v70
  %v388 = vunpack.c.l.b16 %v71
  %v389 = vunpack.c.h.b16 %v71
  %v390 = vunpack.c.l.b16 %v72
  %v391 = vunpack.c.h.b16 %v72
  %v392 = vunpack.c.l.b16 %v73
  %v393 = vunpack.c.h.b16 %v73
  %v394 = vunpack.c.l.b16 %v74
  %v395 = vunpack.c.h.b16 %v74
  %v396 = vunpack.c.l.b16 %v75
  %v397 = vunpack.c.h.b16 %v75
  %v398 = vunpack.c.l.b16 %v76
  %v399 = vunpack.c.h.b16 %v76
  %v400 = vunpack.c.l.b16 %v77
  %v401 = vunpack.c.h.b16 %v77
  %v402 = vpack.c.b16 %v282, %v274
  %v403 = vpack.c.b16 %v283, %v275
  %v404 = vpack.c.b16 %v284, %v276
  %v405 = vpack.c.b16 %v285, %v277
  %v406 = vpack.c.b16 %v286, %v278
  %v407 = vpack.c.b16 %v287, %v279
  %v408 = vpack.c.b16 %v288, %v280
  %v409 = vpack.c.b16 %v289, %v281
  %v410 = vpack.c.b16 %v298, %v290
  %v411 = vpack.c.b16 %v299, %v291
  %v412 = vpack.c.b16 %v300, %v292
  %v413 = vpack.c.b16 %v301, %v293
  %v414 = vpack.c.b16 %v302, %v294
  %v415 = vpack.c.b16 %v303, %v295
  %v416 = vpack.c.b16 %v304, %v296
  %v417 = vpack.c.b16 %v305, %v297
  %v418 = vpack.c.b16 %v314, %v306
  %v419 = vpack.c.b16 %v315, %v307
  %v420 = vpack.c.b16 %v316, %v308
  %v421 = vpack.c.b16 %v317, %v309
  %v422 = vpack.c.b16 %v318, %v310
  %v423 = vpack.c.b16 %v319, %v311
  %v424 = vpack.c.b16 %v320, %v312
  %v425 = vpack.c.b16 %v321, %v313
  %v426 = vpack.c.b16 %v330, %v322
  %v427 = vpack.c.b16 %v331, %v323
  %v428 = vpack.c.b16 %v332, %v324
  %v429 = vpack.c.b16 %v333, %v325
  %v430 = vpack.c.b16 %v334, %v326
  %v431 = vpack.c.b16 %v335, %v327
  %v432 = vpack.c.b16 %v336, %v328
  %v433 = vpack.c.b16 %v337, %v329
  %v434 = vpack.c.b16 %v346, %v338
  %v435 = vpack.c.b16 %v347, %v339
  %v436 = vpack.c.b16 %v348, %v340
  %v437 = vpack.c.b16 %v349, %v341
  %v438 = vpack.c.b16 %v350, %v342
  %v439 = vpack.c.b16 %v351, %v343
  %v440 = vpack.c.b16 %v352, %v344
  %v441 = vpack.c.b16 %v353, %v345
  %v442 = vpack.c.b16 %v362, %v354
  %v443 = vpack.c.b16 %v363, %v355
  %v444 = vpack.c.b16 %v364, %v356
  %v445 = vpack.c.b16 %v365, %v357
  %v446 = vpack.c.b16 %v366, %v358
  %v447 = vpack.c.b16 %v367, %v359
  %v448 = vpack.c.b16 %v368, %v360
  %v449 = vpack.c.b16 %v369, %v361
  %v450 = vpack.c.b16 %v378, %v370
  %v451 = vpack.c.b16 %v379, %v371
  %v452 = vpack.c.b16 %v380, %v372
  %v453 = vpack.c.b16 %v381, %v373
  %v454 = vpack.c.b16 %v382, %v374
  %v455 = vpack.c.b16 %v383, %v375
  %v456 = vpack.c.b16 %v384, %v376
  %v457 = vpack.c.b16 %v385, %v377
  %v458 = vpack.c.b16 %v394, %v386
  %v459 = vpack.c.b16 %v395, %v387
  %v460 = vpack.c.b16 %v396, %v388
  %v461 = vpack.c.b16 %v397, %v389
  %v462 = vpack.c.b16 %v398, %v390
  %v463 = vpack.c.b16 %v399, %v391
  %v464 = vpack.c.b16 %v400, %v392
  %v465 = vpack.c.b16 %v401, %v393
  %v658 = vunpack.c.l.b16 %v78
  %v659 = vunpack.c.l.b16 %v79
  %v660 = vunpack.c.l.b16 %v80
  %v661 = vunpack.c.l.b16 %v81
  %v662 = vunpack.c.l.b16 %v82
  %v663 = vunpack.c.l.b16 %v83
  %v664 = vunpack.c.l.b16 %v84
  %v665 = vunpack.c.l.b16 %v85
  %v666 = vunpack.c.l.b16 %v86
  %v667 = vunpack.c.l.b16 %v87
  %v668 = vunpack.c.l.b16 %v88
  %v669 = vunpack.c.l.b16 %v89
  %v670 = vunpack.c.l.b16 %v90
  %v671 = vunpack.c.l.b16 %v91
  %v672 = vunpack.c.l.b16 %v92
  %v673 = vunpack.c.l.b16 %v93
  %v674 = vunpack.c.l.b16 %v94
  %v675 = vunpack.c.l.b16 %v95
  %v676 = vunpack.c.l.b16 %v96
  %v677 = vunpack.c.l.b16 %v97
  %v678 = vunpack.c.l.b16 %v98
  %v679 = vunpack.c.l.b16 %v99
  %v680 = vunpack.c.l.b16 %v100
  %v681 = vunpack.c.l.b16 %v101
  %v682 = vunpack.c.l.b16 %v102
  %v683 = vunpack.c.l.b16 %v103
  %v684 = vunpack.c.l.b16 %v104
  %v685 = vunpack.c.l.b16 %v105
  %v686 = vunpack.c.l.b16 %v106
  %v687 = vunpack.c.l.b16 %v107
  %v688 = vunpack.c.l.b16 %v108
  %v689 = vunpack.c.l.b16 %v109
  %v690 = vunpack.c.l.b16 %v110
  %v691 = vunpack.c.l.b16 %v111
  %v692 = vunpack.c.l.b16 %v112
  %v693 = vunpack.c.l.b16 %v113
  %v694 = vunpack.c.l.b16 %v114
  %v695 = vunpack.c.l.b16 %v115
  %v696 = vunpack.c.l.b16 %v116
  %v697 = vunpack.c.l.b16 %v117
  %v698 = vunpack.c.l.b16 %v118
  %v699 = vunpack.c.l.b16 %v119
  %v700 = vunpack.c.l.b16 %v120
  %v701 = vunpack.c.l.b16 %v121
  %v702 = vunpack.c.l.b16 %v122
  %v703 = vunpack.c.l.b16 %v123
  %v704 = vunpack.c.l.b16 %v124
  %v705 = vunpack.c.l.b16 %v125
  %v706 = vunpack.c.l.b16 %v126
  %v707 = vunpack.c.l.b16 %v127
  %v708 = vunpack.c.l.b16 %v128
  %v709 = vunpack.c.l.b16 %v129
  %v710 = vunpack.c.l.b16 %v130
  %v711 = vunpack.c.l.b16 %v131
  %v712 = vunpack.c.l.b16 %v132
  %v713 = vunpack.c.l.b16 %v133
  %v714 = vunpack.c.l.b16 %v134
  %v715 = vunpack.c.l.b16 %v135
  %v716 = vunpack.c.l.b16 %v136
  %v717 = vunpack.c.l.b16 %v137
  %v718 = vunpack.c.l.b16 %v138
  %v719 = vunpack.c.l.b16 %v139
  %v720 = vunpack.c.l.b16 %v140
  %v721 = vunpack.c.l.b16 %v141
  %v722 = vunpack.c.l.b16 %v142
  %v723 = vunpack.c.l.b16 %v143
  %v724 = vunpack.c.l.b16 %v144
  %v725 = vunpack.c.l.b16 %v145
  %v726 = vunpack.c.l.b16 %v146
  %v727 = vunpack.c.l.b16 %v147
  %v728 = vunpack.c.l.b16 %v148
  %v729 = vunpack.c.l.b16 %v149
  %v730 = vunpack.c.l.b16 %v150
  %v731 = vunpack.c.l.b16 %v151
  %v732 = vunpack.c.l.b16 %v152
  %v733 = vunpack.c.l.b16 %v153
  %v734 = vunpack.c.l.b16 %v154
  %v735 = vunpack.c.l.b16 %v155
  %v736 = vunpack.c.l.b16 %v156
  %v737 = vunpack.c.l.b16 %v157
  %v738 = vunpack.c.l.b16 %v158
  %v739 = vunpack.c.l.b16 %v159
  %v740 = vunpack.c.l.b16 %v160
  %v741 = vunpack.c.l.b16 %v161
  %v742 = vunpack.c.l.b16 %v162
  %v743 = vunpack.c.l.b16 %v163
  %v744 = vunpack.c.l.b16 %v164
  %v745 = vunpack.c.l.b16 %v165
  %v746 = vunpack.c.l.b16 %v166
  %v747 = vunpack.c.l.b16 %v167
  %v748 = vunpack.c.l.b16 %v168
  %v749 = vunpack.c.l.b16 %v169
  %v750 = vunpack.c.l.b16 %v170
  %v751 = vunpack.c.l.b16 %v171
  %v752 = vunpack.c.l.b16 %v172
  %v753 = vunpack.c.l.b16 %v173
  %v754 = vunpack.c.l.b16 %v174
  %v755 = vunpack.c.l.b16 %v175
  %v756 = vunpack.c.l.b16 %v176
  %v757 = vunpack.c.l.b16 %v177
  %v758 = vunpack.c.l.b16 %v178
  %v759 = vunpack.c.l.b16 %v179
  %v760 = vunpack.c.l.b16 %v180
  %v761 = vunpack.c.l.b16 %v181
  %v762 = vunpack.c.l.b16 %v182
  %v763 = vunpack.c.l.b16 %v183
  %v764 = vunpack.c.l.b16 %v184
  %v765 = vunpack.c.l.b16 %v185
  %v766 = vunpack.c.l.b16 %v186
  %v767 = vunpack.c.l.b16 %v187
  %v768 = vunpack.c.l.b16 %v188
  %v769 = vunpack.c.l.b16 %v189
  %v770 = vunpack.c.l.b16 %v190
  %v771 = vunpack.c.l.b16 %v191
  %v772 = vunpack.c.l.b16 %v192
  %v773 = vunpack.c.l.b16 %v193
  %v774 = vunpack.c.l.b16 %v194
  %v775 = vunpack.c.l.b16 %v195
  %v776 = vunpack.c.l.b16 %v196
  %v777 = vunpack.c.l.b16 %v197
  %v778 = vunpack.c.l.b16 %v198
  %v779 = vunpack.c.l.b16 %v199
  %v780 = vunpack.c.l.b16 %v200
  %v781 = vunpack.c.l.b16 %v201
  %v782 = vunpack.c.l.b16 %v202
  %v783 = vunpack.c.l.b16 %v203
  %v784 = vunpack.c.l.b16 %v204
  %v785 = vunpack.c.l.b16 %v205
  %v786 = vpack.c.b16 %v659, %v658
  %v787 = vpack.c.b16 %v661, %v660
  %v788 = vpack.c.b16 %v663, %v662
  %v789 = vpack.c.b16 %v665, %v664
  %v790 = vpack.c.b16 %v667, %v666
  %v791 = vpack.c.b16 %v669, %v668
  %v792 = vpack.c.b16 %v671, %v670
  %v793 = vpack.c.b16 %v673, %v672
  %v794 = vpack.c.b16 %v675, %v674
  %v795 = vpack.c.b16 %v677, %v676
  %v796 = vpack.c.b16 %v679, %v678
  %v797 = vpack.c.b16 %v681, %v680
  %v798 = vpack.c.b16 %v683, %v682
  %v799 = vpack.c.b16 %v685, %v684
  %v800 = vpack.c.b16 %v687, %v686
  %v801 = vpack.c.b16 %v689, %v688
  %v802 = vpack.c.b16 %v691, %v690
  %v803 = vpack.c.b16 %v693, %v692
  %v804 = vpack.c.b16 %v695, %v694
  %v805 = vpack.c.b16 %v697, %v696
  %v806 = vpack.c.b16 %v699, %v698
  %v807 = vpack.c.b16 %v701, %v700
  %v808 = vpack.c.b16 %v703, %v702
  %v809 = vpack.c.b16 %v705, %v704
  %v810 = vpack.c.b16 %v707, %v706
  %v811 = vpack.c.b16 %v709, %v708
  %v812 = vpack.c.b16 %v711, %v710
  %v813 = vpack.c.b16 %v713, %v712
  %v814 = vpack.c.b16 %v715, %v714
  %v815 = vpack.c.b16 %v717, %v716
  %v816 = vpack.c.b16 %v719, %v718
  %v817 = vpack.c.b16 %v721, %v720
  %v818 = vpack.c.b16 %v723, %v722
  %v819 = vpack.c.b16 %v725, %v724
  %v820 = vpack.c.b16 %v727, %v726
  %v821 = vpack.c.b16 %v729, %v728
  %v822 = vpack.c.b16 %v731, %v730
  %v823 = vpack.c.b16 %v733, %v732
  %v824 = vpack.c.b16 %v735, %v734
  %v825 = vpack.c.b16 %v737, %v736
  %v826 = vpack.c.b16 %v739, %v738
  %v827 = vpack.c.b16 %v741, %v740
  %v828 = vpack.c.b16 %v743, %v742
  %v829 = vpack.c.b16 %v745, %v744
  %v830 = vpack.c.b16 %v747, %v746
  %v831 = vpack.c.b16 %v749, %v748
  %v832 = vpack.c.b16 %v751, %v750
  %v833 = vpack.c.b16 %v753, %v752
  %v834 = vpack.c.b16 %v755, %v754
  %v835 = vpack.c.b16 %v757, %v756
  %v836 = vpack.c.b16 %v759, %v758
  %v837 = vpack.c.b16 %v761, %v760
  %v838 = vpack.c.b16 %v763, %v762
  %v839 = vpack.c.b16 %v765, %v764
  %v840 = vpack.c.b16 %v767, %v766
  %v841 = vpack.c.b16 %v769, %v768
  %v842 = vpack.c.b16 %v771, %v770
  %v843 = vpack.c.b16 %v773, %v772
  %v844 = vpack.c.b16 %v775, %v774
  %v845 = vpack.c.b16 %v777, %v776
  %v846 = vpack.c.b16 %v779, %v778
  %v847 = vpack.c.b16 %v781, %v780
  %v848 = vpack.c.b16 %v783, %v782
  %v849 = vpack.c.b16 %v785, %v784
  %914 = vmatpush.bf16.msra.mxu0 %v793
  %915 = vmatpush.bf16.msra.mxu0 %v792
  %916 = vmatpush.bf16.msra.mxu0 %v791
  %917 = vmatpush.bf16.msra.mxu0 %v790
  %918 = vmatpush.bf16.msra.mxu0 %v789
  %919 = vmatpush.bf16.msra.mxu0 %v788
  %920 = vmatpush.bf16.msra.mxu0 %v787
  %921 = vmatpush.bf16.msra.mxu0 %v786
  %922 = vmatmul.bf16.gmra.mxu0 %v402
  %v923 = vpop.f32.mrf.mxu0
  %v924 = vadd.f32 %v208, %v923
  %v925 = vpop.f32.mrf.mxu0
  %v926 = vadd.f32 %v208, %v925
  %927 = vmatmul.bf16.gmra.mxu0 %v410
  %v928 = vpop.f32.mrf.mxu0
  %v929 = vadd.f32 %v208, %v928
  %v930 = vpop.f32.mrf.mxu0
  %v931 = vadd.f32 %v208, %v930
  %932 = vmatmul.bf16.gmra.mxu0 %v418
  %v933 = vpop.f32.mrf.mxu0
  %v934 = vadd.f32 %v208, %v933
  %v935 = vpop.f32.mrf.mxu0
  %v936 = vadd.f32 %v208, %v935
  %937 = vmatmul.bf16.gmra.mxu0 %v426
  %v938 = vpop.f32.mrf.mxu0
  %v939 = vadd.f32 %v208, %v938
  %v940 = vpop.f32.mrf.mxu0
  %v941 = vadd.f32 %v208, %v940
  %942 = vmatmul.bf16.gmra.mxu0 %v434
  %v943 = vpop.f32.mrf.mxu0
  %v944 = vadd.f32 %v208, %v943
  %v945 = vpop.f32.mrf.mxu0
  %v946 = vadd.f32 %v208, %v945
  %947 = vmatmul.bf16.gmra.mxu0 %v442
  %v948 = vpop.f32.mrf.mxu0
  %v949 = vadd.f32 %v208, %v948
  %v950 = vpop.f32.mrf.mxu0
  %v951 = vadd.f32 %v208, %v950
  %952 = vmatmul.bf16.gmra.mxu0 %v450
  %v953 = vpop.f32.mrf.mxu0
  %v954 = vadd.f32 %v208, %v953
  %v955 = vpop.f32.mrf.mxu0
  %v956 = vadd.f32 %v208, %v955
  %957 = vmatmul.bf16.gmra.mxu0 %v458
  %v958 = vpop.f32.mrf.mxu0
  %v959 = vadd.f32 %v208, %v958
  %v960 = vpop.f32.mrf.mxu0
  %v961 = vadd.f32 %v208, %v960
  %962 = vdwg.mxu0
  %963 = vmatpush.bf16.msra.mxu0 %v801
  %964 = vmatpush.bf16.msra.mxu0 %v800
  %965 = vmatpush.bf16.msra.mxu0 %v799
  %966 = vmatpush.bf16.msra.mxu0 %v798
  %967 = vmatpush.bf16.msra.mxu0 %v797
  %968 = vmatpush.bf16.msra.mxu0 %v796
  %969 = vmatpush.bf16.msra.mxu0 %v795
  %970 = vmatpush.bf16.msra.mxu0 %v794
  %971 = vmatmul.bf16.gmra.mxu0 %v403
  %v972 = vpop.f32.mrf.mxu0
  %v973 = vadd.f32 %v924, %v972
  %v974 = vpop.f32.mrf.mxu0
  %v975 = vadd.f32 %v926, %v974
  %976 = vmatmul.bf16.gmra.mxu0 %v411
  %v977 = vpop.f32.mrf.mxu0
  %v978 = vadd.f32 %v929, %v977
  %v979 = vpop.f32.mrf.mxu0
  %v980 = vadd.f32 %v931, %v979
  %981 = vmatmul.bf16.gmra.mxu0 %v419
  %v982 = vpop.f32.mrf.mxu0
  %v983 = vadd.f32 %v934, %v982
  %v984 = vpop.f32.mrf.mxu0
  %v985 = vadd.f32 %v936, %v984
  %986 = vmatmul.bf16.gmra.mxu0 %v427
  %v987 = vpop.f32.mrf.mxu0
  %v988 = vadd.f32 %v939, %v987
  %v989 = vpop.f32.mrf.mxu0
  %v990 = vadd.f32 %v941, %v989
  %991 = vmatmul.bf16.gmra.mxu0 %v435
  %v992 = vpop.f32.mrf.mxu0
  %v993 = vadd.f32 %v944, %v992
  %v994 = vpop.f32.mrf.mxu0
  %v995 = vadd.f32 %v946, %v994
  %996 = vmatmul.bf16.gmra.mxu0 %v443
  %v997 = vpop.f32.mrf.mxu0
  %v998 = vadd.f32 %v949, %v997
  %v999 = vpop.f32.mrf.mxu0
  %v1000 = vadd.f32 %v951, %v999
  %1001 = vmatmul.bf16.gmra.mxu0 %v451
  %v1002 = vpop.f32.mrf.mxu0
  %v1003 = vadd.f32 %v954, %v1002
  %v1004 = vpop.f32.mrf.mxu0
  %v1005 = vadd.f32 %v956, %v1004
  %1006 = vmatmul.bf16.gmra.mxu0 %v459
  %v1007 = vpop.f32.mrf.mxu0
  %v1008 = vadd.f32 %v959, %v1007
  %v1009 = vpop.f32.mrf.mxu0
  %v1010 = vadd.f32 %v961, %v1009
  %1011 = vdwg.mxu0
  %1012 = vmatpush.bf16.msra.mxu0 %v809
  %1013 = vmatpush.bf16.msra.mxu0 %v808
  %1014 = vmatpush.bf16.msra.mxu0 %v807
  %1015 = vmatpush.bf16.msra.mxu0 %v806
  %1016 = vmatpush.bf16.msra.mxu0 %v805
  %1017 = vmatpush.bf16.msra.mxu0 %v804
  %1018 = vmatpush.bf16.msra.mxu0 %v803
  %1019 = vmatpush.bf16.msra.mxu0 %v802
  %1020 = vmatmul.bf16.gmra.mxu0 %v404
  %v1021 = vpop.f32.mrf.mxu0
  %v1022 = vadd.f32 %v973, %v1021
  %v1023 = vpop.f32.mrf.mxu0
  %v1024 = vadd.f32 %v975, %v1023
  %1025 = vmatmul.bf16.gmra.mxu0 %v412
  %v1026 = vpop.f32.mrf.mxu0
  %v1027 = vadd.f32 %v978, %v1026
  %v1028 = vpop.f32.mrf.mxu0
  %v1029 = vadd.f32 %v980, %v1028
  %1030 = vmatmul.bf16.gmra.mxu0 %v420
  %v1031 = vpop.f32.mrf.mxu0
  %v1032 = vadd.f32 %v983, %v1031
  %v1033 = vpop.f32.mrf.mxu0
  %v1034 = vadd.f32 %v985, %v1033
  %1035 = vmatmul.bf16.gmra.mxu0 %v428
  %v1036 = vpop.f32.mrf.mxu0
  %v1037 = vadd.f32 %v988, %v1036
  %v1038 = vpop.f32.mrf.mxu0
  %v1039 = vadd.f32 %v990, %v1038
  %1040 = vmatmul.bf16.gmra.mxu0 %v436
  %v1041 = vpop.f32.mrf.mxu0
  %v1042 = vadd.f32 %v993, %v1041
  %v1043 = vpop.f32.mrf.mxu0
  %v1044 = vadd.f32 %v995, %v1043
  %1045 = vmatmul.bf16.gmra.mxu0 %v444
  %v1046 = vpop.f32.mrf.mxu0
  %v1047 = vadd.f32 %v998, %v1046
  %v1048 = vpop.f32.mrf.mxu0
  %v1049 = vadd.f32 %v1000, %v1048
  %1050 = vmatmul.bf16.gmra.mxu0 %v452
  %v1051 = vpop.f32.mrf.mxu0
  %v1052 = vadd.f32 %v1003, %v1051
  %v1053 = vpop.f32.mrf.mxu0
  %v1054 = vadd.f32 %v1005, %v1053
  %1055 = vmatmul.bf16.gmra.mxu0 %v460
  %v1056 = vpop.f32.mrf.mxu0
  %v1057 = vadd.f32 %v1008, %v1056
  %v1058 = vpop.f32.mrf.mxu0
  %v1059 = vadd.f32 %v1010, %v1058
  %1060 = vdwg.mxu0
  %1061 = vmatpush.bf16.msra.mxu0 %v817
  %1062 = vmatpush.bf16.msra.mxu0 %v816
  %1063 = vmatpush.bf16.msra.mxu0 %v815
  %1064 = vmatpush.bf16.msra.mxu0 %v814
  %1065 = vmatpush.bf16.msra.mxu0 %v813
  %1066 = vmatpush.bf16.msra.mxu0 %v812
  %1067 = vmatpush.bf16.msra.mxu0 %v811
  %1068 = vmatpush.bf16.msra.mxu0 %v810
  %1069 = vmatmul.bf16.gmra.mxu0 %v405
  %v1070 = vpop.f32.mrf.mxu0
  %v1071 = vadd.f32 %v1022, %v1070
  %v1072 = vpop.f32.mrf.mxu0
  %v1073 = vadd.f32 %v1024, %v1072
  %1074 = vmatmul.bf16.gmra.mxu0 %v413
  %v1075 = vpop.f32.mrf.mxu0
  %v1076 = vadd.f32 %v1027, %v1075
  %v1077 = vpop.f32.mrf.mxu0
  %v1078 = vadd.f32 %v1029, %v1077
  %1079 = vmatmul.bf16.gmra.mxu0 %v421
  %v1080 = vpop.f32.mrf.mxu0
  %v1081 = vadd.f32 %v1032, %v1080
  %v1082 = vpop.f32.mrf.mxu0
  %v1083 = vadd.f32 %v1034, %v1082
  %1084 = vmatmul.bf16.gmra.mxu0 %v429
  %v1085 = vpop.f32.mrf.mxu0
  %v1086 = vadd.f32 %v1037, %v1085
  %v1087 = vpop.f32.mrf.mxu0
  %v1088 = vadd.f32 %v1039, %v1087
  %1089 = vmatmul.bf16.gmra.mxu0 %v437
  %v1090 = vpop.f32.mrf.mxu0
  %v1091 = vadd.f32 %v1042, %v1090
  %v1092 = vpop.f32.mrf.mxu0
  %v1093 = vadd.f32 %v1044, %v1092
  %1094 = vmatmul.bf16.gmra.mxu0 %v445
  %v1095 = vpop.f32.mrf.mxu0
  %v1096 = vadd.f32 %v1047, %v1095
  %v1097 = vpop.f32.mrf.mxu0
  %v1098 = vadd.f32 %v1049, %v1097
  %1099 = vmatmul.bf16.gmra.mxu0 %v453
  %v1100 = vpop.f32.mrf.mxu0
  %v1101 = vadd.f32 %v1052, %v1100
  %v1102 = vpop.f32.mrf.mxu0
  %v1103 = vadd.f32 %v1054, %v1102
  %1104 = vmatmul.bf16.gmra.mxu0 %v461
  %v1105 = vpop.f32.mrf.mxu0
  %v1106 = vadd.f32 %v1057, %v1105
  %v1107 = vpop.f32.mrf.mxu0
  %v1108 = vadd.f32 %v1059, %v1107
  %1109 = vdwg.mxu0
  %1110 = vmatpush.bf16.msra.mxu0 %v825
  %1111 = vmatpush.bf16.msra.mxu0 %v824
  %1112 = vmatpush.bf16.msra.mxu0 %v823
  %1113 = vmatpush.bf16.msra.mxu0 %v822
  %1114 = vmatpush.bf16.msra.mxu0 %v821
  %1115 = vmatpush.bf16.msra.mxu0 %v820
  %1116 = vmatpush.bf16.msra.mxu0 %v819
  %1117 = vmatpush.bf16.msra.mxu0 %v818
  %1118 = vmatmul.bf16.gmra.mxu0 %v406
  %v1119 = vpop.f32.mrf.mxu0
  %v1120 = vadd.f32 %v1071, %v1119
  %v1121 = vpop.f32.mrf.mxu0
  %v1122 = vadd.f32 %v1073, %v1121
  %1123 = vmatmul.bf16.gmra.mxu0 %v414
  %v1124 = vpop.f32.mrf.mxu0
  %v1125 = vadd.f32 %v1076, %v1124
  %v1126 = vpop.f32.mrf.mxu0
  %v1127 = vadd.f32 %v1078, %v1126
  %1128 = vmatmul.bf16.gmra.mxu0 %v422
  %v1129 = vpop.f32.mrf.mxu0
  %v1130 = vadd.f32 %v1081, %v1129
  %v1131 = vpop.f32.mrf.mxu0
  %v1132 = vadd.f32 %v1083, %v1131
  %1133 = vmatmul.bf16.gmra.mxu0 %v430
  %v1134 = vpop.f32.mrf.mxu0
  %v1135 = vadd.f32 %v1086, %v1134
  %v1136 = vpop.f32.mrf.mxu0
  %v1137 = vadd.f32 %v1088, %v1136
  %1138 = vmatmul.bf16.gmra.mxu0 %v438
  %v1139 = vpop.f32.mrf.mxu0
  %v1140 = vadd.f32 %v1091, %v1139
  %v1141 = vpop.f32.mrf.mxu0
  %v1142 = vadd.f32 %v1093, %v1141
  %1143 = vmatmul.bf16.gmra.mxu0 %v446
  %v1144 = vpop.f32.mrf.mxu0
  %v1145 = vadd.f32 %v1096, %v1144
  %v1146 = vpop.f32.mrf.mxu0
  %v1147 = vadd.f32 %v1098, %v1146
  %1148 = vmatmul.bf16.gmra.mxu0 %v454
  %v1149 = vpop.f32.mrf.mxu0
  %v1150 = vadd.f32 %v1101, %v1149
  %v1151 = vpop.f32.mrf.mxu0
  %v1152 = vadd.f32 %v1103, %v1151
  %1153 = vmatmul.bf16.gmra.mxu0 %v462
  %v1154 = vpop.f32.mrf.mxu0
  %v1155 = vadd.f32 %v1106, %v1154
  %v1156 = vpop.f32.mrf.mxu0
  %v1157 = vadd.f32 %v1108, %v1156
  %1158 = vdwg.mxu0
  %1159 = vmatpush.bf16.msra.mxu0 %v833
  %1160 = vmatpush.bf16.msra.mxu0 %v832
  %1161 = vmatpush.bf16.msra.mxu0 %v831
  %1162 = vmatpush.bf16.msra.mxu0 %v830
  %1163 = vmatpush.bf16.msra.mxu0 %v829
  %1164 = vmatpush.bf16.msra.mxu0 %v828
  %1165 = vmatpush.bf16.msra.mxu0 %v827
  %1166 = vmatpush.bf16.msra.mxu0 %v826
  %1167 = vmatmul.bf16.gmra.mxu0 %v407
  %v1168 = vpop.f32.mrf.mxu0
  %v1169 = vadd.f32 %v1120, %v1168
  %v1170 = vpop.f32.mrf.mxu0
  %v1171 = vadd.f32 %v1122, %v1170
  %1172 = vmatmul.bf16.gmra.mxu0 %v415
  %v1173 = vpop.f32.mrf.mxu0
  %v1174 = vadd.f32 %v1125, %v1173
  %v1175 = vpop.f32.mrf.mxu0
  %v1176 = vadd.f32 %v1127, %v1175
  %1177 = vmatmul.bf16.gmra.mxu0 %v423
  %v1178 = vpop.f32.mrf.mxu0
  %v1179 = vadd.f32 %v1130, %v1178
  %v1180 = vpop.f32.mrf.mxu0
  %v1181 = vadd.f32 %v1132, %v1180
  %1182 = vmatmul.bf16.gmra.mxu0 %v431
  %v1183 = vpop.f32.mrf.mxu0
  %v1184 = vadd.f32 %v1135, %v1183
  %v1185 = vpop.f32.mrf.mxu0
  %v1186 = vadd.f32 %v1137, %v1185
  %1187 = vmatmul.bf16.gmra.mxu0 %v439
  %v1188 = vpop.f32.mrf.mxu0
  %v1189 = vadd.f32 %v1140, %v1188
  %v1190 = vpop.f32.mrf.mxu0
  %v1191 = vadd.f32 %v1142, %v1190
  %1192 = vmatmul.bf16.gmra.mxu0 %v447
  %v1193 = vpop.f32.mrf.mxu0
  %v1194 = vadd.f32 %v1145, %v1193
  %v1195 = vpop.f32.mrf.mxu0
  %v1196 = vadd.f32 %v1147, %v1195
  %1197 = vmatmul.bf16.gmra.mxu0 %v455
  %v1198 = vpop.f32.mrf.mxu0
  %v1199 = vadd.f32 %v1150, %v1198
  %v1200 = vpop.f32.mrf.mxu0
  %v1201 = vadd.f32 %v1152, %v1200
  %1202 = vmatmul.bf16.gmra.mxu0 %v463
  %v1203 = vpop.f32.mrf.mxu0
  %v1204 = vadd.f32 %v1155, %v1203
  %v1205 = vpop.f32.mrf.mxu0
  %v1206 = vadd.f32 %v1157, %v1205
  %1207 = vdwg.mxu0
  %1208 = vmatpush.bf16.msra.mxu0 %v841
  %1209 = vmatpush.bf16.msra.mxu0 %v840
  %1210 = vmatpush.bf16.msra.mxu0 %v839
  %1211 = vmatpush.bf16.msra.mxu0 %v838
  %1212 = vmatpush.bf16.msra.mxu0 %v837
  %1213 = vmatpush.bf16.msra.mxu0 %v836
  %1214 = vmatpush.bf16.msra.mxu0 %v835
  %1215 = vmatpush.bf16.msra.mxu0 %v834
  %1216 = vmatmul.bf16.gmra.mxu0 %v408
  %v1217 = vpop.f32.mrf.mxu0
  %v1218 = vadd.f32 %v1169, %v1217
  %v1219 = vpop.f32.mrf.mxu0
  %v1220 = vadd.f32 %v1171, %v1219
  %1221 = vmatmul.bf16.gmra.mxu0 %v416
  %v1222 = vpop.f32.mrf.mxu0
  %v1223 = vadd.f32 %v1174, %v1222
  %v1224 = vpop.f32.mrf.mxu0
  %v1225 = vadd.f32 %v1176, %v1224
  %1226 = vmatmul.bf16.gmra.mxu0 %v424
  %v1227 = vpop.f32.mrf.mxu0
  %v1228 = vadd.f32 %v1179, %v1227
  %v1229 = vpop.f32.mrf.mxu0
  %v1230 = vadd.f32 %v1181, %v1229
  %1231 = vmatmul.bf16.gmra.mxu0 %v432
  %v1232 = vpop.f32.mrf.mxu0
  %v1233 = vadd.f32 %v1184, %v1232
  %v1234 = vpop.f32.mrf.mxu0
  %v1235 = vadd.f32 %v1186, %v1234
  %1236 = vmatmul.bf16.gmra.mxu0 %v440
  %v1237 = vpop.f32.mrf.mxu0
  %v1238 = vadd.f32 %v1189, %v1237
  %v1239 = vpop.f32.mrf.mxu0
  %v1240 = vadd.f32 %v1191, %v1239
  %1241 = vmatmul.bf16.gmra.mxu0 %v448
  %v1242 = vpop.f32.mrf.mxu0
  %v1243 = vadd.f32 %v1194, %v1242
  %v1244 = vpop.f32.mrf.mxu0
  %v1245 = vadd.f32 %v1196, %v1244
  %1246 = vmatmul.bf16.gmra.mxu0 %v456
  %v1247 = vpop.f32.mrf.mxu0
  %v1248 = vadd.f32 %v1199, %v1247
  %v1249 = vpop.f32.mrf.mxu0
  %v1250 = vadd.f32 %v1201, %v1249
  %1251 = vmatmul.bf16.gmra.mxu0 %v464
  %v1252 = vpop.f32.mrf.mxu0
  %v1253 = vadd.f32 %v1204, %v1252
  %v1254 = vpop.f32.mrf.mxu0
  %v1255 = vadd.f32 %v1206, %v1254
  %1256 = vdwg.mxu0
  %1257 = vmatpush.bf16.msra.mxu0 %v849
  %1258 = vmatpush.bf16.msra.mxu0 %v848
  %1259 = vmatpush.bf16.msra.mxu0 %v847
  %1260 = vmatpush.bf16.msra.mxu0 %v846
  %1261 = vmatpush.bf16.msra.mxu0 %v845
  %1262 = vmatpush.bf16.msra.mxu0 %v844
  %1263 = vmatpush.bf16.msra.mxu0 %v843
  %1264 = vmatpush.bf16.msra.mxu0 %v842
  %1265 = vmatmul.bf16.gmra.mxu0 %v409
  %v1266 = vpop.f32.mrf.mxu0
  %v1267 = vadd.f32 %v1218, %v1266
  %v1268 = vpop.f32.mrf.mxu0
  %v1269 = vadd.f32 %v1220, %v1268
  %1270 = vmatmul.bf16.gmra.mxu0 %v417
  %v1271 = vpop.f32.mrf.mxu0
  %v1272 = vadd.f32 %v1223, %v1271
  %v1273 = vpop.f32.mrf.mxu0
  %v1274 = vadd.f32 %v1225, %v1273
  %1275 = vmatmul.bf16.gmra.mxu0 %v425
  %v1276 = vpop.f32.mrf.mxu0
  %v1277 = vadd.f32 %v1228, %v1276
  %v1278 = vpop.f32.mrf.mxu0
  %v1279 = vadd.f32 %v1230, %v1278
  %1280 = vmatmul.bf16.gmra.mxu0 %v433
  %v1281 = vpop.f32.mrf.mxu0
  %v1282 = vadd.f32 %v1233, %v1281
  %v1283 = vpop.f32.mrf.mxu0
  %v1284 = vadd.f32 %v1235, %v1283
  %1285 = vmatmul.bf16.gmra.mxu0 %v441
  %v1286 = vpop.f32.mrf.mxu0
  %v1287 = vadd.f32 %v1238, %v1286
  %v1288 = vpop.f32.mrf.mxu0
  %v1289 = vadd.f32 %v1240, %v1288
  %1290 = vmatmul.bf16.gmra.mxu0 %v449
  %v1291 = vpop.f32.mrf.mxu0
  %v1292 = vadd.f32 %v1243, %v1291
  %v1293 = vpop.f32.mrf.mxu0
  %v1294 = vadd.f32 %v1245, %v1293
  %1295 = vmatmul.bf16.gmra.mxu0 %v457
  %v1296 = vpop.f32.mrf.mxu0
  %v1297 = vadd.f32 %v1248, %v1296
  %v1298 = vpop.f32.mrf.mxu0
  %v1299 = vadd.f32 %v1250, %v1298
  %1300 = vmatmul.bf16.gmra.mxu0 %v465
  %v1301 = vpop.f32.mrf.mxu0
  %v1302 = vadd.f32 %v1253, %v1301
  %v1303 = vpop.f32.mrf.mxu0
  %v1304 = vadd.f32 %v1255, %v1303
  %1305 = vdwg.mxu0
  %vm1306 = vcmp.ge.f32.partialorder %v1267, 0.0
  %vm1307 = vcmp.ge.f32.partialorder %v1269, 0.0
  %vm1308 = vcmp.ge.f32.partialorder %v1272, 0.0
  %vm1309 = vcmp.ge.f32.partialorder %v1274, 0.0
  %vm1310 = vcmp.ge.f32.partialorder %v1277, 0.0
  %vm1311 = vcmp.ge.f32.partialorder %v1279, 0.0
  %vm1312 = vcmp.ge.f32.partialorder %v1282, 0.0
  %vm1313 = vcmp.ge.f32.partialorder %v1284, 0.0
  %vm1314 = vcmp.ge.f32.partialorder %v1287, 0.0
  %vm1315 = vcmp.ge.f32.partialorder %v1289, 0.0
  %vm1316 = vcmp.ge.f32.partialorder %v1292, 0.0
  %vm1317 = vcmp.ge.f32.partialorder %v1294, 0.0
  %vm1318 = vcmp.ge.f32.partialorder %v1297, 0.0
  %vm1319 = vcmp.ge.f32.partialorder %v1299, 0.0
  %vm1320 = vcmp.ge.f32.partialorder %v1302, 0.0
  %vm1321 = vcmp.ge.f32.partialorder %v1304, 0.0
  %v1322 = vmul.f32 %v1267, 0.01
  %v1323 = vmul.f32 %v1269, 0.01
  %v1324 = vmul.f32 %v1272, 0.01
  %v1325 = vmul.f32 %v1274, 0.01
  %v1326 = vmul.f32 %v1277, 0.01
  %v1327 = vmul.f32 %v1279, 0.01
  %v1328 = vmul.f32 %v1282, 0.01
  %v1329 = vmul.f32 %v1284, 0.01
  %v1330 = vmul.f32 %v1287, 0.01
  %v1331 = vmul.f32 %v1289, 0.01
  %v1332 = vmul.f32 %v1292, 0.01
  %v1333 = vmul.f32 %v1294, 0.01
  %v1334 = vmul.f32 %v1297, 0.01
  %v1335 = vmul.f32 %v1299, 0.01
  %v1336 = vmul.f32 %v1302, 0.01
  %v1337 = vmul.f32 %v1304, 0.01
  %v1338 = vsel %vm1306, %v1267, %v1322
  %v1339 = vsel %vm1307, %v1269, %v1323
  %v1340 = vsel %vm1308, %v1272, %v1324
  %v1341 = vsel %vm1309, %v1274, %v1325
  %v1342 = vsel %vm1310, %v1277, %v1326
  %v1343 = vsel %vm1311, %v1279, %v1327
  %v1344 = vsel %vm1312, %v1282, %v1328
  %v1345 = vsel %vm1313, %v1284, %v1329
  %v1346 = vsel %vm1314, %v1287, %v1330
  %v1347 = vsel %vm1315, %v1289, %v1331
  %v1348 = vsel %vm1316, %v1292, %v1332
  %v1349 = vsel %vm1317, %v1294, %v1333
  %v1350 = vsel %vm1318, %v1297, %v1334
  %v1351 = vsel %vm1319, %v1299, %v1335
  %v1352 = vsel %vm1320, %v1302, %v1336
  %v1353 = vsel %vm1321, %v1304, %v1337
  %1354 = vst [vmem:[%s3] sm:$0xff] %v1338
  %1355 = vst [vmem:[%s3 + $0x8] sm:$0xff] %v1339
  %1356 = vst [vmem:[%s3 + $0x10] sm:$0xff] %v1340
  %1357 = vst [vmem:[%s3 + $0x18] sm:$0xff] %v1341
  %1358 = vst [vmem:[%s3 + $0x20] sm:$0xff] %v1342
  %1359 = vst [vmem:[%s3 + $0x28] sm:$0xff] %v1343
  %1360 = vst [vmem:[%s3 + $0x30] sm:$0xff] %v1344
  %1361 = vst [vmem:[%s3 + $0x38] sm:$0xff] %v1345
  %1362 = vst [vmem:[%s3 + $0x40] sm:$0xff] %v1346
  %1363 = vst [vmem:[%s3 + $0x48] sm:$0xff] %v1347
  %1364 = vst [vmem:[%s3 + $0x50] sm:$0xff] %v1348
  %1365 = vst [vmem:[%s3 + $0x58] sm:$0xff] %v1349
  %1366 = vst [vmem:[%s3 + $0x60] sm:$0xff] %v1350
  %1367 = vst [vmem:[%s3 + $0x68] sm:$0xff] %v1351
  %1368 = vst [vmem:[%s3 + $0x70] sm:$0xff] %v1352
  %1369 = vst [vmem:[%s3 + $0x78] sm:$0xff] %v1353
  // Predicated region
  $region14: #{rnd_forward.5} parent=0 // pred_check
    _
  $region15: #{rnd_forward.5} parent=0 // pred_check_branch
    %1371 = sbr.rel (0) target = $region17
  $region16: #{rnd_forward.5} parent=0 // pred_region
    _
  $region17: #{rnd_forward.5} parent=0 // pred_fallthru
    _
  // Predicated region
  $region18: #{rnd_forward.5} parent=0 // pred_check
    _
  $region19: #{rnd_forward.5} parent=0 // pred_check_branch
    %1373 = sbr.rel (0) target = $region21
  $region20: #{rnd_forward.5} parent=0 // pred_region
    _
  $region21: #{rnd_forward.5} parent=0 // pred_fallthru
    _

// kernel: rnd_forward.6
$region0: #{rnd_forward.6}
  #allocation0 [shape = 'u32[]', space=smem, size = 0x4, offset = 0x4, fixed_abs, tag = 'smem constant byte address 0x4 - core index']
  #allocation1 [shape = 'u32[72,128]{1,0:T(1,128)}', space=vmem, size = 0x9000, scoped, tag = 'internal scratch']
  %s0 = inlined_call_operand.vmem [shape: bf16[104,512], index: 0, kind: input, shape index: {}]
  %s1 = inlined_call_operand.vmem [shape: bf16[512,128], index: 1, kind: input, shape index: {}]
  %s2 = inlined_call_operand.vmem [shape: f32[1,128], index: 2, kind: input, shape index: {}]
  %s3 = inlined_call_operand.vmem [shape: f32[104,128], index: 3, kind: output, shape index: {}]
  %s4 = sld [smem:[#allocation0]]
  $region22: #{rnd_forward.6} parent=0
    _
  %s6 = ssub.s32 1, %s4
  %s7 = scalar_select 0, %s6, %s4
  // Predicated region
  $region2: #{rnd_forward.6} parent=0 // pred_check
    _
  $region3: #{rnd_forward.6} parent=0 // pred_check_branch
    %9 = sbr.rel (0) target = $region5
  $region4: #{rnd_forward.6} parent=0 // pred_region
    _
  $region5: #{rnd_forward.6} parent=0 // pred_fallthru
    _
  // Predicated region
  $region6: #{rnd_forward.6} parent=0 // pred_check
    _
  $region7: #{rnd_forward.6} parent=0 // pred_check_branch
    %11 = sbr.rel (0) target = $region9
  $region8: #{rnd_forward.6} parent=0 // pred_region
    _
  $region9: #{rnd_forward.6} parent=0 // pred_fallthru
    _
  // Predicated region
  $region10: #{rnd_forward.6} parent=0 // pred_check
    _
  $region11: #{rnd_forward.6} parent=0 // pred_check_branch
    %13 = sbr.rel (0) target = $region13
  $region12: #{rnd_forward.6} parent=0 // pred_region
    _
  $region13: #{rnd_forward.6} parent=0 // pred_fallthru
    _
  %v14 = vld [vmem:[%s0] sm:$0xff]
  %v15 = vld [vmem:[%s0 + $0x8] sm:$0xff]
  %v16 = vld [vmem:[%s0 + $0x10] sm:$0xff]
  %v17 = vld [vmem:[%s0 + $0x18] sm:$0xff]
  %v18 = vld [vmem:[%s0 + $0x20] sm:$0xff]
  %v19 = vld [vmem:[%s0 + $0x28] sm:$0xff]
  %v20 = vld [vmem:[%s0 + $0x30] sm:$0xff]
  %v21 = vld [vmem:[%s0 + $0x38] sm:$0xff]
  %v22 = vld [vmem:[%s0 + $0x40] sm:$0xff]
  %v23 = vld [vmem:[%s0 + $0x48] sm:$0xff]
  %v24 = vld [vmem:[%s0 + $0x50] sm:$0xff]
  %v25 = vld [vmem:[%s0 + $0x58] sm:$0xff]
  %v26 = vld [vmem:[%s0 + $0x60] sm:$0xff]
  %v27 = vld [vmem:[%s0 + $0x68] sm:$0xff]
  %v28 = vld [vmem:[%s0 + $0x70] sm:$0xff]
  %v29 = vld [vmem:[%s0 + $0x78] sm:$0xff]
  %v30 = vld [vmem:[%s0 + $0x80] sm:$0xff]
  %v31 = vld [vmem:[%s0 + $0x88] sm:$0xff]
  %v32 = vld [vmem:[%s0 + $0x90] sm:$0xff]
  %v33 = vld [vmem:[%s0 + $0x98] sm:$0xff]
  %v34 = vld [vmem:[%s0 + $0xa0] sm:$0xff]
  %v35 = vld [vmem:[%s0 + $0xa8] sm:$0xff]
  %v36 = vld [vmem:[%s0 + $0xb0] sm:$0xff]
  %v37 = vld [vmem:[%s0 + $0xb8] sm:$0xff]
  %v38 = vld [vmem:[%s0 + $0xc0] sm:$0xff]
  %v39 = vld [vmem:[%s0 + $0xc8] sm:$0xff]
  %v40 = vld [vmem:[%s1] sm:$0xf]
  %v41 = vld [vmem:[%s1 + $0x4] sm:$0xf]
  %v42 = vld [vmem:[%s1 + $0x8] sm:$0xf]
  %v43 = vld [vmem:[%s1 + $0xc] sm:$0xf]
  %v44 = vld [vmem:[%s1 + $0x10] sm:$0xf]
  %v45 = vld [vmem:[%s1 + $0x14] sm:$0xf]
  %v46 = vld [vmem:[%s1 + $0x18] sm:$0xf]
  %v47 = vld [vmem:[%s1 + $0x1c] sm:$0xf]
  %v48 = vld [vmem:[%s1 + $0x20] sm:$0xf]
  %v49 = vld [vmem:[%s1 + $0x24] sm:$0xf]
  %v50 = vld [vmem:[%s1 + $0x28] sm:$0xf]
  %v51 = vld [vmem:[%s1 + $0x2c] sm:$0xf]
  %v52 = vld [vmem:[%s1 + $0x30] sm:$0xf]
  %v53 = vld [vmem:[%s1 + $0x34] sm:$0xf]
  %v54 = vld [vmem:[%s1 + $0x38] sm:$0xf]
  %v55 = vld [vmem:[%s1 + $0x3c] sm:$0xf]
  %v56 = vld [vmem:[%s1 + $0x40] sm:$0xf]
  %v57 = vld [vmem:[%s1 + $0x44] sm:$0xf]
  %v58 = vld [vmem:[%s1 + $0x48] sm:$0xf]
  %v59 = vld [vmem:[%s1 + $0x4c] sm:$0xf]
  %v60 = vld [vmem:[%s1 + $0x50] sm:$0xf]
  %v61 = vld [vmem:[%s1 + $0x54] sm:$0xf]
  %v62 = vld [vmem:[%s1 + $0x58] sm:$0xf]
  %v63 = vld [vmem:[%s1 + $0x5c] sm:$0xf]
  %v64 = vld [vmem:[%s1 + $0x60] sm:$0xf]
  %v65 = vld [vmem:[%s1 + $0x64] sm:$0xf]
  %v66 = vld [vmem:[%s1 + $0x68] sm:$0xf]
  %v67 = vld [vmem:[%s1 + $0x6c] sm:$0xf]
  %v68 = vld [vmem:[%s1 + $0x70] sm:$0xf]
  %v69 = vld [vmem:[%s1 + $0x74] sm:$0xf]
  %v70 = vld [vmem:[%s1 + $0x78] sm:$0xf]
  %v71 = vld [vmem:[%s1 + $0x7c] sm:$0xf]
  %v72 = vld [vmem:[%s1 + $0x80] sm:$0xf]
  %v73 = vld [vmem:[%s1 + $0x84] sm:$0xf]
  %v74 = vld [vmem:[%s1 + $0x88] sm:$0xf]
  %v75 = vld [vmem:[%s1 + $0x8c] sm:$0xf]
  %v76 = vld [vmem:[%s1 + $0x90] sm:$0xf]
  %v77 = vld [vmem:[%s1 + $0x94] sm:$0xf]
  %v78 = vld [vmem:[%s1 + $0x98] sm:$0xf]
  %v79 = vld [vmem:[%s1 + $0x9c] sm:$0xf]
  %v80 = vld [vmem:[%s1 + $0xa0] sm:$0xf]
  %v81 = vld [vmem:[%s1 + $0xa4] sm:$0xf]
  %v82 = vld [vmem:[%s1 + $0xa8] sm:$0xf]
  %v83 = vld [vmem:[%s1 + $0xac] sm:$0xf]
  %v84 = vld [vmem:[%s1 + $0xb0] sm:$0xf]
  %v85 = vld [vmem:[%s1 + $0xb4] sm:$0xf]
  %v86 = vld [vmem:[%s1 + $0xb8] sm:$0xf]
  %v87 = vld [vmem:[%s1 + $0xbc] sm:$0xf]
  %v88 = vld [vmem:[%s1 + $0xc0] sm:$0xf]
  %v89 = vld [vmem:[%s1 + $0xc4] sm:$0xf]
  %v90 = vld [vmem:[%s1 + $0xc8] sm:$0xf]
  %v91 = vld [vmem:[%s1 + $0xcc] sm:$0xf]
  %v92 = vld [vmem:[%s1 + $0xd0] sm:$0xf]
  %v93 = vld [vmem:[%s1 + $0xd4] sm:$0xf]
  %v94 = vld [vmem:[%s1 + $0xd8] sm:$0xf]
  %v95 = vld [vmem:[%s1 + $0xdc] sm:$0xf]
  %v96 = vld [vmem:[%s1 + $0xe0] sm:$0xf]
  %v97 = vld [vmem:[%s1 + $0xe4] sm:$0xf]
  %v98 = vld [vmem:[%s1 + $0xe8] sm:$0xf]
  %v99 = vld [vmem:[%s1 + $0xec] sm:$0xf]
  %v100 = vld [vmem:[%s1 + $0xf0] sm:$0xf]
  %v101 = vld [vmem:[%s1 + $0xf4] sm:$0xf]
  %v102 = vld [vmem:[%s1 + $0xf8] sm:$0xf]
  %v103 = vld [vmem:[%s1 + $0xfc] sm:$0xf]
  %v104 = vld [vmem:[%s2] sm:$0x1]
  %v106 = vperm.slane %v104, 0
  %v134 = vunpack.c.l.b16 %v14
  %v135 = vunpack.c.h.b16 %v14
  %v136 = vunpack.c.l.b16 %v15
  %v137 = vunpack.c.h.b16 %v15
  %v138 = vunpack.c.l.b16 %v16
  %v139 = vunpack.c.h.b16 %v16
  %v140 = vunpack.c.l.b16 %v17
  %v141 = vunpack.c.h.b16 %v17
  %v142 = vunpack.c.l.b16 %v18
  %v143 = vunpack.c.h.b16 %v18
  %v144 = vunpack.c.l.b16 %v19
  %v145 = vunpack.c.h.b16 %v19
  %v146 = vunpack.c.l.b16 %v20
  %v147 = vunpack.c.h.b16 %v20
  %v148 = vunpack.c.l.b16 %v21
  %v149 = vunpack.c.h.b16 %v21
  %v150 = vunpack.c.l.b16 %v22
  %v151 = vunpack.c.h.b16 %v22
  %v152 = vunpack.c.l.b16 %v23
  %v153 = vunpack.c.h.b16 %v23
  %v154 = vunpack.c.l.b16 %v24
  %v155 = vunpack.c.h.b16 %v24
  %v156 = vunpack.c.l.b16 %v25
  %v157 = vunpack.c.h.b16 %v25
  %v158 = vunpack.c.l.b16 %v26
  %v159 = vunpack.c.h.b16 %v26
  %v160 = vunpack.c.l.b16 %v27
  %v161 = vunpack.c.h.b16 %v27
  %v162 = vunpack.c.l.b16 %v28
  %v163 = vunpack.c.h.b16 %v28
  %v164 = vunpack.c.l.b16 %v29
  %v165 = vunpack.c.h.b16 %v29
  %v166 = vunpack.c.l.b16 %v30
  %v167 = vunpack.c.h.b16 %v30
  %v168 = vunpack.c.l.b16 %v31
  %v169 = vunpack.c.h.b16 %v31
  %v170 = vunpack.c.l.b16 %v32
  %v171 = vunpack.c.h.b16 %v32
  %v172 = vunpack.c.l.b16 %v33
  %v173 = vunpack.c.h.b16 %v33
  %v174 = vunpack.c.l.b16 %v34
  %v175 = vunpack.c.h.b16 %v34
  %v176 = vunpack.c.l.b16 %v35
  %v177 = vunpack.c.h.b16 %v35
  %v178 = vunpack.c.l.b16 %v36
  %v179 = vunpack.c.h.b16 %v36
  %v180 = vunpack.c.l.b16 %v37
  %v181 = vunpack.c.h.b16 %v37
  %v182 = vunpack.c.l.b16 %v38
  %v183 = vunpack.c.h.b16 %v38
  %v184 = vunpack.c.l.b16 %v39
  %v185 = vunpack.c.h.b16 %v39
  %v186 = vpack.c.b16 %v138, %v134
  %v187 = vpack.c.b16 %v139, %v135
  %v188 = vpack.c.b16 %v140, %v136
  %v189 = vpack.c.b16 %v141, %v137
  %v190 = vpack.c.b16 %v146, %v142
  %v191 = vpack.c.b16 %v147, %v143
  %v192 = vpack.c.b16 %v148, %v144
  %v193 = vpack.c.b16 %v149, %v145
  %v194 = vpack.c.b16 %v154, %v150
  %v195 = vpack.c.b16 %v155, %v151
  %v196 = vpack.c.b16 %v156, %v152
  %v197 = vpack.c.b16 %v157, %v153
  %v198 = vpack.c.b16 %v162, %v158
  %v199 = vpack.c.b16 %v163, %v159
  %v200 = vpack.c.b16 %v164, %v160
  %v201 = vpack.c.b16 %v165, %v161
  %v202 = vpack.c.b16 %v170, %v166
  %v203 = vpack.c.b16 %v171, %v167
  %v204 = vpack.c.b16 %v172, %v168
  %v205 = vpack.c.b16 %v173, %v169
  %v206 = vpack.c.b16 %v178, %v174
  %v207 = vpack.c.b16 %v179, %v175
  %v208 = vpack.c.b16 %v180, %v176
  %v209 = vpack.c.b16 %v181, %v177
  %v210 = vpack.c.b16 %v182, %v182
  %v211 = vpack.c.b16 %v183, %v183
  %v212 = vpack.c.b16 %v184, %v184
  %v213 = vpack.c.b16 %v185, %v185
  %v306 = vunpack.c.l.b16 %v40
  %v307 = vunpack.c.l.b16 %v41
  %v308 = vunpack.c.l.b16 %v42
  %v309 = vunpack.c.l.b16 %v43
  %v310 = vunpack.c.l.b16 %v44
  %v311 = vunpack.c.l.b16 %v45
  %v312 = vunpack.c.l.b16 %v46
  %v313 = vunpack.c.l.b16 %v47
  %v314 = vunpack.c.l.b16 %v48
  %v315 = vunpack.c.l.b16 %v49
  %v316 = vunpack.c.l.b16 %v50
  %v317 = vunpack.c.l.b16 %v51
  %v318 = vunpack.c.l.b16 %v52
  %v319 = vunpack.c.l.b16 %v53
  %v320 = vunpack.c.l.b16 %v54
  %v321 = vunpack.c.l.b16 %v55
  %v322 = vunpack.c.l.b16 %v56
  %v323 = vunpack.c.l.b16 %v57
  %v324 = vunpack.c.l.b16 %v58
  %v325 = vunpack.c.l.b16 %v59
  %v326 = vunpack.c.l.b16 %v60
  %v327 = vunpack.c.l.b16 %v61
  %v328 = vunpack.c.l.b16 %v62
  %v329 = vunpack.c.l.b16 %v63
  %v330 = vunpack.c.l.b16 %v64
  %v331 = vunpack.c.l.b16 %v65
  %v332 = vunpack.c.l.b16 %v66
  %v333 = vunpack.c.l.b16 %v67
  %v334 = vunpack.c.l.b16 %v68
  %v335 = vunpack.c.l.b16 %v69
  %v336 = vunpack.c.l.b16 %v70
  %v337 = vunpack.c.l.b16 %v71
  %v338 = vunpack.c.l.b16 %v72
  %v339 = vunpack.c.l.b16 %v73
  %v340 = vunpack.c.l.b16 %v74
  %v341 = vunpack.c.l.b16 %v75
  %v342 = vunpack.c.l.b16 %v76
  %v343 = vunpack.c.l.b16 %v77
  %v344 = vunpack.c.l.b16 %v78
  %v345 = vunpack.c.l.b16 %v79
  %v346 = vunpack.c.l.b16 %v80
  %v347 = vunpack.c.l.b16 %v81
  %v348 = vunpack.c.l.b16 %v82
  %v349 = vunpack.c.l.b16 %v83
  %v350 = vunpack.c.l.b16 %v84
  %v351 = vunpack.c.l.b16 %v85
  %v352 = vunpack.c.l.b16 %v86
  %v353 = vunpack.c.l.b16 %v87
  %v354 = vunpack.c.l.b16 %v88
  %v355 = vunpack.c.l.b16 %v89
  %v356 = vunpack.c.l.b16 %v90
  %v357 = vunpack.c.l.b16 %v91
  %v358 = vunpack.c.l.b16 %v92
  %v359 = vunpack.c.l.b16 %v93
  %v360 = vunpack.c.l.b16 %v94
  %v361 = vunpack.c.l.b16 %v95
  %v362 = vunpack.c.l.b16 %v96
  %v363 = vunpack.c.l.b16 %v97
  %v364 = vunpack.c.l.b16 %v98
  %v365 = vunpack.c.l.b16 %v99
  %v366 = vunpack.c.l.b16 %v100
  %v367 = vunpack.c.l.b16 %v101
  %v368 = vunpack.c.l.b16 %v102
  %v369 = vunpack.c.l.b16 %v103
  %v370 = vpack.c.b16 %v307, %v306
  %v371 = vpack.c.b16 %v309, %v308
  %v372 = vpack.c.b16 %v311, %v310
  %v373 = vpack.c.b16 %v313, %v312
  %v374 = vpack.c.b16 %v315, %v314
  %v375 = vpack.c.b16 %v317, %v316
  %v376 = vpack.c.b16 %v319, %v318
  %v377 = vpack.c.b16 %v321, %v320
  %v378 = vpack.c.b16 %v323, %v322
  %v379 = vpack.c.b16 %v325, %v324
  %v380 = vpack.c.b16 %v327, %v326
  %v381 = vpack.c.b16 %v329, %v328
  %v382 = vpack.c.b16 %v331, %v330
  %v383 = vpack.c.b16 %v333, %v332
  %v384 = vpack.c.b16 %v335, %v334
  %v385 = vpack.c.b16 %v337, %v336
  %v386 = vpack.c.b16 %v339, %v338
  %v387 = vpack.c.b16 %v341, %v340
  %v388 = vpack.c.b16 %v343, %v342
  %v389 = vpack.c.b16 %v345, %v344
  %v390 = vpack.c.b16 %v347, %v346
  %v391 = vpack.c.b16 %v349, %v348
  %v392 = vpack.c.b16 %v351, %v350
  %v393 = vpack.c.b16 %v353, %v352
  %v394 = vpack.c.b16 %v355, %v354
  %v395 = vpack.c.b16 %v357, %v356
  %v396 = vpack.c.b16 %v359, %v358
  %v397 = vpack.c.b16 %v361, %v360
  %v398 = vpack.c.b16 %v363, %v362
  %v399 = vpack.c.b16 %v365, %v364
  %v400 = vpack.c.b16 %v367, %v366
  %v401 = vpack.c.b16 %v369, %v368
  %434 = vmatpush.bf16.msra.mxu0 %v377
  %435 = vmatpush.bf16.msra.mxu0 %v376
  %436 = vmatpush.bf16.msra.mxu0 %v375
  %437 = vmatpush.bf16.msra.mxu0 %v374
  %438 = vmatpush.bf16.msra.mxu0 %v373
  %439 = vmatpush.bf16.msra.mxu0 %v372
  %440 = vmatpush.bf16.msra.mxu0 %v371
  %441 = vmatpush.bf16.msra.mxu0 %v370
  %442 = vmatmul.bf16.gmra.mxu0 %v186
  %v443 = vpop.f32.mrf.mxu0
  %v444 = vadd.f32 %v106, %v443
  %v445 = vpop.f32.mrf.mxu0
  %v446 = vadd.f32 %v106, %v445
  %447 = vmatmul.bf16.gmra.mxu0 %v190
  %v448 = vpop.f32.mrf.mxu0
  %v449 = vadd.f32 %v106, %v448
  %v450 = vpop.f32.mrf.mxu0
  %v451 = vadd.f32 %v106, %v450
  %452 = vmatmul.bf16.gmra.mxu0 %v194
  %v453 = vpop.f32.mrf.mxu0
  %v454 = vadd.f32 %v106, %v453
  %v455 = vpop.f32.mrf.mxu0
  %v456 = vadd.f32 %v106, %v455
  %457 = vmatmul.bf16.gmra.mxu0 %v198
  %v458 = vpop.f32.mrf.mxu0
  %v459 = vadd.f32 %v106, %v458
  %v460 = vpop.f32.mrf.mxu0
  %v461 = vadd.f32 %v106, %v460
  %462 = vmatmul.bf16.gmra.mxu0 %v202
  %v463 = vpop.f32.mrf.mxu0
  %v464 = vadd.f32 %v106, %v463
  %v465 = vpop.f32.mrf.mxu0
  %v466 = vadd.f32 %v106, %v465
  %467 = vmatmul.bf16.gmra.mxu0 %v206
  %v468 = vpop.f32.mrf.mxu0
  %v469 = vadd.f32 %v106, %v468
  %v470 = vpop.f32.mrf.mxu0
  %v471 = vadd.f32 %v106, %v470
  %472 = vmatmul.bf16.gmra.mxu0 %v210
  %v473 = vpop.f32.mrf.mxu0
  %v474 = vadd.f32 %v106, %v473
  %v475 = vpop.f32.mrf.mxu0
  %476 = vdwg.mxu0
  %477 = vmatpush.bf16.msra.mxu0 %v385
  %478 = vmatpush.bf16.msra.mxu0 %v384
  %479 = vmatpush.bf16.msra.mxu0 %v383
  %480 = vmatpush.bf16.msra.mxu0 %v382
  %481 = vmatpush.bf16.msra.mxu0 %v381
  %482 = vmatpush.bf16.msra.mxu0 %v380
  %483 = vmatpush.bf16.msra.mxu0 %v379
  %484 = vmatpush.bf16.msra.mxu0 %v378
  %485 = vmatmul.bf16.gmra.mxu0 %v187
  %v486 = vpop.f32.mrf.mxu0
  %v487 = vadd.f32 %v444, %v486
  %v488 = vpop.f32.mrf.mxu0
  %v489 = vadd.f32 %v446, %v488
  %490 = vmatmul.bf16.gmra.mxu0 %v191
  %v491 = vpop.f32.mrf.mxu0
  %v492 = vadd.f32 %v449, %v491
  %v493 = vpop.f32.mrf.mxu0
  %v494 = vadd.f32 %v451, %v493
  %495 = vmatmul.bf16.gmra.mxu0 %v195
  %v496 = vpop.f32.mrf.mxu0
  %v497 = vadd.f32 %v454, %v496
  %v498 = vpop.f32.mrf.mxu0
  %v499 = vadd.f32 %v456, %v498
  %500 = vmatmul.bf16.gmra.mxu0 %v199
  %v501 = vpop.f32.mrf.mxu0
  %v502 = vadd.f32 %v459, %v501
  %v503 = vpop.f32.mrf.mxu0
  %v504 = vadd.f32 %v461, %v503
  %505 = vmatmul.bf16.gmra.mxu0 %v203
  %v506 = vpop.f32.mrf.mxu0
  %v507 = vadd.f32 %v464, %v506
  %v508 = vpop.f32.mrf.mxu0
  %v509 = vadd.f32 %v466, %v508
  %510 = vmatmul.bf16.gmra.mxu0 %v207
  %v511 = vpop.f32.mrf.mxu0
  %v512 = vadd.f32 %v469, %v511
  %v513 = vpop.f32.mrf.mxu0
  %v514 = vadd.f32 %v471, %v513
  %515 = vmatmul.bf16.gmra.mxu0 %v211
  %v516 = vpop.f32.mrf.mxu0
  %v517 = vadd.f32 %v474, %v516
  %v518 = vpop.f32.mrf.mxu0
  %519 = vdwg.mxu0
  %520 = vmatpush.bf16.msra.mxu0 %v393
  %521 = vmatpush.bf16.msra.mxu0 %v392
  %522 = vmatpush.bf16.msra.mxu0 %v391
  %523 = vmatpush.bf16.msra.mxu0 %v390
  %524 = vmatpush.bf16.msra.mxu0 %v389
  %525 = vmatpush.bf16.msra.mxu0 %v388
  %526 = vmatpush.bf16.msra.mxu0 %v387
  %527 = vmatpush.bf16.msra.mxu0 %v386
  %528 = vmatmul.bf16.gmra.mxu0 %v188
  %v529 = vpop.f32.mrf.mxu0
  %v530 = vadd.f32 %v487, %v529
  %v531 = vpop.f32.mrf.mxu0
  %v532 = vadd.f32 %v489, %v531
  %533 = vmatmul.bf16.gmra.mxu0 %v192
  %v534 = vpop.f32.mrf.mxu0
  %v535 = vadd.f32 %v492, %v534
  %v536 = vpop.f32.mrf.mxu0
  %v537 = vadd.f32 %v494, %v536
  %538 = vmatmul.bf16.gmra.mxu0 %v196
  %v539 = vpop.f32.mrf.mxu0
  %v540 = vadd.f32 %v497, %v539
  %v541 = vpop.f32.mrf.mxu0
  %v542 = vadd.f32 %v499, %v541
  %543 = vmatmul.bf16.gmra.mxu0 %v200
  %v544 = vpop.f32.mrf.mxu0
  %v545 = vadd.f32 %v502, %v544
  %v546 = vpop.f32.mrf.mxu0
  %v547 = vadd.f32 %v504, %v546
  %548 = vmatmul.bf16.gmra.mxu0 %v204
  %v549 = vpop.f32.mrf.mxu0
  %v550 = vadd.f32 %v507, %v549
  %v551 = vpop.f32.mrf.mxu0
  %v552 = vadd.f32 %v509, %v551
  %553 = vmatmul.bf16.gmra.mxu0 %v208
  %v554 = vpop.f32.mrf.mxu0
  %v555 = vadd.f32 %v512, %v554
  %v556 = vpop.f32.mrf.mxu0
  %v557 = vadd.f32 %v514, %v556
  %558 = vmatmul.bf16.gmra.mxu0 %v212
  %v559 = vpop.f32.mrf.mxu0
  %v560 = vadd.f32 %v517, %v559
  %v561 = vpop.f32.mrf.mxu0
  %562 = vdwg.mxu0
  %563 = vmatpush.bf16.msra.mxu0 %v401
  %564 = vmatpush.bf16.msra.mxu0 %v400
  %565 = vmatpush.bf16.msra.mxu0 %v399
  %566 = vmatpush.bf16.msra.mxu0 %v398
  %567 = vmatpush.bf16.msra.mxu0 %v397
  %568 = vmatpush.bf16.msra.mxu0 %v396
  %569 = vmatpush.bf16.msra.mxu0 %v395
  %570 = vmatpush.bf16.msra.mxu0 %v394
  %571 = vmatmul.bf16.gmra.mxu0 %v189
  %v572 = vpop.f32.mrf.mxu0
  %v573 = vadd.f32 %v530, %v572
  %v574 = vpop.f32.mrf.mxu0
  %v575 = vadd.f32 %v532, %v574
  %576 = vmatmul.bf16.gmra.mxu0 %v193
  %v577 = vpop.f32.mrf.mxu0
  %v578 = vadd.f32 %v535, %v577
  %v579 = vpop.f32.mrf.mxu0
  %v580 = vadd.f32 %v537, %v579
  %581 = vmatmul.bf16.gmra.mxu0 %v197
  %v582 = vpop.f32.mrf.mxu0
  %v583 = vadd.f32 %v540, %v582
  %v584 = vpop.f32.mrf.mxu0
  %v585 = vadd.f32 %v542, %v584
  %586 = vmatmul.bf16.gmra.mxu0 %v201
  %v587 = vpop.f32.mrf.mxu0
  %v588 = vadd.f32 %v545, %v587
  %v589 = vpop.f32.mrf.mxu0
  %v590 = vadd.f32 %v547, %v589
  %591 = vmatmul.bf16.gmra.mxu0 %v205
  %v592 = vpop.f32.mrf.mxu0
  %v593 = vadd.f32 %v550, %v592
  %v594 = vpop.f32.mrf.mxu0
  %v595 = vadd.f32 %v552, %v594
  %596 = vmatmul.bf16.gmra.mxu0 %v209
  %v597 = vpop.f32.mrf.mxu0
  %v598 = vadd.f32 %v555, %v597
  %v599 = vpop.f32.mrf.mxu0
  %v600 = vadd.f32 %v557, %v599
  %601 = vmatmul.bf16.gmra.mxu0 %v213
  %v602 = vpop.f32.mrf.mxu0
  %v603 = vadd.f32 %v560, %v602
  %v604 = vpop.f32.mrf.mxu0
  %605 = vdwg.mxu0
  %vm606 = vcmp.ge.f32.partialorder %v573, 0.0
  %vm607 = vcmp.ge.f32.partialorder %v575, 0.0
  %vm608 = vcmp.ge.f32.partialorder %v578, 0.0
  %vm609 = vcmp.ge.f32.partialorder %v580, 0.0
  %vm610 = vcmp.ge.f32.partialorder %v583, 0.0
  %vm611 = vcmp.ge.f32.partialorder %v585, 0.0
  %vm612 = vcmp.ge.f32.partialorder %v588, 0.0
  %vm613 = vcmp.ge.f32.partialorder %v590, 0.0
  %vm614 = vcmp.ge.f32.partialorder %v593, 0.0
  %vm615 = vcmp.ge.f32.partialorder %v595, 0.0
  %vm616 = vcmp.ge.f32.partialorder %v598, 0.0
  %vm617 = vcmp.ge.f32.partialorder %v600, 0.0
  %vm618 = vcmp.ge.f32.partialorder %v603, 0.0
  %v619 = vmul.f32 %v573, 0.01
  %v620 = vmul.f32 %v575, 0.01
  %v621 = vmul.f32 %v578, 0.01
  %v622 = vmul.f32 %v580, 0.01
  %v623 = vmul.f32 %v583, 0.01
  %v624 = vmul.f32 %v585, 0.01
  %v625 = vmul.f32 %v588, 0.01
  %v626 = vmul.f32 %v590, 0.01
  %v627 = vmul.f32 %v593, 0.01
  %v628 = vmul.f32 %v595, 0.01
  %v629 = vmul.f32 %v598, 0.01
  %v630 = vmul.f32 %v600, 0.01
  %v631 = vmul.f32 %v603, 0.01
  %v632 = vsel %vm606, %v573, %v619
  %v633 = vsel %vm607, %v575, %v620
  %v634 = vsel %vm608, %v578, %v621
  %v635 = vsel %vm609, %v580, %v622
  %v636 = vsel %vm610, %v583, %v623
  %v637 = vsel %vm611, %v585, %v624
  %v638 = vsel %vm612, %v588, %v625
  %v639 = vsel %vm613, %v590, %v626
  %v640 = vsel %vm614, %v593, %v627
  %v641 = vsel %vm615, %v595, %v628
  %v642 = vsel %vm616, %v598, %v629
  %v643 = vsel %vm617, %v600, %v630
  %v644 = vsel %vm618, %v603, %v631
  %645 = vst [vmem:[%s3] sm:$0xff] %v632
  %646 = vst [vmem:[%s3 + $0x8] sm:$0xff] %v633
  %647 = vst [vmem:[%s3 + $0x10] sm:$0xff] %v634
  %648 = vst [vmem:[%s3 + $0x18] sm:$0xff] %v635
  %649 = vst [vmem:[%s3 + $0x20] sm:$0xff] %v636
  %650 = vst [vmem:[%s3 + $0x28] sm:$0xff] %v637
  %651 = vst [vmem:[%s3 + $0x30] sm:$0xff] %v638
  %652 = vst [vmem:[%s3 + $0x38] sm:$0xff] %v639
  %653 = vst [vmem:[%s3 + $0x40] sm:$0xff] %v640
  %654 = vst [vmem:[%s3 + $0x48] sm:$0xff] %v641
  %655 = vst [vmem:[%s3 + $0x50] sm:$0xff] %v642
  %656 = vst [vmem:[%s3 + $0x58] sm:$0xff] %v643
  %657 = vst [vmem:[%s3 + $0x60] sm:$0xff] %v644
  // Predicated region
  $region14: #{rnd_forward.6} parent=0 // pred_check
    _
  $region15: #{rnd_forward.6} parent=0 // pred_check_branch
    %659 = sbr.rel (0) target = $region17
  $region16: #{rnd_forward.6} parent=0 // pred_region
    _
  $region17: #{rnd_forward.6} parent=0 // pred_fallthru
    _
  // Predicated region
  $region18: #{rnd_forward.6} parent=0 // pred_check
    _
  $region19: #{rnd_forward.6} parent=0 // pred_check_branch
    %661 = sbr.rel (0) target = $region21
  $region20: #{rnd_forward.6} parent=0 // pred_region
    _
  $region21: #{rnd_forward.6} parent=0 // pred_fallthru
    _

// kernel: rnd_forward.7
$region0: #{rnd_forward.7}
  #allocation0 [shape = 'u32[]', space=smem, size = 0x4, offset = 0x4, fixed_abs, tag = 'smem constant byte address 0x4 - core index']
  #allocation1 [shape = 'u32[72,128]{1,0:T(1,128)}', space=vmem, size = 0x9000, scoped, tag = 'internal scratch']
  #allocation2 [shape = 'f32[8,512]{1,0:T(8,128)}', space=vmem, size = 0x4000, scoped, tag = 'scratch operand']
  %s0 = inlined_call_operand.vmem [shape: bf16[2,8,3200], index: 0, kind: input, shape index: {}]
  %s1 = inlined_call_operand.vmem [shape: bf16[2,3200,512], index: 1, kind: input, shape index: {}]
  %s2 = inlined_call_operand.vmem [shape: f32[2,1,512], index: 2, kind: input, shape index: {}]
  %s3 = inlined_call_operand.vmem [shape: bf16[512,512], index: 3, kind: input, shape index: {}]
  %s4 = inlined_call_operand.vmem [shape: f32[1,512], index: 4, kind: input, shape index: {}]
  %s5 = inlined_call_operand.vmem [shape: bf16[512,512], index: 5, kind: input, shape index: {}]
  %s6 = inlined_call_operand.vmem [shape: f32[1,512], index: 6, kind: input, shape index: {}]
  %s7 = inlined_call_operand.vmem [shape: f32[2,8,512], index: 7, kind: output, shape index: {}]
  %s8 = sld [smem:[#allocation0]]
  $region77: #{rnd_forward.7} parent=0
    _
  %s10 = ssub.s32 1, %s8
  %s11 = scalar_select 0, %s10, %s8
  loop: start=0, step=1, limit=12
  $region2: #{rnd_forward.7} parent=0 // loop_pre_header
    _
  $region3: #{rnd_forward.7} parent=0 // loop_header
    %s13 = sphi 0, %s17
    %p14 = scmp.ge.s32.totalorder %s13, 12
    %s20 = sphi 0, %s32
    %s21 = sphi 0, %s28
    %s22 = sphi 0, %s20
    %s23 = sphi 0, %s21
    %s24 = sphi 0, %s22
    %s25 = sphi 0, %s23
    %s37 = sphi 0, %s39
    %s40 = sphi 0, %s37
    %s41 = sphi 0, %s40
    %s57 = sphi 0, %s41
    %s65 = sphi 0, %s67
    %s68 = sphi 0, %s65
    %s69 = sphi 0, %s68
    %s85 = sphi 0, %s69
    %s91 = sphi 0, %s93
    %s94 = sphi 0, %s91
    %s95 = sphi 0, %s94
    %s111 = sphi 0, %s95
    %s115 = sphi 0, %s115
    %s117 = sphi 0, %s115
    %s118 = sphi 0, %s117
    %s132 = sphi 0, %s118
    %s136 = sphi 0, %s136
    %s138 = sphi 0, %s136
    %s139 = sphi 0, %s138
    %s153 = sphi 0, %s139
    %s157 = sphi 0, %s157
    %s159 = sphi 0, %s157
    %s160 = sphi 0, %s159
    %s174 = sphi 0, %s160
    %s178 = sphi 0, %s178
    %s180 = sphi 0, %s178
    %s181 = sphi 0, %s180
    %s195 = sphi 0, %s181
    %s201 = sphi 0, %s203
    %s204 = sphi 0, %s201
    %s205 = sphi 0, %s204
    %s221 = sphi 0, %s205
  $region4: #{rnd_forward.7} parent=0 // loop_header_branch
    %16 = sbr.rel (%p14) target = $region8
  $region5: #{rnd_forward.7} parent=0 // loop_body
    %s18 = ssub.s32 %s13, 1
    %s19 = ssub.s32 %s13, 2
    %s26 = sadd.s32 1, %s21
    %p27 = scmp.ge.s32.totalorder %s26, 5
    %s28 = scalar_select %p27, 0, %s26
    %s29 = sadd.s32 1, %s20
    %s30 = scalar_select %p27, %s29, %s20
    %p31 = scmp.ge.s32.totalorder %s30, 2
    %s32 = scalar_select %p31, 0, %s30
    %s33 = ssub.s32 %s20, %s32
    %s34 = ssub.s32 %s21, %s28
    %s35 = sor.u32 %s33, %s34
    %p36 = scmp.eq.s32.totalorder %s35, 0
    %s38 = sadd.s32 %s37, 1
    %s39 = scalar_select %p36, %s37, %s38
    %p42 = pneg %p36
    %p43 = scmp.eq.s32.totalorder %s13, 9
    %p44 = por %p42, %p43
    %p45 = scmp.ne.s32.totalorder %s37, %s40
    %p46 = scmp.eq.s32.totalorder %s13, 0
    %p47 = por %p45, %p46
    %p48 = scmp.ne.s32.totalorder %s37, %s40
    %p49 = scmp.eq.s32.totalorder %s18, 9
    %p50 = por %p48, %p49
    %p51 = scmp.ne.s32.totalorder %s40, %s41
    %p52 = scmp.eq.s32.totalorder %s18, 0
    %p53 = por %p51, %p52
    %p54 = scmp.ne.s32.totalorder %s40, %s41
    %p55 = scmp.eq.s32.totalorder %s19, 9
    %p56 = por %p54, %p55
    %p58 = scmp.ne.s32.totalorder %s41, %s57
    %p59 = scmp.eq.s32.totalorder %s19, 0
    %p60 = por %p58, %p59
    %s61 = ssub.s32 %s20, %s32
    %s62 = ssub.s32 %s21, %s28
    %s63 = sor.u32 %s61, %s62
    %p64 = scmp.eq.s32.totalorder %s63, 0
    %s66 = sadd.s32 %s65, 1
    %s67 = scalar_select %p64, %s65, %s66
    %p70 = pneg %p64
    %p71 = scmp.eq.s32.totalorder %s13, 9
    %p72 = por %p70, %p71
    %p73 = scmp.ne.s32.totalorder %s65, %s68
    %p74 = scmp.eq.s32.totalorder %s13, 0
    %p75 = por %p73, %p74
    %p76 = scmp.ne.s32.totalorder %s65, %s68
    %p77 = scmp.eq.s32.totalorder %s18, 9
    %p78 = por %p76, %p77
    %p79 = scmp.ne.s32.totalorder %s68, %s69
    %p80 = scmp.eq.s32.totalorder %s18, 0
    %p81 = por %p79, %p80
    %p82 = scmp.ne.s32.totalorder %s68, %s69
    %p83 = scmp.eq.s32.totalorder %s19, 9
    %p84 = por %p82, %p83
    %p86 = scmp.ne.s32.totalorder %s69, %s85
    %p87 = scmp.eq.s32.totalorder %s19, 0
    %p88 = por %p86, %p87
    %s89 = ssub.s32 %s20, %s32
    %p90 = scmp.eq.s32.totalorder %s89, 0
    %s92 = sadd.s32 %s91, 1
    %s93 = scalar_select %p90, %s91, %s92
    %p96 = pneg %p90
    %p97 = scmp.eq.s32.totalorder %s13, 9
    %p98 = por %p96, %p97
    %p99 = scmp.ne.s32.totalorder %s91, %s94
    %p100 = scmp.eq.s32.totalorder %s13, 0
    %p101 = por %p99, %p100
    %p102 = scmp.ne.s32.totalorder %s91, %s94
    %p103 = scmp.eq.s32.totalorder %s18, 9
    %p104 = por %p102, %p103
    %p105 = scmp.ne.s32.totalorder %s94, %s95
    %p106 = scmp.eq.s32.totalorder %s18, 0
    %p107 = por %p105, %p106
    %p108 = scmp.ne.s32.totalorder %s94, %s95
    %p109 = scmp.eq.s32.totalorder %s19, 9
    %p110 = por %p108, %p109
    %p112 = scmp.ne.s32.totalorder %s95, %s111
    %p113 = scmp.eq.s32.totalorder %s19, 0
    %p114 = por %p112, %p113
    %s116 = sadd.s32 %s115, 1
    %p119 = scmp.eq.s32.totalorder %s13, 9
    %p120 = scmp.ne.s32.totalorder %s115, %s117
    %p121 = scmp.eq.s32.totalorder %s13, 0
    %p122 = por %p120, %p121
    %p123 = scmp.ne.s32.totalorder %s115, %s117
    %p124 = scmp.eq.s32.totalorder %s18, 9
    %p125 = por %p123, %p124
    %p126 = scmp.ne.s32.totalorder %s117, %s118
    %p127 = scmp.eq.s32.totalorder %s18, 0
    %p128 = por %p126, %p127
    %p129 = scmp.ne.s32.totalorder %s117, %s118
    %p130 = scmp.eq.s32.totalorder %s19, 9
    %p131 = por %p129, %p130
    %p133 = scmp.ne.s32.totalorder %s118, %s132
    %p134 = scmp.eq.s32.totalorder %s19, 0
    %p135 = por %p133, %p134
    %s137 = sadd.s32 %s136, 1
    %p140 = scmp.eq.s32.totalorder %s13, 9
    %p141 = scmp.ne.s32.totalorder %s136, %s138
    %p142 = scmp.eq.s32.totalorder %s13, 0
    %p143 = por %p141, %p142
    %p144 = scmp.ne.s32.totalorder %s136, %s138
    %p145 = scmp.eq.s32.totalorder %s18, 9
    %p146 = por %p144, %p145
    %p147 = scmp.ne.s32.totalorder %s138, %s139
    %p148 = scmp.eq.s32.totalorder %s18, 0
    %p149 = por %p147, %p148
    %p150 = scmp.ne.s32.totalorder %s138, %s139
    %p151 = scmp.eq.s32.totalorder %s19, 9
    %p152 = por %p150, %p151
    %p154 = scmp.ne.s32.totalorder %s139, %s153
    %p155 = scmp.eq.s32.totalorder %s19, 0
    %p156 = por %p154, %p155
    %s158 = sadd.s32 %s157, 1
    %p161 = scmp.eq.s32.totalorder %s13, 9
    %p162 = scmp.ne.s32.totalorder %s157, %s159
    %p163 = scmp.eq.s32.totalorder %s13, 0
    %p164 = por %p162, %p163
    %p165 = scmp.ne.s32.totalorder %s157, %s159
    %p166 = scmp.eq.s32.totalorder %s18, 9
    %p167 = por %p165, %p166
    %p168 = scmp.ne.s32.totalorder %s159, %s160
    %p169 = scmp.eq.s32.totalorder %s18, 0
    %p170 = por %p168, %p169
    %p171 = scmp.ne.s32.totalorder %s159, %s160
    %p172 = scmp.eq.s32.totalorder %s19, 9
    %p173 = por %p171, %p172
    %p175 = scmp.ne.s32.totalorder %s160, %s174
    %p176 = scmp.eq.s32.totalorder %s19, 0
    %p177 = por %p175, %p176
    %s179 = sadd.s32 %s178, 1
    %p182 = scmp.eq.s32.totalorder %s13, 9
    %p183 = scmp.ne.s32.totalorder %s178, %s180
    %p184 = scmp.eq.s32.totalorder %s13, 0
    %p185 = por %p183, %p184
    %p186 = scmp.ne.s32.totalorder %s178, %s180
    %p187 = scmp.eq.s32.totalorder %s18, 9
    %p188 = por %p186, %p187
    %p189 = scmp.ne.s32.totalorder %s180, %s181
    %p190 = scmp.eq.s32.totalorder %s18, 0
    %p191 = por %p189, %p190
    %p192 = scmp.ne.s32.totalorder %s180, %s181
    %p193 = scmp.eq.s32.totalorder %s19, 9
    %p194 = por %p192, %p193
    %p196 = scmp.ne.s32.totalorder %s181, %s195
    %p197 = scmp.eq.s32.totalorder %s19, 0
    %p198 = por %p196, %p197
    %s199 = ssub.s32 %s20, %s32
    %p200 = scmp.eq.s32.totalorder %s199, 0
    %s202 = sadd.s32 %s201, 1
    %s203 = scalar_select %p200, %s201, %s202
    %p206 = pneg %p200
    %p207 = scmp.eq.s32.totalorder %s13, 9
    %p208 = por %p206, %p207
    %p209 = scmp.ne.s32.totalorder %s201, %s204
    %p210 = scmp.eq.s32.totalorder %s13, 0
    %p211 = por %p209, %p210
    %p212 = scmp.ne.s32.totalorder %s201, %s204
    %p213 = scmp.eq.s32.totalorder %s18, 9
    %p214 = por %p212, %p213
    %p215 = scmp.ne.s32.totalorder %s204, %s205
    %p216 = scmp.eq.s32.totalorder %s18, 0
    %p217 = por %p215, %p216
    %p218 = scmp.ne.s32.totalorder %s204, %s205
    %p219 = scmp.eq.s32.totalorder %s19, 9
    %p220 = por %p218, %p219
    %p222 = scmp.ne.s32.totalorder %s205, %s221
    %p223 = scmp.eq.s32.totalorder %s19, 0
    %p224 = por %p222, %p223
    %p225 = scmp.le.s32.totalorder 1, %s13
    %p226 = scmp.lt.s32.totalorder %s13, 11
    %p227 = pnand %p225, %p226
    %p228 = pneg %p227
    // Predicated region
    $region9: #{rnd_forward.7} parent=5 // pred_check
      _
    $region10: #{rnd_forward.7} parent=5 // pred_check_branch
      %230 = sbr.rel (%p227) target = $region12
    $region11: #{rnd_forward.7} parent=5 // pred_region
      %s231 = ssub.s32 %s13, 1
      // Predicated region
      $region13: #{rnd_forward.7} parent=11 // pred_check
        %p232 = pneg %p128
      $region14: #{rnd_forward.7} parent=11 // pred_check_branch
        %234 = sbr.rel (%p232) target = $region16
      $region15: #{rnd_forward.7} parent=11 // pred_region
        _
      $region16: #{rnd_forward.7} parent=11 // pred_fallthru
        _
      // Predicated region
      $region17: #{rnd_forward.7} parent=11 // pred_check
        %p235 = pneg %p149
      $region18: #{rnd_forward.7} parent=11 // pred_check_branch
        %237 = sbr.rel (%p235) target = $region20
      $region19: #{rnd_forward.7} parent=11 // pred_region
        _
      $region20: #{rnd_forward.7} parent=11 // pred_fallthru
        _
      // Predicated region
      $region21: #{rnd_forward.7} parent=11 // pred_check
        %p238 = pneg %p170
      $region22: #{rnd_forward.7} parent=11 // pred_check_branch
        %240 = sbr.rel (%p238) target = $region24
      $region23: #{rnd_forward.7} parent=11 // pred_region
        _
      $region24: #{rnd_forward.7} parent=11 // pred_fallthru
        _
      // Predicated region
      $region25: #{rnd_forward.7} parent=11 // pred_check
        %p241 = pneg %p191
      $region26: #{rnd_forward.7} parent=11 // pred_check_branch
        %243 = sbr.rel (%p241) target = $region28
      $region27: #{rnd_forward.7} parent=11 // pred_region
        _
      $region28: #{rnd_forward.7} parent=11 // pred_fallthru
        _
    $region12: #{rnd_forward.7} parent=5 // pred_fallthru
      _
    %p244 = scmp.lt.s32.totalorder %s13, 10
    // Predicated region
    $region29: #{rnd_forward.7} parent=5 // pred_check
      %p245 = pneg %p244
    $region30: #{rnd_forward.7} parent=5 // pred_check_branch
      %247 = sbr.rel (%p245) target = $region32
    $region31: #{rnd_forward.7} parent=5 // pred_region
      // Predicated region
      $region33: #{rnd_forward.7} parent=31 // pred_check
        %p248 = pneg %p47
      $region34: #{rnd_forward.7} parent=31 // pred_check_branch
        %250 = sbr.rel (%p248) target = $region36
      $region35: #{rnd_forward.7} parent=31 // pred_region
        %s251 = smul.u32 5, %s21
        %p252 = scmp.lt.s32.totalorder %s20, 1
        %s253 = scalar_select %p252, %s20, 1
        %p254 = scmp.lt.s32.totalorder %s251, 24
        %s255 = scalar_select %p254, %s251, 24
        %s256 = smul.addr %s253, 25
        %s257 = sadd.s32 %s255, %s256
        %s258 = smul.addr %s257, 4
        %s259 = scalar_lea.vmem %s0, %s258
        %s260 = smul.u32 5, %s21
      $region36: #{rnd_forward.7} parent=31 // pred_fallthru
        _
      // Predicated region
      $region37: #{rnd_forward.7} parent=31 // pred_check
        %p261 = pneg %p75
      $region38: #{rnd_forward.7} parent=31 // pred_check_branch
        %263 = sbr.rel (%p261) target = $region40
      $region39: #{rnd_forward.7} parent=31 // pred_region
        %s264 = smul.u32 80, %s21
        %p265 = scmp.lt.s32.totalorder %s20, 1
        %s266 = scalar_select %p265, %s20, 1
        %p267 = scmp.lt.s32.totalorder %s264, 399
        %s268 = scalar_select %p267, %s264, 399
        %s269 = smul.addr %s268, 4
        %s270 = smul.addr %s266, 1600
        %s271 = sadd.s32 %s269, %s270
        %s272 = smul.addr %s271, 4
        %s273 = scalar_lea.vmem %s1, %s272
        %s274 = smul.u32 80, %s21
      $region40: #{rnd_forward.7} parent=31 // pred_fallthru
        _
      // Predicated region
      $region41: #{rnd_forward.7} parent=31 // pred_check
        %p275 = pneg %p101
      $region42: #{rnd_forward.7} parent=31 // pred_check_branch
        %277 = sbr.rel (%p275) target = $region44
      $region43: #{rnd_forward.7} parent=31 // pred_region
        %p278 = scmp.lt.s32.totalorder %s20, 1
        %s279 = scalar_select %p278, %s20, 1
        %s280 = smul.addr %s279, 4
        %s281 = scalar_lea.vmem %s2, %s280
      $region44: #{rnd_forward.7} parent=31 // pred_fallthru
        _
    $region32: #{rnd_forward.7} parent=5 // pred_fallthru
      _
    %p282 = scmp.le.s32.totalorder 1, %s13
    %p283 = scmp.lt.s32.totalorder %s13, 11
    %p284 = pnand %p282, %p283
    %p285 = pneg %p284
    // Predicated region
    $region45: #{rnd_forward.7} parent=5 // pred_check
      _
    $region46: #{rnd_forward.7} parent=5 // pred_check_branch
      %287 = sbr.rel (%p284) target = $region48
    $region47: #{rnd_forward.7} parent=5 // pred_region
      %s288 = ssub.s32 %s13, 1
      %s289 = smul.u32 5, %s23
      %p290 = scmp.lt.s32.totalorder %s22, 1
      %s291 = scalar_select %p290, %s22, 1
      %p292 = scmp.lt.s32.totalorder %s289, 24
      %s293 = scalar_select %p292, %s289, 24
      %s294 = smul.addr %s291, 25
      %s295 = sadd.s32 %s293, %s294
      %s296 = smul.addr %s295, 4
      %s297 = scalar_lea.vmem %s0, %s296
      %p298 = pneg %p53
      %p299 = pneg %p50
      %s300 = smul.u32 80, %s23
      %p301 = scmp.lt.s32.totalorder %s22, 1
      %s302 = scalar_select %p301, %s22, 1
      %p303 = scmp.lt.s32.totalorder %s300, 399
      %s304 = scalar_select %p303, %s300, 399
      %s305 = smul.addr %s304, 4
      %s306 = smul.addr %s302, 1600
      %s307 = sadd.s32 %s305, %s306
      %s308 = smul.addr %s307, 4
      %s309 = scalar_lea.vmem %s1, %s308
      %p310 = pneg %p81
      %p311 = pneg %p78
      %p312 = scmp.lt.s32.totalorder %s22, 1
      %s313 = scalar_select %p312, %s22, 1
      %s314 = smul.addr %s313, 4
      %s315 = scalar_lea.vmem %s2, %s314
      %p316 = pneg %p107
      %p317 = pneg %p104
      %p318 = pneg %p128
      %p319 = pneg %p125
      %p320 = pneg %p149
      %p321 = pneg %p146
      %p322 = pneg %p170
      %p323 = pneg %p167
      %p324 = pneg %p191
      %p325 = pneg %p188
      %p326 = pneg %p217
      %p327 = pneg %p214
      %p328 = scmp.lt.s32.totalorder %s22, 1
      %s329 = scalar_select %p328, %s22, 1
      %s330 = smul.addr %s329, 4
      %s331 = smul.addr %s330, 8
      %s332 = scalar_lea.vmem %s7, %s331
      %s333 = smul.u32 5, %s23
      %p334 = scmp.lt.s32.totalorder %s22, 1
      %s335 = scalar_select %p334, %s22, 1
      %p336 = scmp.lt.s32.totalorder %s333, 24
      %s337 = scalar_select %p336, %s333, 24
      %s338 = smul.addr %s335, 25
      %s339 = sadd.s32 %s337, %s338
      %s340 = smul.addr %s339, 4
      %s341 = scalar_lea.vmem %s0, %s340
      %s342 = smul.u32 5, %s23
      %s343 = smul.u32 80, %s23
      %p344 = scmp.lt.s32.totalorder %s22, 1
      %s345 = scalar_select %p344, %s22, 1
      %p346 = scmp.lt.s32.totalorder %s343, 399
      %s347 = scalar_select %p346, %s343, 399
      %s348 = smul.addr %s347, 4
      %s349 = smul.addr %s345, 1600
      %s350 = sadd.s32 %s348, %s349
      %s351 = smul.addr %s350, 4
      %s352 = scalar_lea.vmem %s1, %s351
      %s353 = smul.u32 80, %s23
      %p354 = scmp.lt.s32.totalorder %s22, 1
      %s355 = scalar_select %p354, %s22, 1
      %s356 = smul.addr %s355, 4
      %s357 = scalar_lea.vmem %s2, %s356
      %p358 = scmp.lt.s32.totalorder %s22, 1
      %s359 = scalar_select %p358, %s22, 1
      %s360 = smul.addr %s359, 4
      %s361 = smul.addr %s360, 8
      %s362 = scalar_lea.vmem %s7, %s361
      %p363 = scmp.eq.s32.totalorder %s23, 0
      // Predicated region
      $region49: #{rnd_forward.7} parent=47 // pred_check
        %p364 = pneg %p363
      $region50: #{rnd_forward.7} parent=47 // pred_check_branch
        %366 = sbr.rel (%p364) target = $region52
      $region51: #{rnd_forward.7} parent=47 // pred_region
        %367 = vst [vmem:[#allocation2] sm:$0xff] 0.0
        %368 = vst [vmem:[#allocation2 + $0x8] sm:$0xff] 0.0
        %369 = vst [vmem:[#allocation2 + $0x10] sm:$0xff] 0.0
        %370 = vst [vmem:[#allocation2 + $0x18] sm:$0xff] 0.0
      $region52: #{rnd_forward.7} parent=47 // pred_fallthru
        _
      %v371 = vld [vmem:[#allocation2] sm:$0xff]
      %v372 = vld [vmem:[#allocation2 + $0x8] sm:$0xff]
      %v373 = vld [vmem:[#allocation2 + $0x10] sm:$0xff]
      %v374 = vld [vmem:[#allocation2 + $0x18] sm:$0xff]
      %v375 = vld [vmem:[%s341] sm:$0xff]
      %v376 = vld [vmem:[%s341 + $0x8] sm:$0xff]
      %v377 = vld [vmem:[%s341 + $0x10] sm:$0xf]
      %v378 = vld [vmem:[%s352] sm:$0xff]
      %v379 = vld [vmem:[%s352 + $0x8] sm:$0xff]
      %v380 = vld [vmem:[%s352 + $0x10] sm:$0xff]
      %v381 = vld [vmem:[%s352 + $0x18] sm:$0xff]
      %v382 = vld [vmem:[%s352 + $0x20] sm:$0xff]
      %v383 = vld [vmem:[%s352 + $0x28] sm:$0xff]
      %v384 = vld [vmem:[%s352 + $0x30] sm:$0xff]
      %v385 = vld [vmem:[%s352 + $0x38] sm:$0xff]
      %v386 = vld [vmem:[%s352 + $0x40] sm:$0xff]
      %v387 = vld [vmem:[%s352 + $0x48] sm:$0xff]
      %v388 = vld [vmem:[%s352 + $0x50] sm:$0xff]
      %v389 = vld [vmem:[%s352 + $0x58] sm:$0xff]
      %v390 = vld [vmem:[%s352 + $0x60] sm:$0xff]
      %v391 = vld [vmem:[%s352 + $0x68] sm:$0xff]
      %v392 = vld [vmem:[%s352 + $0x70] sm:$0xff]
      %v393 = vld [vmem:[%s352 + $0x78] sm:$0xff]
      %v394 = vld [vmem:[%s352 + $0x80] sm:$0xff]
      %v395 = vld [vmem:[%s352 + $0x88] sm:$0xff]
      %v396 = vld [vmem:[%s352 + $0x90] sm:$0xff]
      %v397 = vld [vmem:[%s352 + $0x98] sm:$0xff]
      %v398 = vld [vmem:[%s352 + $0xa0] sm:$0xff]
      %v399 = vld [vmem:[%s352 + $0xa8] sm:$0xff]
      %v400 = vld [vmem:[%s352 + $0xb0] sm:$0xff]
      %v401 = vld [vmem:[%s352 + $0xb8] sm:$0xff]
      %v402 = vld [vmem:[%s352 + $0xc0] sm:$0xff]
      %v403 = vld [vmem:[%s352 + $0xc8] sm:$0xff]
      %v404 = vld [vmem:[%s352 + $0xd0] sm:$0xff]
      %v405 = vld [vmem:[%s352 + $0xd8] sm:$0xff]
      %v406 = vld [vmem:[%s352 + $0xe0] sm:$0xff]
      %v407 = vld [vmem:[%s352 + $0xe8] sm:$0xff]
      %v408 = vld [vmem:[%s352 + $0xf0] sm:$0xff]
      %v409 = vld [vmem:[%s352 + $0xf8] sm:$0xff]
      %v410 = vld [vmem:[%s352 + $0x100] sm:$0xff]
      %v411 = vld [vmem:[%s352 + $0x108] sm:$0xff]
      %v412 = vld [vmem:[%s352 + $0x110] sm:$0xff]
      %v413 = vld [vmem:[%s352 + $0x118] sm:$0xff]
      %v414 = vld [vmem:[%s352 + $0x120] sm:$0xff]
      %v415 = vld [vmem:[%s352 + $0x128] sm:$0xff]
      %v416 = vld [vmem:[%s352 + $0x130] sm:$0xff]
      %v417 = vld [vmem:[%s352 + $0x138] sm:$0xff]
      %v418 = vld [vmem:[%s352 + $0x140] sm:$0xff]
      %v419 = vld [vmem:[%s352 + $0x148] sm:$0xff]
      %v420 = vld [vmem:[%s352 + $0x150] sm:$0xff]
      %v421 = vld [vmem:[%s352 + $0x158] sm:$0xff]
      %v422 = vld [vmem:[%s352 + $0x160] sm:$0xff]
      %v423 = vld [vmem:[%s352 + $0x168] sm:$0xff]
      %v424 = vld [vmem:[%s352 + $0x170] sm:$0xff]
      %v425 = vld [vmem:[%s352 + $0x178] sm:$0xff]
      %v426 = vld [vmem:[%s352 + $0x180] sm:$0xff]
      %v427 = vld [vmem:[%s352 + $0x188] sm:$0xff]
      %v428 = vld [vmem:[%s352 + $0x190] sm:$0xff]
      %v429 = vld [vmem:[%s352 + $0x198] sm:$0xff]
      %v430 = vld [vmem:[%s352 + $0x1a0] sm:$0xff]
      %v431 = vld [vmem:[%s352 + $0x1a8] sm:$0xff]
      %v432 = vld [vmem:[%s352 + $0x1b0] sm:$0xff]
      %v433 = vld [vmem:[%s352 + $0x1b8] sm:$0xff]
      %v434 = vld [vmem:[%s352 + $0x1c0] sm:$0xff]
      %v435 = vld [vmem:[%s352 + $0x1c8] sm:$0xff]
      %v436 = vld [vmem:[%s352 + $0x1d0] sm:$0xff]
      %v437 = vld [vmem:[%s352 + $0x1d8] sm:$0xff]
      %v438 = vld [vmem:[%s352 + $0x1e0] sm:$0xff]
      %v439 = vld [vmem:[%s352 + $0x1e8] sm:$0xff]
      %v440 = vld [vmem:[%s352 + $0x1f0] sm:$0xff]
      %v441 = vld [vmem:[%s352 + $0x1f8] sm:$0xff]
      %v442 = vld [vmem:[%s352 + $0x200] sm:$0xff]
      %v443 = vld [vmem:[%s352 + $0x208] sm:$0xff]
      %v444 = vld [vmem:[%s352 + $0x210] sm:$0xff]
      %v445 = vld [vmem:[%s352 + $0x218] sm:$0xff]
      %v446 = vld [vmem:[%s352 + $0x220] sm:$0xff]
      %v447 = vld [vmem:[%s352 + $0x228] sm:$0xff]
      %v448 = vld [vmem:[%s352 + $0x230] sm:$0xff]
      %v449 = vld [vmem:[%s352 + $0x238] sm:$0xff]
      %v450 = vld [vmem:[%s352 + $0x240] sm:$0xff]
      %v451 = vld [vmem:[%s352 + $0x248] sm:$0xff]
      %v452 = vld [vmem:[%s352 + $0x250] sm:$0xff]
      %v453 = vld [vmem:[%s352 + $0x258] sm:$0xff]
      %v454 = vld [vmem:[%s352 + $0x260] sm:$0xff]
      %v455 = vld [vmem:[%s352 + $0x268] sm:$0xff]
      %v456 = vld [vmem:[%s352 + $0x270] sm:$0xff]
      %v457 = vld [vmem:[%s352 + $0x278] sm:$0xff]
      %v458 = vld [vmem:[%s352 + $0x280] sm:$0xff]
      %v459 = vld [vmem:[%s352 + $0x288] sm:$0xff]
      %v460 = vld [vmem:[%s352 + $0x290] sm:$0xff]
      %v461 = vld [vmem:[%s352 + $0x298] sm:$0xff]
      %v462 = vld [vmem:[%s352 + $0x2a0] sm:$0xff]
      %v463 = vld [vmem:[%s352 + $0x2a8] sm:$0xff]
      %v464 = vld [vmem:[%s352 + $0x2b0] sm:$0xff]
      %v465 = vld [vmem:[%s352 + $0x2b8] sm:$0xff]
      %v466 = vld [vmem:[%s352 + $0x2c0] sm:$0xff]
      %v467 = vld [vmem:[%s352 + $0x2c8] sm:$0xff]
      %v468 = vld [vmem:[%s352 + $0x2d0] sm:$0xff]
      %v469 = vld [vmem:[%s352 + $0x2d8] sm:$0xff]
      %v470 = vld [vmem:[%s352 + $0x2e0] sm:$0xff]
      %v471 = vld [vmem:[%s352 + $0x2e8] sm:$0xff]
      %v472 = vld [vmem:[%s352 + $0x2f0] sm:$0xff]
      %v473 = vld [vmem:[%s352 + $0x2f8] sm:$0xff]
      %v474 = vld [vmem:[%s352 + $0x300] sm:$0xff]
      %v475 = vld [vmem:[%s352 + $0x308] sm:$0xff]
      %v476 = vld [vmem:[%s352 + $0x310] sm:$0xff]
      %v477 = vld [vmem:[%s352 + $0x318] sm:$0xff]
      %v478 = vld [vmem:[%s352 + $0x320] sm:$0xff]
      %v479 = vld [vmem:[%s352 + $0x328] sm:$0xff]
      %v480 = vld [vmem:[%s352 + $0x330] sm:$0xff]
      %v481 = vld [vmem:[%s352 + $0x338] sm:$0xff]
      %v482 = vld [vmem:[%s352 + $0x340] sm:$0xff]
      %v483 = vld [vmem:[%s352 + $0x348] sm:$0xff]
      %v484 = vld [vmem:[%s352 + $0x350] sm:$0xff]
      %v485 = vld [vmem:[%s352 + $0x358] sm:$0xff]
      %v486 = vld [vmem:[%s352 + $0x360] sm:$0xff]
      %v487 = vld [vmem:[%s352 + $0x368] sm:$0xff]
      %v488 = vld [vmem:[%s352 + $0x370] sm:$0xff]
      %v489 = vld [vmem:[%s352 + $0x378] sm:$0xff]
      %v490 = vld [vmem:[%s352 + $0x380] sm:$0xff]
      %v491 = vld [vmem:[%s352 + $0x388] sm:$0xff]
      %v492 = vld [vmem:[%s352 + $0x390] sm:$0xff]
      %v493 = vld [vmem:[%s352 + $0x398] sm:$0xff]
      %v494 = vld [vmem:[%s352 + $0x3a0] sm:$0xff]
      %v495 = vld [vmem:[%s352 + $0x3a8] sm:$0xff]
      %v496 = vld [vmem:[%s352 + $0x3b0] sm:$0xff]
      %v497 = vld [vmem:[%s352 + $0x3b8] sm:$0xff]
      %v498 = vld [vmem:[%s352 + $0x3c0] sm:$0xff]
      %v499 = vld [vmem:[%s352 + $0x3c8] sm:$0xff]
      %v500 = vld [vmem:[%s352 + $0x3d0] sm:$0xff]
      %v501 = vld [vmem:[%s352 + $0x3d8] sm:$0xff]
      %v502 = vld [vmem:[%s352 + $0x3e0] sm:$0xff]
      %v503 = vld [vmem:[%s352 + $0x3e8] sm:$0xff]
      %v504 = vld [vmem:[%s352 + $0x3f0] sm:$0xff]
      %v505 = vld [vmem:[%s352 + $0x3f8] sm:$0xff]
      %v506 = vld [vmem:[%s352 + $0x400] sm:$0xff]
      %v507 = vld [vmem:[%s352 + $0x408] sm:$0xff]
      %v508 = vld [vmem:[%s352 + $0x410] sm:$0xff]
      %v509 = vld [vmem:[%s352 + $0x418] sm:$0xff]
      %v510 = vld [vmem:[%s352 + $0x420] sm:$0xff]
      %v511 = vld [vmem:[%s352 + $0x428] sm:$0xff]
      %v512 = vld [vmem:[%s352 + $0x430] sm:$0xff]
      %v513 = vld [vmem:[%s352 + $0x438] sm:$0xff]
      %v514 = vld [vmem:[%s352 + $0x440] sm:$0xff]
      %v515 = vld [vmem:[%s352 + $0x448] sm:$0xff]
      %v516 = vld [vmem:[%s352 + $0x450] sm:$0xff]
      %v517 = vld [vmem:[%s352 + $0x458] sm:$0xff]
      %v518 = vld [vmem:[%s352 + $0x460] sm:$0xff]
      %v519 = vld [vmem:[%s352 + $0x468] sm:$0xff]
      %v520 = vld [vmem:[%s352 + $0x470] sm:$0xff]
      %v521 = vld [vmem:[%s352 + $0x478] sm:$0xff]
      %v522 = vld [vmem:[%s352 + $0x480] sm:$0xff]
      %v523 = vld [vmem:[%s352 + $0x488] sm:$0xff]
      %v524 = vld [vmem:[%s352 + $0x490] sm:$0xff]
      %v525 = vld [vmem:[%s352 + $0x498] sm:$0xff]
      %v526 = vld [vmem:[%s352 + $0x4a0] sm:$0xff]
      %v527 = vld [vmem:[%s352 + $0x4a8] sm:$0xff]
      %v528 = vld [vmem:[%s352 + $0x4b0] sm:$0xff]
      %v529 = vld [vmem:[%s352 + $0x4b8] sm:$0xff]
      %v530 = vld [vmem:[%s352 + $0x4c0] sm:$0xff]
      %v531 = vld [vmem:[%s352 + $0x4c8] sm:$0xff]
      %v532 = vld [vmem:[%s352 + $0x4d0] sm:$0xff]
      %v533 = vld [vmem:[%s352 + $0x4d8] sm:$0xff]
      %v534 = vld [vmem:[%s352 + $0x4e0] sm:$0xff]
      %v535 = vld [vmem:[%s352 + $0x4e8] sm:$0xff]
      %v536 = vld [vmem:[%s352 + $0x4f0] sm:$0xff]
      %v537 = vld [vmem:[%s352 + $0x4f8] sm:$0xff]
      %v541 = vunpack.c.l.b16 %v375
      %v542 = vunpack.c.h.b16 %v375
      %v543 = vunpack.c.l.b16 %v376
      %v544 = vunpack.c.h.b16 %v376
      %v545 = vunpack.c.l.b16 %v377
      %v546 = vpack.c.b16 %v541, %v541
      %v547 = vpack.c.b16 %v542, %v542
      %v548 = vpack.c.b16 %v543, %v543
      %v549 = vpack.c.b16 %v544, %v544
      %v550 = vpack.c.b16 %v545, %v545
      %v716 = vunpack.c.l.b16 %v378
      %v717 = vunpack.c.h.b16 %v378
      %v718 = vunpack.c.l.b16 %v379
      %v719 = vunpack.c.h.b16 %v379
      %v720 = vunpack.c.l.b16 %v380
      %v721 = vunpack.c.h.b16 %v380
      %v722 = vunpack.c.l.b16 %v381
      %v723 = vunpack.c.h.b16 %v381
      %v724 = vunpack.c.l.b16 %v382
      %v725 = vunpack.c.h.b16 %v382
      %v726 = vunpack.c.l.b16 %v383
      %v727 = vunpack.c.h.b16 %v383
      %v728 = vunpack.c.l.b16 %v384
      %v729 = vunpack.c.h.b16 %v384
      %v730 = vunpack.c.l.b16 %v385
      %v731 = vunpack.c.h.b16 %v385
      %v732 = vunpack.c.l.b16 %v386
      %v733 = vunpack.c.h.b16 %v386
      %v734 = vunpack.c.l.b16 %v387
      %v735 = vunpack.c.h.b16 %v387
      %v736 = vunpack.c.l.b16 %v388
      %v737 = vunpack.c.h.b16 %v388
      %v738 = vunpack.c.l.b16 %v389
      %v739 = vunpack.c.h.b16 %v389
      %v740 = vunpack.c.l.b16 %v390
      %v741 = vunpack.c.h.b16 %v390
      %v742 = vunpack.c.l.b16 %v391
      %v743 = vunpack.c.h.b16 %v391
      %v744 = vunpack.c.l.b16 %v392
      %v745 = vunpack.c.h.b16 %v392
      %v746 = vunpack.c.l.b16 %v393
      %v747 = vunpack.c.h.b16 %v393
      %v748 = vunpack.c.l.b16 %v394
      %v749 = vunpack.c.h.b16 %v394
      %v750 = vunpack.c.l.b16 %v395
      %v751 = vunpack.c.h.b16 %v395
      %v752 = vunpack.c.l.b16 %v396
      %v753 = vunpack.c.h.b16 %v396
      %v754 = vunpack.c.l.b16 %v397
      %v755 = vunpack.c.h.b16 %v397
      %v756 = vunpack.c.l.b16 %v398
      %v757 = vunpack.c.h.b16 %v398
      %v758 = vunpack.c.l.b16 %v399
      %v759 = vunpack.c.h.b16 %v399
      %v760 = vunpack.c.l.b16 %v400
      %v761 = vunpack.c.h.b16 %v400
      %v762 = vunpack.c.l.b16 %v401
      %v763 = vunpack.c.h.b16 %v401
      %v764 = vunpack.c.l.b16 %v402
      %v765 = vunpack.c.h.b16 %v402
      %v766 = vunpack.c.l.b16 %v403
      %v767 = vunpack.c.h.b16 %v403
      %v768 = vunpack.c.l.b16 %v404
      %v769 = vunpack.c.h.b16 %v404
      %v770 = vunpack.c.l.b16 %v405
      %v771 = vunpack.c.h.b16 %v405
      %v772 = vunpack.c.l.b16 %v406
      %v773 = vunpack.c.h.b16 %v406
      %v774 = vunpack.c.l.b16 %v407
      %v775 = vunpack.c.h.b16 %v407
      %v776 = vunpack.c.l.b16 %v408
      %v777 = vunpack.c.h.b16 %v408
      %v778 = vunpack.c.l.b16 %v409
      %v779 = vunpack.c.h.b16 %v409
      %v780 = vunpack.c.l.b16 %v410
      %v781 = vunpack.c.h.b16 %v410
      %v782 = vunpack.c.l.b16 %v411
      %v783 = vunpack.c.h.b16 %v411
      %v784 = vunpack.c.l.b16 %v412
      %v785 = vunpack.c.h.b16 %v412
      %v786 = vunpack.c.l.b16 %v413
      %v787 = vunpack.c.h.b16 %v413
      %v788 = vunpack.c.l.b16 %v414
      %v789 = vunpack.c.h.b16 %v414
      %v790 = vunpack.c.l.b16 %v415
      %v791 = vunpack.c.h.b16 %v415
      %v792 = vunpack.c.l.b16 %v416
      %v793 = vunpack.c.h.b16 %v416
      %v794 = vunpack.c.l.b16 %v417
      %v795 = vunpack.c.h.b16 %v417
      %v796 = vunpack.c.l.b16 %v418
      %v797 = vunpack.c.h.b16 %v418
      %v798 = vunpack.c.l.b16 %v419
      %v799 = vunpack.c.h.b16 %v419
      %v800 = vunpack.c.l.b16 %v420
      %v801 = vunpack.c.h.b16 %v420
      %v802 = vunpack.c.l.b16 %v421
      %v803 = vunpack.c.h.b16 %v421
      %v804 = vunpack.c.l.b16 %v422
      %v805 = vunpack.c.h.b16 %v422
      %v806 = vunpack.c.l.b16 %v423
      %v807 = vunpack.c.h.b16 %v423
      %v808 = vunpack.c.l.b16 %v424
      %v809 = vunpack.c.h.b16 %v424
      %v810 = vunpack.c.l.b16 %v425
      %v811 = vunpack.c.h.b16 %v425
      %v812 = vunpack.c.l.b16 %v426
      %v813 = vunpack.c.h.b16 %v426
      %v814 = vunpack.c.l.b16 %v427
      %v815 = vunpack.c.h.b16 %v427
      %v816 = vunpack.c.l.b16 %v428
      %v817 = vunpack.c.h.b16 %v428
      %v818 = vunpack.c.l.b16 %v429
      %v819 = vunpack.c.h.b16 %v429
      %v820 = vunpack.c.l.b16 %v430
      %v821 = vunpack.c.h.b16 %v430
      %v822 = vunpack.c.l.b16 %v431
      %v823 = vunpack.c.h.b16 %v431
      %v824 = vunpack.c.l.b16 %v432
      %v825 = vunpack.c.h.b16 %v432
      %v826 = vunpack.c.l.b16 %v433
      %v827 = vunpack.c.h.b16 %v433
      %v828 = vunpack.c.l.b16 %v434
      %v829 = vunpack.c.h.b16 %v434
      %v830 = vunpack.c.l.b16 %v435
      %v831 = vunpack.c.h.b16 %v435
      %v832 = vunpack.c.l.b16 %v436
      %v833 = vunpack.c.h.b16 %v436
      %v834 = vunpack.c.l.b16 %v437
      %v835 = vunpack.c.h.b16 %v437
      %v836 = vunpack.c.l.b16 %v438
      %v837 = vunpack.c.h.b16 %v438
      %v838 = vunpack.c.l.b16 %v439
      %v839 = vunpack.c.h.b16 %v439
      %v840 = vunpack.c.l.b16 %v440
      %v841 = vunpack.c.h.b16 %v440
      %v842 = vunpack.c.l.b16 %v441
      %v843 = vunpack.c.h.b16 %v441
      %v844 = vunpack.c.l.b16 %v442
      %v845 = vunpack.c.h.b16 %v442
      %v846 = vunpack.c.l.b16 %v443
      %v847 = vunpack.c.h.b16 %v443
      %v848 = vunpack.c.l.b16 %v444
      %v849 = vunpack.c.h.b16 %v444
      %v850 = vunpack.c.l.b16 %v445
      %v851 = vunpack.c.h.b16 %v445
      %v852 = vunpack.c.l.b16 %v446
      %v853 = vunpack.c.h.b16 %v446
      %v854 = vunpack.c.l.b16 %v447
      %v855 = vunpack.c.h.b16 %v447
      %v856 = vunpack.c.l.b16 %v448
      %v857 = vunpack.c.h.b16 %v448
      %v858 = vunpack.c.l.b16 %v449
      %v859 = vunpack.c.h.b16 %v449
      %v860 = vunpack.c.l.b16 %v450
      %v861 = vunpack.c.h.b16 %v450
      %v862 = vunpack.c.l.b16 %v451
      %v863 = vunpack.c.h.b16 %v451
      %v864 = vunpack.c.l.b16 %v452
      %v865 = vunpack.c.h.b16 %v452
      %v866 = vunpack.c.l.b16 %v453
      %v867 = vunpack.c.h.b16 %v453
      %v868 = vunpack.c.l.b16 %v454
      %v869 = vunpack.c.h.b16 %v454
      %v870 = vunpack.c.l.b16 %v455
      %v871 = vunpack.c.h.b16 %v455
      %v872 = vunpack.c.l.b16 %v456
      %v873 = vunpack.c.h.b16 %v456
      %v874 = vunpack.c.l.b16 %v457
      %v875 = vunpack.c.h.b16 %v457
      %v876 = vunpack.c.l.b16 %v458
      %v877 = vunpack.c.h.b16 %v458
      %v878 = vunpack.c.l.b16 %v459
      %v879 = vunpack.c.h.b16 %v459
      %v880 = vunpack.c.l.b16 %v460
      %v881 = vunpack.c.h.b16 %v460
      %v882 = vunpack.c.l.b16 %v461
      %v883 = vunpack.c.h.b16 %v461
      %v884 = vunpack.c.l.b16 %v462
      %v885 = vunpack.c.h.b16 %v462
      %v886 = vunpack.c.l.b16 %v463
      %v887 = vunpack.c.h.b16 %v463
      %v888 = vunpack.c.l.b16 %v464
      %v889 = vunpack.c.h.b16 %v464
      %v890 = vunpack.c.l.b16 %v465
      %v891 = vunpack.c.h.b16 %v465
      %v892 = vunpack.c.l.b16 %v466
      %v893 = vunpack.c.h.b16 %v466
      %v894 = vunpack.c.l.b16 %v467
      %v895 = vunpack.c.h.b16 %v467
      %v896 = vunpack.c.l.b16 %v468
      %v897 = vunpack.c.h.b16 %v468
      %v898 = vunpack.c.l.b16 %v469
      %v899 = vunpack.c.h.b16 %v469
      %v900 = vunpack.c.l.b16 %v470
      %v901 = vunpack.c.h.b16 %v470
      %v902 = vunpack.c.l.b16 %v471
      %v903 = vunpack.c.h.b16 %v471
      %v904 = vunpack.c.l.b16 %v472
      %v905 = vunpack.c.h.b16 %v472
      %v906 = vunpack.c.l.b16 %v473
      %v907 = vunpack.c.h.b16 %v473
      %v908 = vunpack.c.l.b16 %v474
      %v909 = vunpack.c.h.b16 %v474
      %v910 = vunpack.c.l.b16 %v475
      %v911 = vunpack.c.h.b16 %v475
      %v912 = vunpack.c.l.b16 %v476
      %v913 = vunpack.c.h.b16 %v476
      %v914 = vunpack.c.l.b16 %v477
      %v915 = vunpack.c.h.b16 %v477
      %v916 = vunpack.c.l.b16 %v478
      %v917 = vunpack.c.h.b16 %v478
      %v918 = vunpack.c.l.b16 %v479
      %v919 = vunpack.c.h.b16 %v479
      %v920 = vunpack.c.l.b16 %v480
      %v921 = vunpack.c.h.b16 %v480
      %v922 = vunpack.c.l.b16 %v481
      %v923 = vunpack.c.h.b16 %v481
      %v924 = vunpack.c.l.b16 %v482
      %v925 = vunpack.c.h.b16 %v482
      %v926 = vunpack.c.l.b16 %v483
      %v927 = vunpack.c.h.b16 %v483
      %v928 = vunpack.c.l.b16 %v484
      %v929 = vunpack.c.h.b16 %v484
      %v930 = vunpack.c.l.b16 %v485
      %v931 = vunpack.c.h.b16 %v485
      %v932 = vunpack.c.l.b16 %v486
      %v933 = vunpack.c.h.b16 %v486
      %v934 = vunpack.c.l.b16 %v487
      %v935 = vunpack.c.h.b16 %v487
      %v936 = vunpack.c.l.b16 %v488
      %v937 = vunpack.c.h.b16 %v488
      %v938 = vunpack.c.l.b16 %v489
      %v939 = vunpack.c.h.b16 %v489
      %v940 = vunpack.c.l.b16 %v490
      %v941 = vunpack.c.h.b16 %v490
      %v942 = vunpack.c.l.b16 %v491
      %v943 = vunpack.c.h.b16 %v491
      %v944 = vunpack.c.l.b16 %v492
      %v945 = vunpack.c.h.b16 %v492
      %v946 = vunpack.c.l.b16 %v493
      %v947 = vunpack.c.h.b16 %v493
      %v948 = vunpack.c.l.b16 %v494
      %v949 = vunpack.c.h.b16 %v494
      %v950 = vunpack.c.l.b16 %v495
      %v951 = vunpack.c.h.b16 %v495
      %v952 = vunpack.c.l.b16 %v496
      %v953 = vunpack.c.h.b16 %v496
      %v954 = vunpack.c.l.b16 %v497
      %v955 = vunpack.c.h.b16 %v497
      %v956 = vunpack.c.l.b16 %v498
      %v957 = vunpack.c.h.b16 %v498
      %v958 = vunpack.c.l.b16 %v499
      %v959 = vunpack.c.h.b16 %v499
      %v960 = vunpack.c.l.b16 %v500
      %v961 = vunpack.c.h.b16 %v500
      %v962 = vunpack.c.l.b16 %v501
      %v963 = vunpack.c.h.b16 %v501
      %v964 = vunpack.c.l.b16 %v502
      %v965 = vunpack.c.h.b16 %v502
      %v966 = vunpack.c.l.b16 %v503
      %v967 = vunpack.c.h.b16 %v503
      %v968 = vunpack.c.l.b16 %v504
      %v969 = vunpack.c.h.b16 %v504
      %v970 = vunpack.c.l.b16 %v505
      %v971 = vunpack.c.h.b16 %v505
      %v972 = vunpack.c.l.b16 %v506
      %v973 = vunpack.c.h.b16 %v506
      %v974 = vunpack.c.l.b16 %v507
      %v975 = vunpack.c.h.b16 %v507
      %v976 = vunpack.c.l.b16 %v508
      %v977 = vunpack.c.h.b16 %v508
      %v978 = vunpack.c.l.b16 %v509
      %v979 = vunpack.c.h.b16 %v509
      %v980 = vunpack.c.l.b16 %v510
      %v981 = vunpack.c.h.b16 %v510
      %v982 = vunpack.c.l.b16 %v511
      %v983 = vunpack.c.h.b16 %v511
      %v984 = vunpack.c.l.b16 %v512
      %v985 = vunpack.c.h.b16 %v512
      %v986 = vunpack.c.l.b16 %v513
      %v987 = vunpack.c.h.b16 %v513
      %v988 = vunpack.c.l.b16 %v514
      %v989 = vunpack.c.h.b16 %v514
      %v990 = vunpack.c.l.b16 %v515
      %v991 = vunpack.c.h.b16 %v515
      %v992 = vunpack.c.l.b16 %v516
      %v993 = vunpack.c.h.b16 %v516
      %v994 = vunpack.c.l.b16 %v517
      %v995 = vunpack.c.h.b16 %v517
      %v996 = vunpack.c.l.b16 %v518
      %v997 = vunpack.c.h.b16 %v518
      %v998 = vunpack.c.l.b16 %v519
      %v999 = vunpack.c.h.b16 %v519
      %v1000 = vunpack.c.l.b16 %v520
      %v1001 = vunpack.c.h.b16 %v520
      %v1002 = vunpack.c.l.b16 %v521
      %v1003 = vunpack.c.h.b16 %v521
      %v1004 = vunpack.c.l.b16 %v522
      %v1005 = vunpack.c.h.b16 %v522
      %v1006 = vunpack.c.l.b16 %v523
      %v1007 = vunpack.c.h.b16 %v523
      %v1008 = vunpack.c.l.b16 %v524
      %v1009 = vunpack.c.h.b16 %v524
      %v1010 = vunpack.c.l.b16 %v525
      %v1011 = vunpack.c.h.b16 %v525
      %v1012 = vunpack.c.l.b16 %v526
      %v1013 = vunpack.c.h.b16 %v526
      %v1014 = vunpack.c.l.b16 %v527
      %v1015 = vunpack.c.h.b16 %v527
      %v1016 = vunpack.c.l.b16 %v528
      %v1017 = vunpack.c.h.b16 %v528
      %v1018 = vunpack.c.l.b16 %v529
      %v1019 = vunpack.c.h.b16 %v529
      %v1020 = vunpack.c.l.b16 %v530
      %v1021 = vunpack.c.h.b16 %v530
      %v1022 = vunpack.c.l.b16 %v531
      %v1023 = vunpack.c.h.b16 %v531
      %v1024 = vunpack.c.l.b16 %v532
      %v1025 = vunpack.c.h.b16 %v532
      %v1026 = vunpack.c.l.b16 %v533
      %v1027 = vunpack.c.h.b16 %v533
      %v1028 = vunpack.c.l.b16 %v534
      %v1029 = vunpack.c.h.b16 %v534
      %v1030 = vunpack.c.l.b16 %v535
      %v1031 = vunpack.c.h.b16 %v535
      %v1032 = vunpack.c.l.b16 %v536
      %v1033 = vunpack.c.h.b16 %v536
      %v1034 = vunpack.c.l.b16 %v537
      %v1035 = vunpack.c.h.b16 %v537
      %v1036 = vpack.c.b16 %v720, %v716
      %v1037 = vpack.c.b16 %v721, %v717
      %v1038 = vpack.c.b16 %v722, %v718
      %v1039 = vpack.c.b16 %v723, %v719
      %v1040 = vpack.c.b16 %v728, %v724
      %v1041 = vpack.c.b16 %v729, %v725
      %v1042 = vpack.c.b16 %v730, %v726
      %v1043 = vpack.c.b16 %v731, %v727
      %v1044 = vpack.c.b16 %v736, %v732
      %v1045 = vpack.c.b16 %v737, %v733
      %v1046 = vpack.c.b16 %v738, %v734
      %v1047 = vpack.c.b16 %v739, %v735
      %v1048 = vpack.c.b16 %v744, %v740
      %v1049 = vpack.c.b16 %v745, %v741
      %v1050 = vpack.c.b16 %v746, %v742
      %v1051 = vpack.c.b16 %v747, %v743
      %v1052 = vpack.c.b16 %v752, %v748
      %v1053 = vpack.c.b16 %v753, %v749
      %v1054 = vpack.c.b16 %v754, %v750
      %v1055 = vpack.c.b16 %v755, %v751
      %v1056 = vpack.c.b16 %v760, %v756
      %v1057 = vpack.c.b16 %v761, %v757
      %v1058 = vpack.c.b16 %v762, %v758
      %v1059 = vpack.c.b16 %v763, %v759
      %v1060 = vpack.c.b16 %v768, %v764
      %v1061 = vpack.c.b16 %v769, %v765
      %v1062 = vpack.c.b16 %v770, %v766
      %v1063 = vpack.c.b16 %v771, %v767
      %v1064 = vpack.c.b16 %v776, %v772
      %v1065 = vpack.c.b16 %v777, %v773
      %v1066 = vpack.c.b16 %v778, %v774
      %v1067 = vpack.c.b16 %v779, %v775
      %v1068 = vpack.c.b16 %v784, %v780
      %v1069 = vpack.c.b16 %v785, %v781
      %v1070 = vpack.c.b16 %v786, %v782
      %v1071 = vpack.c.b16 %v787, %v783
      %v1072 = vpack.c.b16 %v792, %v788
      %v1073 = vpack.c.b16 %v793, %v789
      %v1074 = vpack.c.b16 %v794, %v790
      %v1075 = vpack.c.b16 %v795, %v791
      %v1076 = vpack.c.b16 %v800, %v796
      %v1077 = vpack.c.b16 %v801, %v797
      %v1078 = vpack.c.b16 %v802, %v798
      %v1079 = vpack.c.b16 %v803, %v799
      %v1080 = vpack.c.b16 %v808, %v804
      %v1081 = vpack.c.b16 %v809, %v805
      %v1082 = vpack.c.b16 %v810, %v806
      %v1083 = vpack.c.b16 %v811, %v807
      %v1084 = vpack.c.b16 %v816, %v812
      %v1085 = vpack.c.b16 %v817, %v813
      %v1086 = vpack.c.b16 %v818, %v814
      %v1087 = vpack.c.b16 %v819, %v815
      %v1088 = vpack.c.b16 %v824, %v820
      %v1089 = vpack.c.b16 %v825, %v821
      %v1090 = vpack.c.b16 %v826, %v822
      %v1091 = vpack.c.b16 %v827, %v823
      %v1092 = vpack.c.b16 %v832, %v828
      %v1093 = vpack.c.b16 %v833, %v829
      %v1094 = vpack.c.b16 %v834, %v830
      %v1095 = vpack.c.b16 %v835, %v831
      %v1096 = vpack.c.b16 %v840, %v836
      %v1097 = vpack.c.b16 %v841, %v837
      %v1098 = vpack.c.b16 %v842, %v838
      %v1099 = vpack.c.b16 %v843, %v839
      %v1100 = vpack.c.b16 %v848, %v844
      %v1101 = vpack.c.b16 %v849, %v845
      %v1102 = vpack.c.b16 %v850, %v846
      %v1103 = vpack.c.b16 %v851, %v847
      %v1104 = vpack.c.b16 %v856, %v852
      %v1105 = vpack.c.b16 %v857, %v853
      %v1106 = vpack.c.b16 %v858, %v854
      %v1107 = vpack.c.b16 %v859, %v855
      %v1108 = vpack.c.b16 %v864, %v860
      %v1109 = vpack.c.b16 %v865, %v861
      %v1110 = vpack.c.b16 %v866, %v862
      %v1111 = vpack.c.b16 %v867, %v863
      %v1112 = vpack.c.b16 %v872, %v868
      %v1113 = vpack.c.b16 %v873, %v869
      %v1114 = vpack.c.b16 %v874, %v870
      %v1115 = vpack.c.b16 %v875, %v871
      %v1116 = vpack.c.b16 %v880, %v876
      %v1117 = vpack.c.b16 %v881, %v877
      %v1118 = vpack.c.b16 %v882, %v878
      %v1119 = vpack.c.b16 %v883, %v879
      %v1120 = vpack.c.b16 %v888, %v884
      %v1121 = vpack.c.b16 %v889, %v885
      %v1122 = vpack.c.b16 %v890, %v886
      %v1123 = vpack.c.b16 %v891, %v887
      %v1124 = vpack.c.b16 %v896, %v892
      %v1125 = vpack.c.b16 %v897, %v893
      %v1126 = vpack.c.b16 %v898, %v894
      %v1127 = vpack.c.b16 %v899, %v895
      %v1128 = vpack.c.b16 %v904, %v900
      %v1129 = vpack.c.b16 %v905, %v901
      %v1130 = vpack.c.b16 %v906, %v902
      %v1131 = vpack.c.b16 %v907, %v903
      %v1132 = vpack.c.b16 %v912, %v908
      %v1133 = vpack.c.b16 %v913, %v909
      %v1134 = vpack.c.b16 %v914, %v910
      %v1135 = vpack.c.b16 %v915, %v911
      %v1136 = vpack.c.b16 %v920, %v916
      %v1137 = vpack.c.b16 %v921, %v917
      %v1138 = vpack.c.b16 %v922, %v918
      %v1139 = vpack.c.b16 %v923, %v919
      %v1140 = vpack.c.b16 %v928, %v924
      %v1141 = vpack.c.b16 %v929, %v925
      %v1142 = vpack.c.b16 %v930, %v926
      %v1143 = vpack.c.b16 %v931, %v927
      %v1144 = vpack.c.b16 %v936, %v932
      %v1145 = vpack.c.b16 %v937, %v933
      %v1146 = vpack.c.b16 %v938, %v934
      %v1147 = vpack.c.b16 %v939, %v935
      %v1148 = vpack.c.b16 %v944, %v940
      %v1149 = vpack.c.b16 %v945, %v941
      %v1150 = vpack.c.b16 %v946, %v942
      %v1151 = vpack.c.b16 %v947, %v943
      %v1152 = vpack.c.b16 %v952, %v948
      %v1153 = vpack.c.b16 %v953, %v949
      %v1154 = vpack.c.b16 %v954, %v950
      %v1155 = vpack.c.b16 %v955, %v951
      %v1156 = vpack.c.b16 %v960, %v956
      %v1157 = vpack.c.b16 %v961, %v957
      %v1158 = vpack.c.b16 %v962, %v958
      %v1159 = vpack.c.b16 %v963, %v959
      %v1160 = vpack.c.b16 %v968, %v964
      %v1161 = vpack.c.b16 %v969, %v965
      %v1162 = vpack.c.b16 %v970, %v966
      %v1163 = vpack.c.b16 %v971, %v967
      %v1164 = vpack.c.b16 %v976, %v972
      %v1165 = vpack.c.b16 %v977, %v973
      %v1166 = vpack.c.b16 %v978, %v974
      %v1167 = vpack.c.b16 %v979, %v975
      %v1168 = vpack.c.b16 %v984, %v980
      %v1169 = vpack.c.b16 %v985, %v981
      %v1170 = vpack.c.b16 %v986, %v982
      %v1171 = vpack.c.b16 %v987, %v983
      %v1172 = vpack.c.b16 %v992, %v988
      %v1173 = vpack.c.b16 %v993, %v989
      %v1174 = vpack.c.b16 %v994, %v990
      %v1175 = vpack.c.b16 %v995, %v991
      %v1176 = vpack.c.b16 %v1000, %v996
      %v1177 = vpack.c.b16 %v1001, %v997
      %v1178 = vpack.c.b16 %v1002, %v998
      %v1179 = vpack.c.b16 %v1003, %v999
      %v1180 = vpack.c.b16 %v1008, %v1004
      %v1181 = vpack.c.b16 %v1009, %v1005
      %v1182 = vpack.c.b16 %v1010, %v1006
      %v1183 = vpack.c.b16 %v1011, %v1007
      %v1184 = vpack.c.b16 %v1016, %v1012
      %v1185 = vpack.c.b16 %v1017, %v1013
      %v1186 = vpack.c.b16 %v1018, %v1014
      %v1187 = vpack.c.b16 %v1019, %v1015
      %v1188 = vpack.c.b16 %v1024, %v1020
      %v1189 = vpack.c.b16 %v1025, %v1021
      %v1190 = vpack.c.b16 %v1026, %v1022
      %v1191 = vpack.c.b16 %v1027, %v1023
      %v1192 = vpack.c.b16 %v1032, %v1028
      %v1193 = vpack.c.b16 %v1033, %v1029
      %v1194 = vpack.c.b16 %v1034, %v1030
      %v1195 = vpack.c.b16 %v1035, %v1031
      %1356 = vmatpush.bf16.msra.mxu0 %v1064
      %1357 = vmatpush.bf16.msra.mxu0 %v1060
      %1358 = vmatpush.bf16.msra.mxu0 %v1056
      %1359 = vmatpush.bf16.msra.mxu0 %v1052
      %1360 = vmatpush.bf16.msra.mxu0 %v1048
      %1361 = vmatpush.bf16.msra.mxu0 %v1044
      %1362 = vmatpush.bf16.msra.mxu0 %v1040
      %1363 = vmatpush.bf16.msra.mxu0 %v1036
      %1364 = vmatmul.bf16.gmra.mxu0 %v546
      %v1365 = vpop.f32.mrf.mxu0
      %v1366 = vadd.f32 0.0, %v1365
      %v1367 = vpop.f32.mrf.mxu0
      %1368 = vdwg.mxu0
      %1369 = vmatpush.bf16.msra.mxu0 %v1096
      %1370 = vmatpush.bf16.msra.mxu0 %v1092
      %1371 = vmatpush.bf16.msra.mxu0 %v1088
      %1372 = vmatpush.bf16.msra.mxu0 %v1084
      %1373 = vmatpush.bf16.msra.mxu0 %v1080
      %1374 = vmatpush.bf16.msra.mxu0 %v1076
      %1375 = vmatpush.bf16.msra.mxu0 %v1072
      %1376 = vmatpush.bf16.msra.mxu0 %v1068
      %1377 = vmatmul.bf16.gmra.mxu0 %v547
      %v1378 = vpop.f32.mrf.mxu0
      %v1379 = vadd.f32 %v1366, %v1378
      %v1380 = vpop.f32.mrf.mxu0
      %1381 = vdwg.mxu0
      %1382 = vmatpush.bf16.msra.mxu0 %v1128
      %1383 = vmatpush.bf16.msra.mxu0 %v1124
      %1384 = vmatpush.bf16.msra.mxu0 %v1120
      %1385 = vmatpush.bf16.msra.mxu0 %v1116
      %1386 = vmatpush.bf16.msra.mxu0 %v1112
      %1387 = vmatpush.bf16.msra.mxu0 %v1108
      %1388 = vmatpush.bf16.msra.mxu0 %v1104
      %1389 = vmatpush.bf16.msra.mxu0 %v1100
      %1390 = vmatmul.bf16.gmra.mxu0 %v548
      %v1391 = vpop.f32.mrf.mxu0
      %v1392 = vadd.f32 %v1379, %v1391
      %v1393 = vpop.f32.mrf.mxu0
      %1394 = vdwg.mxu0
      %1395 = vmatpush.bf16.msra.mxu0 %v1160
      %1396 = vmatpush.bf16.msra.mxu0 %v1156
      %1397 = vmatpush.bf16.msra.mxu0 %v1152
      %1398 = vmatpush.bf16.msra.mxu0 %v1148
      %1399 = vmatpush.bf16.msra.mxu0 %v1144
      %1400 = vmatpush.bf16.msra.mxu0 %v1140
      %1401 = vmatpush.bf16.msra.mxu0 %v1136
      %1402 = vmatpush.bf16.msra.mxu0 %v1132
      %1403 = vmatmul.bf16.gmra.mxu0 %v549
      %v1404 = vpop.f32.mrf.mxu0
      %v1405 = vadd.f32 %v1392, %v1404
      %v1406 = vpop.f32.mrf.mxu0
      %1407 = vdwg.mxu0
      %1408 = vmatpush.bf16.msra.mxu0 %v1192
      %1409 = vmatpush.bf16.msra.mxu0 %v1188
      %1410 = vmatpush.bf16.msra.mxu0 %v1184
      %1411 = vmatpush.bf16.msra.mxu0 %v1180
      %1412 = vmatpush.bf16.msra.mxu0 %v1176
      %1413 = vmatpush.bf16.msra.mxu0 %v1172
      %1414 = vmatpush.bf16.msra.mxu0 %v1168
      %1415 = vmatpush.bf16.msra.mxu0 %v1164
      %1416 = vmatmul.bf16.gmra.mxu0 %v550
      %v1417 = vpop.f32.mrf.mxu0
      %v1418 = vadd.f32 %v1405, %v1417
      %v1419 = vpop.f32.mrf.mxu0
      %1420 = vdwg.mxu0
      %1421 = vmatpush.bf16.msra.mxu0 %v1065
      %1422 = vmatpush.bf16.msra.mxu0 %v1061
      %1423 = vmatpush.bf16.msra.mxu0 %v1057
      %1424 = vmatpush.bf16.msra.mxu0 %v1053
      %1425 = vmatpush.bf16.msra.mxu0 %v1049
      %1426 = vmatpush.bf16.msra.mxu0 %v1045
      %1427 = vmatpush.bf16.msra.mxu0 %v1041
      %1428 = vmatpush.bf16.msra.mxu0 %v1037
      %1429 = vmatmul.bf16.gmra.mxu0 %v546
      %v1430 = vpop.f32.mrf.mxu0
      %v1431 = vadd.f32 0.0, %v1430
      %v1432 = vpop.f32.mrf.mxu0
      %1433 = vdwg.mxu0
      %1434 = vmatpush.bf16.msra.mxu0 %v1097
      %1435 = vmatpush.bf16.msra.mxu0 %v1093
      %1436 = vmatpush.bf16.msra.mxu0 %v1089
      %1437 = vmatpush.bf16.msra.mxu0 %v1085
      %1438 = vmatpush.bf16.msra.mxu0 %v1081
      %1439 = vmatpush.bf16.msra.mxu0 %v1077
      %1440 = vmatpush.bf16.msra.mxu0 %v1073
      %1441 = vmatpush.bf16.msra.mxu0 %v1069
      %1442 = vmatmul.bf16.gmra.mxu0 %v547
      %v1443 = vpop.f32.mrf.mxu0
      %v1444 = vadd.f32 %v1431, %v1443
      %v1445 = vpop.f32.mrf.mxu0
      %1446 = vdwg.mxu0
      %1447 = vmatpush.bf16.msra.mxu0 %v1129
      %1448 = vmatpush.bf16.msra.mxu0 %v1125
      %1449 = vmatpush.bf16.msra.mxu0 %v1121
      %1450 = vmatpush.bf16.msra.mxu0 %v1117
      %1451 = vmatpush.bf16.msra.mxu0 %v1113
      %1452 = vmatpush.bf16.msra.mxu0 %v1109
      %1453 = vmatpush.bf16.msra.mxu0 %v1105
      %1454 = vmatpush.bf16.msra.mxu0 %v1101
      %1455 = vmatmul.bf16.gmra.mxu0 %v548
      %v1456 = vpop.f32.mrf.mxu0
      %v1457 = vadd.f32 %v1444, %v1456
      %v1458 = vpop.f32.mrf.mxu0
      %1459 = vdwg.mxu0
      %1460 = vmatpush.bf16.msra.mxu0 %v1161
      %1461 = vmatpush.bf16.msra.mxu0 %v1157
      %1462 = vmatpush.bf16.msra.mxu0 %v1153
      %1463 = vmatpush.bf16.msra.mxu0 %v1149
      %1464 = vmatpush.bf16.msra.mxu0 %v1145
      %1465 = vmatpush.bf16.msra.mxu0 %v1141
      %1466 = vmatpush.bf16.msra.mxu0 %v1137
      %1467 = vmatpush.bf16.msra.mxu0 %v1133
      %1468 = vmatmul.bf16.gmra.mxu0 %v549
      %v1469 = vpop.f32.mrf.mxu0
      %v1470 = vadd.f32 %v1457, %v1469
      %v1471 = vpop.f32.mrf.mxu0
      %1472 = vdwg.mxu0
      %1473 = vmatpush.bf16.msra.mxu0 %v1193
      %1474 = vmatpush.bf16.msra.mxu0 %v1189
      %1475 = vmatpush.bf16.msra.mxu0 %v1185
      %1476 = vmatpush.bf16.msra.mxu0 %v1181
      %1477 = vmatpush.bf16.msra.mxu0 %v1177
      %1478 = vmatpush.bf16.msra.mxu0 %v1173
      %1479 = vmatpush.bf16.msra.mxu0 %v1169
      %1480 = vmatpush.bf16.msra.mxu0 %v1165
      %1481 = vmatmul.bf16.gmra.mxu0 %v550
      %v1482 = vpop.f32.mrf.mxu0
      %v1483 = vadd.f32 %v1470, %v1482
      %v1484 = vpop.f32.mrf.mxu0
      %1485 = vdwg.mxu0
      %1486 = vmatpush.bf16.msra.mxu0 %v1066
      %1487 = vmatpush.bf16.msra.mxu0 %v1062
      %1488 = vmatpush.bf16.msra.mxu0 %v1058
      %1489 = vmatpush.bf16.msra.mxu0 %v1054
      %1490 = vmatpush.bf16.msra.mxu0 %v1050
      %1491 = vmatpush.bf16.msra.mxu0 %v1046
      %1492 = vmatpush.bf16.msra.mxu0 %v1042
      %1493 = vmatpush.bf16.msra.mxu0 %v1038
      %1494 = vmatmul.bf16.gmra.mxu0 %v546
      %v1495 = vpop.f32.mrf.mxu0
      %v1496 = vadd.f32 0.0, %v1495
      %v1497 = vpop.f32.mrf.mxu0
      %1498 = vdwg.mxu0
      %1499 = vmatpush.bf16.msra.mxu0 %v1098
      %1500 = vmatpush.bf16.msra.mxu0 %v1094
      %1501 = vmatpush.bf16.msra.mxu0 %v1090
      %1502 = vmatpush.bf16.msra.mxu0 %v1086
      %1503 = vmatpush.bf16.msra.mxu0 %v1082
      %1504 = vmatpush.bf16.msra.mxu0 %v1078
      %1505 = vmatpush.bf16.msra.mxu0 %v1074
      %1506 = vmatpush.bf16.msra.mxu0 %v1070
      %1507 = vmatmul.bf16.gmra.mxu0 %v547
      %v1508 = vpop.f32.mrf.mxu0
      %v1509 = vadd.f32 %v1496, %v1508
      %v1510 = vpop.f32.mrf.mxu0
      %1511 = vdwg.mxu0
      %1512 = vmatpush.bf16.msra.mxu0 %v1130
      %1513 = vmatpush.bf16.msra.mxu0 %v1126
      %1514 = vmatpush.bf16.msra.mxu0 %v1122
      %1515 = vmatpush.bf16.msra.mxu0 %v1118
      %1516 = vmatpush.bf16.msra.mxu0 %v1114
      %1517 = vmatpush.bf16.msra.mxu0 %v1110
      %1518 = vmatpush.bf16.msra.mxu0 %v1106
      %1519 = vmatpush.bf16.msra.mxu0 %v1102
      %1520 = vmatmul.bf16.gmra.mxu0 %v548
      %v1521 = vpop.f32.mrf.mxu0
      %v1522 = vadd.f32 %v1509, %v1521
      %v1523 = vpop.f32.mrf.mxu0
      %1524 = vdwg.mxu0
      %1525 = vmatpush.bf16.msra.mxu0 %v1162
      %1526 = vmatpush.bf16.msra.mxu0 %v1158
      %1527 = vmatpush.bf16.msra.mxu0 %v1154
      %1528 = vmatpush.bf16.msra.mxu0 %v1150
      %1529 = vmatpush.bf16.msra.mxu0 %v1146
      %1530 = vmatpush.bf16.msra.mxu0 %v1142
      %1531 = vmatpush.bf16.msra.mxu0 %v1138
      %1532 = vmatpush.bf16.msra.mxu0 %v1134
      %1533 = vmatmul.bf16.gmra.mxu0 %v549
      %v1534 = vpop.f32.mrf.mxu0
      %v1535 = vadd.f32 %v1522, %v1534
      %v1536 = vpop.f32.mrf.mxu0
      %1537 = vdwg.mxu0
      %1538 = vmatpush.bf16.msra.mxu0 %v1194
      %1539 = vmatpush.bf16.msra.mxu0 %v1190
      %1540 = vmatpush.bf16.msra.mxu0 %v1186
      %1541 = vmatpush.bf16.msra.mxu0 %v1182
      %1542 = vmatpush.bf16.msra.mxu0 %v1178
      %1543 = vmatpush.bf16.msra.mxu0 %v1174
      %1544 = vmatpush.bf16.msra.mxu0 %v1170
      %1545 = vmatpush.bf16.msra.mxu0 %v1166
      %1546 = vmatmul.bf16.gmra.mxu0 %v550
      %v1547 = vpop.f32.mrf.mxu0
      %v1548 = vadd.f32 %v1535, %v1547
      %v1549 = vpop.f32.mrf.mxu0
      %1550 = vdwg.mxu0
      %1551 = vmatpush.bf16.msra.mxu0 %v1067
      %1552 = vmatpush.bf16.msra.mxu0 %v1063
      %1553 = vmatpush.bf16.msra.mxu0 %v1059
      %1554 = vmatpush.bf16.msra.mxu0 %v1055
      %1555 = vmatpush.bf16.msra.mxu0 %v1051
      %1556 = vmatpush.bf16.msra.mxu0 %v1047
      %1557 = vmatpush.bf16.msra.mxu0 %v1043
      %1558 = vmatpush.bf16.msra.mxu0 %v1039
      %1559 = vmatmul.bf16.gmra.mxu0 %v546
      %v1560 = vpop.f32.mrf.mxu0
      %v1561 = vadd.f32 0.0, %v1560
      %v1562 = vpop.f32.mrf.mxu0
      %1563 = vdwg.mxu0
      %1564 = vmatpush.bf16.msra.mxu0 %v1099
      %1565 = vmatpush.bf16.msra.mxu0 %v1095
      %1566 = vmatpush.bf16.msra.mxu0 %v1091
      %1567 = vmatpush.bf16.msra.mxu0 %v1087
      %1568 = vmatpush.bf16.msra.mxu0 %v1083
      %1569 = vmatpush.bf16.msra.mxu0 %v1079
      %1570 = vmatpush.bf16.msra.mxu0 %v1075
      %1571 = vmatpush.bf16.msra.mxu0 %v1071
      %1572 = vmatmul.bf16.gmra.mxu0 %v547
      %v1573 = vpop.f32.mrf.mxu0
      %v1574 = vadd.f32 %v1561, %v1573
      %v1575 = vpop.f32.mrf.mxu0
      %1576 = vdwg.mxu0
      %1577 = vmatpush.bf16.msra.mxu0 %v1131
      %1578 = vmatpush.bf16.msra.mxu0 %v1127
      %1579 = vmatpush.bf16.msra.mxu0 %v1123
      %1580 = vmatpush.bf16.msra.mxu0 %v1119
      %1581 = vmatpush.bf16.msra.mxu0 %v1115
      %1582 = vmatpush.bf16.msra.mxu0 %v1111
      %1583 = vmatpush.bf16.msra.mxu0 %v1107
      %1584 = vmatpush.bf16.msra.mxu0 %v1103
      %1585 = vmatmul.bf16.gmra.mxu0 %v548
      %v1586 = vpop.f32.mrf.mxu0
      %v1587 = vadd.f32 %v1574, %v1586
      %v1588 = vpop.f32.mrf.mxu0
      %1589 = vdwg.mxu0
      %1590 = vmatpush.bf16.msra.mxu0 %v1163
      %1591 = vmatpush.bf16.msra.mxu0 %v1159
      %1592 = vmatpush.bf16.msra.mxu0 %v1155
      %1593 = vmatpush.bf16.msra.mxu0 %v1151
      %1594 = vmatpush.bf16.msra.mxu0 %v1147
      %1595 = vmatpush.bf16.msra.mxu0 %v1143
      %1596 = vmatpush.bf16.msra.mxu0 %v1139
      %1597 = vmatpush.bf16.msra.mxu0 %v1135
      %1598 = vmatmul.bf16.gmra.mxu0 %v549
      %v1599 = vpop.f32.mrf.mxu0
      %v1600 = vadd.f32 %v1587, %v1599
      %v1601 = vpop.f32.mrf.mxu0
      %1602 = vdwg.mxu0
      %1603 = vmatpush.bf16.msra.mxu0 %v1195
      %1604 = vmatpush.bf16.msra.mxu0 %v1191
      %1605 = vmatpush.bf16.msra.mxu0 %v1187
      %1606 = vmatpush.bf16.msra.mxu0 %v1183
      %1607 = vmatpush.bf16.msra.mxu0 %v1179
      %1608 = vmatpush.bf16.msra.mxu0 %v1175
      %1609 = vmatpush.bf16.msra.mxu0 %v1171
      %1610 = vmatpush.bf16.msra.mxu0 %v1167
      %1611 = vmatmul.bf16.gmra.mxu0 %v550
      %v1612 = vpop.f32.mrf.mxu0
      %v1613 = vadd.f32 %v1600, %v1612
      %v1614 = vpop.f32.mrf.mxu0
      %1615 = vdwg.mxu0
      %v1616 = vadd.f32 %v371, %v1418
      %v1617 = vadd.f32 %v372, %v1483
      %v1618 = vadd.f32 %v373, %v1548
      %v1619 = vadd.f32 %v374, %v1613
      %1620 = vst [vmem:[#allocation2] sm:$0xff] %v1616
      %1621 = vst [vmem:[#allocation2 + $0x8] sm:$0xff] %v1617
      %1622 = vst [vmem:[#allocation2 + $0x10] sm:$0xff] %v1618
      %1623 = vst [vmem:[#allocation2 + $0x18] sm:$0xff] %v1619
      %p1624 = scmp.eq.s32.totalorder %s23, 4
      // Predicated region
      $region53: #{rnd_forward.7} parent=47 // pred_check
        %p1625 = pneg %p1624
      $region54: #{rnd_forward.7} parent=47 // pred_check_branch
        %1627 = sbr.rel (%p1625) target = $region56
      $region55: #{rnd_forward.7} parent=47 // pred_region
        %v1628 = vld [vmem:[#allocation2] sm:$0xff]
        %v1629 = vld [vmem:[#allocation2 + $0x8] sm:$0xff]
        %v1630 = vld [vmem:[#allocation2 + $0x10] sm:$0xff]
        %v1631 = vld [vmem:[#allocation2 + $0x18] sm:$0xff]
        %v1632 = vld [vmem:[%s357] sm:$0xf]
        %v1634 = vperm.slane %v1632, 0
        %v1635 = vperm.slane %v1632, 1
        %v1636 = vperm.slane %v1632, 2
        %v1637 = vperm.slane %v1632, 3
        %v1642 = vadd.f32 %v1628, %v1634
        %v1643 = vadd.f32 %v1629, %v1635
        %v1644 = vadd.f32 %v1630, %v1636
        %v1645 = vadd.f32 %v1631, %v1637
        %p1646 = scmp.eq.s32.totalorder %s22, 0
        // Predicated region
        $region57: #{rnd_forward.7} parent=55 // pred_check
          %p1647 = pneg %p1646
        $region58: #{rnd_forward.7} parent=55 // pred_check_branch
          %1649 = sbr.rel (%p1647) target = $region60
        $region59: #{rnd_forward.7} parent=55 // pred_region
          %v1650 = vmax.f32 %v1642, 0.0
          %v1651 = vmax.f32 %v1643, 0.0
          %v1652 = vmax.f32 %v1644, 0.0
          %v1653 = vmax.f32 %v1645, 0.0
          %v1654 = vpack.c.bf16 %v1650, %v1650
          %v1655 = vpack.c.bf16 %v1651, %v1651
          %v1656 = vpack.c.bf16 %v1652, %v1652
          %v1657 = vpack.c.bf16 %v1653, %v1653
          %v1658 = vld [vmem:[%s3] sm:$0xff]
          %v1659 = vld [vmem:[%s3 + $0x8] sm:$0xff]
          %v1660 = vld [vmem:[%s3 + $0x10] sm:$0xff]
          %v1661 = vld [vmem:[%s3 + $0x18] sm:$0xff]
          %v1662 = vld [vmem:[%s3 + $0x20] sm:$0xff]
          %v1663 = vld [vmem:[%s3 + $0x28] sm:$0xff]
          %v1664 = vld [vmem:[%s3 + $0x30] sm:$0xff]
          %v1665 = vld [vmem:[%s3 + $0x38] sm:$0xff]
          %v1666 = vld [vmem:[%s3 + $0x40] sm:$0xff]
          %v1667 = vld [vmem:[%s3 + $0x48] sm:$0xff]
          %v1668 = vld [vmem:[%s3 + $0x50] sm:$0xff]
          %v1669 = vld [vmem:[%s3 + $0x58] sm:$0xff]
          %v1670 = vld [vmem:[%s3 + $0x60] sm:$0xff]
          %v1671 = vld [vmem:[%s3 + $0x68] sm:$0xff]
          %v1672 = vld [vmem:[%s3 + $0x70] sm:$0xff]
          %v1673 = vld [vmem:[%s3 + $0x78] sm:$0xff]
          %v1674 = vld [vmem:[%s3 + $0x80] sm:$0xff]
          %v1675 = vld [vmem:[%s3 + $0x88] sm:$0xff]
          %v1676 = vld [vmem:[%s3 + $0x90] sm:$0xff]
          %v1677 = vld [vmem:[%s3 + $0x98] sm:$0xff]
          %v1678 = vld [vmem:[%s3 + $0xa0] sm:$0xff]
          %v1679 = vld [vmem:[%s3 + $0xa8] sm:$0xff]
          %v1680 = vld [vmem:[%s3 + $0xb0] sm:$0xff]
          %v1681 = vld [vmem:[%s3 + $0xb8] sm:$0xff]
          %v1682 = vld [vmem:[%s3 + $0xc0] sm:$0xff]
          %v1683 = vld [vmem:[%s3 + $0xc8] sm:$0xff]
          %v1684 = vld [vmem:[%s3 + $0xd0] sm:$0xff]
          %v1685 = vld [vmem:[%s3 + $0xd8] sm:$0xff]
          %v1686 = vld [vmem:[%s3 + $0xe0] sm:$0xff]
          %v1687 = vld [vmem:[%s3 + $0xe8] sm:$0xff]
          %v1688 = vld [vmem:[%s3 + $0xf0] sm:$0xff]
          %v1689 = vld [vmem:[%s3 + $0xf8] sm:$0xff]
          %v1690 = vld [vmem:[%s3 + $0x100] sm:$0xff]
          %v1691 = vld [vmem:[%s3 + $0x108] sm:$0xff]
          %v1692 = vld [vmem:[%s3 + $0x110] sm:$0xff]
          %v1693 = vld [vmem:[%s3 + $0x118] sm:$0xff]
          %v1694 = vld [vmem:[%s3 + $0x120] sm:$0xff]
          %v1695 = vld [vmem:[%s3 + $0x128] sm:$0xff]
          %v1696 = vld [vmem:[%s3 + $0x130] sm:$0xff]
          %v1697 = vld [vmem:[%s3 + $0x138] sm:$0xff]
          %v1698 = vld [vmem:[%s3 + $0x140] sm:$0xff]
          %v1699 = vld [vmem:[%s3 + $0x148] sm:$0xff]
          %v1700 = vld [vmem:[%s3 + $0x150] sm:$0xff]
          %v1701 = vld [vmem:[%s3 + $0x158] sm:$0xff]
          %v1702 = vld [vmem:[%s3 + $0x160] sm:$0xff]
          %v1703 = vld [vmem:[%s3 + $0x168] sm:$0xff]
          %v1704 = vld [vmem:[%s3 + $0x170] sm:$0xff]
          %v1705 = vld [vmem:[%s3 + $0x178] sm:$0xff]
          %v1706 = vld [vmem:[%s3 + $0x180] sm:$0xff]
          %v1707 = vld [vmem:[%s3 + $0x188] sm:$0xff]
          %v1708 = vld [vmem:[%s3 + $0x190] sm:$0xff]
          %v1709 = vld [vmem:[%s3 + $0x198] sm:$0xff]
          %v1710 = vld [vmem:[%s3 + $0x1a0] sm:$0xff]
          %v1711 = vld [vmem:[%s3 + $0x1a8] sm:$0xff]
          %v1712 = vld [vmem:[%s3 + $0x1b0] sm:$0xff]
          %v1713 = vld [vmem:[%s3 + $0x1b8] sm:$0xff]
          %v1714 = vld [vmem:[%s3 + $0x1c0] sm:$0xff]
          %v1715 = vld [vmem:[%s3 + $0x1c8] sm:$0xff]
          %v1716 = vld [vmem:[%s3 + $0x1d0] sm:$0xff]
          %v1717 = vld [vmem:[%s3 + $0x1d8] sm:$0xff]
          %v1718 = vld [vmem:[%s3 + $0x1e0] sm:$0xff]
          %v1719 = vld [vmem:[%s3 + $0x1e8] sm:$0xff]
          %v1720 = vld [vmem:[%s3 + $0x1f0] sm:$0xff]
          %v1721 = vld [vmem:[%s3 + $0x1f8] sm:$0xff]
          %v1722 = vld [vmem:[%s3 + $0x200] sm:$0xff]
          %v1723 = vld [vmem:[%s3 + $0x208] sm:$0xff]
          %v1724 = vld [vmem:[%s3 + $0x210] sm:$0xff]
          %v1725 = vld [vmem:[%s3 + $0x218] sm:$0xff]
          %v1726 = vld [vmem:[%s3 + $0x220] sm:$0xff]
          %v1727 = vld [vmem:[%s3 + $0x228] sm:$0xff]
          %v1728 = vld [vmem:[%s3 + $0x230] sm:$0xff]
          %v1729 = vld [vmem:[%s3 + $0x238] sm:$0xff]
          %v1730 = vld [vmem:[%s3 + $0x240] sm:$0xff]
          %v1731 = vld [vmem:[%s3 + $0x248] sm:$0xff]
          %v1732 = vld [vmem:[%s3 + $0x250] sm:$0xff]
          %v1733 = vld [vmem:[%s3 + $0x258] sm:$0xff]
          %v1734 = vld [vmem:[%s3 + $0x260] sm:$0xff]
          %v1735 = vld [vmem:[%s3 + $0x268] sm:$0xff]
          %v1736 = vld [vmem:[%s3 + $0x270] sm:$0xff]
          %v1737 = vld [vmem:[%s3 + $0x278] sm:$0xff]
          %v1738 = vld [vmem:[%s3 + $0x280] sm:$0xff]
          %v1739 = vld [vmem:[%s3 + $0x288] sm:$0xff]
          %v1740 = vld [vmem:[%s3 + $0x290] sm:$0xff]
          %v1741 = vld [vmem:[%s3 + $0x298] sm:$0xff]
          %v1742 = vld [vmem:[%s3 + $0x2a0] sm:$0xff]
          %v1743 = vld [vmem:[%s3 + $0x2a8] sm:$0xff]
          %v1744 = vld [vmem:[%s3 + $0x2b0] sm:$0xff]
          %v1745 = vld [vmem:[%s3 + $0x2b8] sm:$0xff]
          %v1746 = vld [vmem:[%s3 + $0x2c0] sm:$0xff]
          %v1747 = vld [vmem:[%s3 + $0x2c8] sm:$0xff]
          %v1748 = vld [vmem:[%s3 + $0x2d0] sm:$0xff]
          %v1749 = vld [vmem:[%s3 + $0x2d8] sm:$0xff]
          %v1750 = vld [vmem:[%s3 + $0x2e0] sm:$0xff]
          %v1751 = vld [vmem:[%s3 + $0x2e8] sm:$0xff]
          %v1752 = vld [vmem:[%s3 + $0x2f0] sm:$0xff]
          %v1753 = vld [vmem:[%s3 + $0x2f8] sm:$0xff]
          %v1754 = vld [vmem:[%s3 + $0x300] sm:$0xff]
          %v1755 = vld [vmem:[%s3 + $0x308] sm:$0xff]
          %v1756 = vld [vmem:[%s3 + $0x310] sm:$0xff]
          %v1757 = vld [vmem:[%s3 + $0x318] sm:$0xff]
          %v1758 = vld [vmem:[%s3 + $0x320] sm:$0xff]
          %v1759 = vld [vmem:[%s3 + $0x328] sm:$0xff]
          %v1760 = vld [vmem:[%s3 + $0x330] sm:$0xff]
          %v1761 = vld [vmem:[%s3 + $0x338] sm:$0xff]
          %v1762 = vld [vmem:[%s3 + $0x340] sm:$0xff]
          %v1763 = vld [vmem:[%s3 + $0x348] sm:$0xff]
          %v1764 = vld [vmem:[%s3 + $0x350] sm:$0xff]
          %v1765 = vld [vmem:[%s3 + $0x358] sm:$0xff]
          %v1766 = vld [vmem:[%s3 + $0x360] sm:$0xff]
          %v1767 = vld [vmem:[%s3 + $0x368] sm:$0xff]
          %v1768 = vld [vmem:[%s3 + $0x370] sm:$0xff]
          %v1769 = vld [vmem:[%s3 + $0x378] sm:$0xff]
          %v1770 = vld [vmem:[%s3 + $0x380] sm:$0xff]
          %v1771 = vld [vmem:[%s3 + $0x388] sm:$0xff]
          %v1772 = vld [vmem:[%s3 + $0x390] sm:$0xff]
          %v1773 = vld [vmem:[%s3 + $0x398] sm:$0xff]
          %v1774 = vld [vmem:[%s3 + $0x3a0] sm:$0xff]
          %v1775 = vld [vmem:[%s3 + $0x3a8] sm:$0xff]
          %v1776 = vld [vmem:[%s3 + $0x3b0] sm:$0xff]
          %v1777 = vld [vmem:[%s3 + $0x3b8] sm:$0xff]
          %v1778 = vld [vmem:[%s3 + $0x3c0] sm:$0xff]
          %v1779 = vld [vmem:[%s3 + $0x3c8] sm:$0xff]
          %v1780 = vld [vmem:[%s3 + $0x3d0] sm:$0xff]
          %v1781 = vld [vmem:[%s3 + $0x3d8] sm:$0xff]
          %v1782 = vld [vmem:[%s3 + $0x3e0] sm:$0xff]
          %v1783 = vld [vmem:[%s3 + $0x3e8] sm:$0xff]
          %v1784 = vld [vmem:[%s3 + $0x3f0] sm:$0xff]
          %v1785 = vld [vmem:[%s3 + $0x3f8] sm:$0xff]
          %v1786 = vld [vmem:[%s4] sm:$0xf]
          %v1788 = vperm.slane %v1786, 0
          %v1789 = vperm.slane %v1786, 1
          %v1790 = vperm.slane %v1786, 2
          %v1791 = vperm.slane %v1786, 3
          %v1924 = vunpack.c.l.b16 %v1658
          %v1925 = vunpack.c.h.b16 %v1658
          %v1926 = vunpack.c.l.b16 %v1659
          %v1927 = vunpack.c.h.b16 %v1659
          %v1928 = vunpack.c.l.b16 %v1660
          %v1929 = vunpack.c.h.b16 %v1660
          %v1930 = vunpack.c.l.b16 %v1661
          %v1931 = vunpack.c.h.b16 %v1661
          %v1932 = vunpack.c.l.b16 %v1662
          %v1933 = vunpack.c.h.b16 %v1662
          %v1934 = vunpack.c.l.b16 %v1663
          %v1935 = vunpack.c.h.b16 %v1663
          %v1936 = vunpack.c.l.b16 %v1664
          %v1937 = vunpack.c.h.b16 %v1664
          %v1938 = vunpack.c.l.b16 %v1665
          %v1939 = vunpack.c.h.b16 %v1665
          %v1940 = vunpack.c.l.b16 %v1666
          %v1941 = vunpack.c.h.b16 %v1666
          %v1942 = vunpack.c.l.b16 %v1667
          %v1943 = vunpack.c.h.b16 %v1667
          %v1944 = vunpack.c.l.b16 %v1668
          %v1945 = vunpack.c.h.b16 %v1668
          %v1946 = vunpack.c.l.b16 %v1669
          %v1947 = vunpack.c.h.b16 %v1669
          %v1948 = vunpack.c.l.b16 %v1670
          %v1949 = vunpack.c.h.b16 %v1670
          %v1950 = vunpack.c.l.b16 %v1671
          %v1951 = vunpack.c.h.b16 %v1671
          %v1952 = vunpack.c.l.b16 %v1672
          %v1953 = vunpack.c.h.b16 %v1672
          %v1954 = vunpack.c.l.b16 %v1673
          %v1955 = vunpack.c.h.b16 %v1673
          %v1956 = vunpack.c.l.b16 %v1674
          %v1957 = vunpack.c.h.b16 %v1674
          %v1958 = vunpack.c.l.b16 %v1675
          %v1959 = vunpack.c.h.b16 %v1675
          %v1960 = vunpack.c.l.b16 %v1676
          %v1961 = vunpack.c.h.b16 %v1676
          %v1962 = vunpack.c.l.b16 %v1677
          %v1963 = vunpack.c.h.b16 %v1677
          %v1964 = vunpack.c.l.b16 %v1678
          %v1965 = vunpack.c.h.b16 %v1678
          %v1966 = vunpack.c.l.b16 %v1679
          %v1967 = vunpack.c.h.b16 %v1679
          %v1968 = vunpack.c.l.b16 %v1680
          %v1969 = vunpack.c.h.b16 %v1680
          %v1970 = vunpack.c.l.b16 %v1681
          %v1971 = vunpack.c.h.b16 %v1681
          %v1972 = vunpack.c.l.b16 %v1682
          %v1973 = vunpack.c.h.b16 %v1682
          %v1974 = vunpack.c.l.b16 %v1683
          %v1975 = vunpack.c.h.b16 %v1683
          %v1976 = vunpack.c.l.b16 %v1684
          %v1977 = vunpack.c.h.b16 %v1684
          %v1978 = vunpack.c.l.b16 %v1685
          %v1979 = vunpack.c.h.b16 %v1685
          %v1980 = vunpack.c.l.b16 %v1686
          %v1981 = vunpack.c.h.b16 %v1686
          %v1982 = vunpack.c.l.b16 %v1687
          %v1983 = vunpack.c.h.b16 %v1687
          %v1984 = vunpack.c.l.b16 %v1688
          %v1985 = vunpack.c.h.b16 %v1688
          %v1986 = vunpack.c.l.b16 %v1689
          %v1987 = vunpack.c.h.b16 %v1689
          %v1988 = vunpack.c.l.b16 %v1690
          %v1989 = vunpack.c.h.b16 %v1690
          %v1990 = vunpack.c.l.b16 %v1691
          %v1991 = vunpack.c.h.b16 %v1691
          %v1992 = vunpack.c.l.b16 %v1692
          %v1993 = vunpack.c.h.b16 %v1692
          %v1994 = vunpack.c.l.b16 %v1693
          %v1995 = vunpack.c.h.b16 %v1693
          %v1996 = vunpack.c.l.b16 %v1694
          %v1997 = vunpack.c.h.b16 %v1694
          %v1998 = vunpack.c.l.b16 %v1695
          %v1999 = vunpack.c.h.b16 %v1695
          %v2000 = vunpack.c.l.b16 %v1696
          %v2001 = vunpack.c.h.b16 %v1696
          %v2002 = vunpack.c.l.b16 %v1697
          %v2003 = vunpack.c.h.b16 %v1697
          %v2004 = vunpack.c.l.b16 %v1698
          %v2005 = vunpack.c.h.b16 %v1698
          %v2006 = vunpack.c.l.b16 %v1699
          %v2007 = vunpack.c.h.b16 %v1699
          %v2008 = vunpack.c.l.b16 %v1700
          %v2009 = vunpack.c.h.b16 %v1700
          %v2010 = vunpack.c.l.b16 %v1701
          %v2011 = vunpack.c.h.b16 %v1701
          %v2012 = vunpack.c.l.b16 %v1702
          %v2013 = vunpack.c.h.b16 %v1702
          %v2014 = vunpack.c.l.b16 %v1703
          %v2015 = vunpack.c.h.b16 %v1703
          %v2016 = vunpack.c.l.b16 %v1704
          %v2017 = vunpack.c.h.b16 %v1704
          %v2018 = vunpack.c.l.b16 %v1705
          %v2019 = vunpack.c.h.b16 %v1705
          %v2020 = vunpack.c.l.b16 %v1706
          %v2021 = vunpack.c.h.b16 %v1706
          %v2022 = vunpack.c.l.b16 %v1707
          %v2023 = vunpack.c.h.b16 %v1707
          %v2024 = vunpack.c.l.b16 %v1708
          %v2025 = vunpack.c.h.b16 %v1708
          %v2026 = vunpack.c.l.b16 %v1709
          %v2027 = vunpack.c.h.b16 %v1709
          %v2028 = vunpack.c.l.b16 %v1710
          %v2029 = vunpack.c.h.b16 %v1710
          %v2030 = vunpack.c.l.b16 %v1711
          %v2031 = vunpack.c.h.b16 %v1711
          %v2032 = vunpack.c.l.b16 %v1712
          %v2033 = vunpack.c.h.b16 %v1712
          %v2034 = vunpack.c.l.b16 %v1713
          %v2035 = vunpack.c.h.b16 %v1713
          %v2036 = vunpack.c.l.b16 %v1714
          %v2037 = vunpack.c.h.b16 %v1714
          %v2038 = vunpack.c.l.b16 %v1715
          %v2039 = vunpack.c.h.b16 %v1715
          %v2040 = vunpack.c.l.b16 %v1716
          %v2041 = vunpack.c.h.b16 %v1716
          %v2042 = vunpack.c.l.b16 %v1717
          %v2043 = vunpack.c.h.b16 %v1717
          %v2044 = vunpack.c.l.b16 %v1718
          %v2045 = vunpack.c.h.b16 %v1718
          %v2046 = vunpack.c.l.b16 %v1719
          %v2047 = vunpack.c.h.b16 %v1719
          %v2048 = vunpack.c.l.b16 %v1720
          %v2049 = vunpack.c.h.b16 %v1720
          %v2050 = vunpack.c.l.b16 %v1721
          %v2051 = vunpack.c.h.b16 %v1721
          %v2052 = vunpack.c.l.b16 %v1722
          %v2053 = vunpack.c.h.b16 %v1722
          %v2054 = vunpack.c.l.b16 %v1723
          %v2055 = vunpack.c.h.b16 %v1723
          %v2056 = vunpack.c.l.b16 %v1724
          %v2057 = vunpack.c.h.b16 %v1724
          %v2058 = vunpack.c.l.b16 %v1725
          %v2059 = vunpack.c.h.b16 %v1725
          %v2060 = vunpack.c.l.b16 %v1726
          %v2061 = vunpack.c.h.b16 %v1726
          %v2062 = vunpack.c.l.b16 %v1727
          %v2063 = vunpack.c.h.b16 %v1727
          %v2064 = vunpack.c.l.b16 %v1728
          %v2065 = vunpack.c.h.b16 %v1728
          %v2066 = vunpack.c.l.b16 %v1729
          %v2067 = vunpack.c.h.b16 %v1729
          %v2068 = vunpack.c.l.b16 %v1730
          %v2069 = vunpack.c.h.b16 %v1730
          %v2070 = vunpack.c.l.b16 %v1731
          %v2071 = vunpack.c.h.b16 %v1731
          %v2072 = vunpack.c.l.b16 %v1732
          %v2073 = vunpack.c.h.b16 %v1732
          %v2074 = vunpack.c.l.b16 %v1733
          %v2075 = vunpack.c.h.b16 %v1733
          %v2076 = vunpack.c.l.b16 %v1734
          %v2077 = vunpack.c.h.b16 %v1734
          %v2078 = vunpack.c.l.b16 %v1735
          %v2079 = vunpack.c.h.b16 %v1735
          %v2080 = vunpack.c.l.b16 %v1736
          %v2081 = vunpack.c.h.b16 %v1736
          %v2082 = vunpack.c.l.b16 %v1737
          %v2083 = vunpack.c.h.b16 %v1737
          %v2084 = vunpack.c.l.b16 %v1738
          %v2085 = vunpack.c.h.b16 %v1738
          %v2086 = vunpack.c.l.b16 %v1739
          %v2087 = vunpack.c.h.b16 %v1739
          %v2088 = vunpack.c.l.b16 %v1740
          %v2089 = vunpack.c.h.b16 %v1740
          %v2090 = vunpack.c.l.b16 %v1741
          %v2091 = vunpack.c.h.b16 %v1741
          %v2092 = vunpack.c.l.b16 %v1742
          %v2093 = vunpack.c.h.b16 %v1742
          %v2094 = vunpack.c.l.b16 %v1743
          %v2095 = vunpack.c.h.b16 %v1743
          %v2096 = vunpack.c.l.b16 %v1744
          %v2097 = vunpack.c.h.b16 %v1744
          %v2098 = vunpack.c.l.b16 %v1745
          %v2099 = vunpack.c.h.b16 %v1745
          %v2100 = vunpack.c.l.b16 %v1746
          %v2101 = vunpack.c.h.b16 %v1746
          %v2102 = vunpack.c.l.b16 %v1747
          %v2103 = vunpack.c.h.b16 %v1747
          %v2104 = vunpack.c.l.b16 %v1748
          %v2105 = vunpack.c.h.b16 %v1748
          %v2106 = vunpack.c.l.b16 %v1749
          %v2107 = vunpack.c.h.b16 %v1749
          %v2108 = vunpack.c.l.b16 %v1750
          %v2109 = vunpack.c.h.b16 %v1750
          %v2110 = vunpack.c.l.b16 %v1751
          %v2111 = vunpack.c.h.b16 %v1751
          %v2112 = vunpack.c.l.b16 %v1752
          %v2113 = vunpack.c.h.b16 %v1752
          %v2114 = vunpack.c.l.b16 %v1753
          %v2115 = vunpack.c.h.b16 %v1753
          %v2116 = vunpack.c.l.b16 %v1754
          %v2117 = vunpack.c.h.b16 %v1754
          %v2118 = vunpack.c.l.b16 %v1755
          %v2119 = vunpack.c.h.b16 %v1755
          %v2120 = vunpack.c.l.b16 %v1756
          %v2121 = vunpack.c.h.b16 %v1756
          %v2122 = vunpack.c.l.b16 %v1757
          %v2123 = vunpack.c.h.b16 %v1757
          %v2124 = vunpack.c.l.b16 %v1758
          %v2125 = vunpack.c.h.b16 %v1758
          %v2126 = vunpack.c.l.b16 %v1759
          %v2127 = vunpack.c.h.b16 %v1759
          %v2128 = vunpack.c.l.b16 %v1760
          %v2129 = vunpack.c.h.b16 %v1760
          %v2130 = vunpack.c.l.b16 %v1761
          %v2131 = vunpack.c.h.b16 %v1761
          %v2132 = vunpack.c.l.b16 %v1762
          %v2133 = vunpack.c.h.b16 %v1762
          %v2134 = vunpack.c.l.b16 %v1763
          %v2135 = vunpack.c.h.b16 %v1763
          %v2136 = vunpack.c.l.b16 %v1764
          %v2137 = vunpack.c.h.b16 %v1764
          %v2138 = vunpack.c.l.b16 %v1765
          %v2139 = vunpack.c.h.b16 %v1765
          %v2140 = vunpack.c.l.b16 %v1766
          %v2141 = vunpack.c.h.b16 %v1766
          %v2142 = vunpack.c.l.b16 %v1767
          %v2143 = vunpack.c.h.b16 %v1767
          %v2144 = vunpack.c.l.b16 %v1768
          %v2145 = vunpack.c.h.b16 %v1768
          %v2146 = vunpack.c.l.b16 %v1769
          %v2147 = vunpack.c.h.b16 %v1769
          %v2148 = vunpack.c.l.b16 %v1770
          %v2149 = vunpack.c.h.b16 %v1770
          %v2150 = vunpack.c.l.b16 %v1771
          %v2151 = vunpack.c.h.b16 %v1771
          %v2152 = vunpack.c.l.b16 %v1772
          %v2153 = vunpack.c.h.b16 %v1772
          %v2154 = vunpack.c.l.b16 %v1773
          %v2155 = vunpack.c.h.b16 %v1773
          %v2156 = vunpack.c.l.b16 %v1774
          %v2157 = vunpack.c.h.b16 %v1774
          %v2158 = vunpack.c.l.b16 %v1775
          %v2159 = vunpack.c.h.b16 %v1775
          %v2160 = vunpack.c.l.b16 %v1776
          %v2161 = vunpack.c.h.b16 %v1776
          %v2162 = vunpack.c.l.b16 %v1777
          %v2163 = vunpack.c.h.b16 %v1777
          %v2164 = vunpack.c.l.b16 %v1778
          %v2165 = vunpack.c.h.b16 %v1778
          %v2166 = vunpack.c.l.b16 %v1779
          %v2167 = vunpack.c.h.b16 %v1779
          %v2168 = vunpack.c.l.b16 %v1780
          %v2169 = vunpack.c.h.b16 %v1780
          %v2170 = vunpack.c.l.b16 %v1781
          %v2171 = vunpack.c.h.b16 %v1781
          %v2172 = vunpack.c.l.b16 %v1782
          %v2173 = vunpack.c.h.b16 %v1782
          %v2174 = vunpack.c.l.b16 %v1783
          %v2175 = vunpack.c.h.b16 %v1783
          %v2176 = vunpack.c.l.b16 %v1784
          %v2177 = vunpack.c.h.b16 %v1784
          %v2178 = vunpack.c.l.b16 %v1785
          %v2179 = vunpack.c.h.b16 %v1785
          %v2180 = vpack.c.b16 %v1928, %v1924
          %v2181 = vpack.c.b16 %v1929, %v1925
          %v2182 = vpack.c.b16 %v1930, %v1926
          %v2183 = vpack.c.b16 %v1931, %v1927
          %v2184 = vpack.c.b16 %v1936, %v1932
          %v2185 = vpack.c.b16 %v1937, %v1933
          %v2186 = vpack.c.b16 %v1938, %v1934
          %v2187 = vpack.c.b16 %v1939, %v1935
          %v2188 = vpack.c.b16 %v1944, %v1940
          %v2189 = vpack.c.b16 %v1945, %v1941
          %v2190 = vpack.c.b16 %v1946, %v1942
          %v2191 = vpack.c.b16 %v1947, %v1943
          %v2192 = vpack.c.b16 %v1952, %v1948
          %v2193 = vpack.c.b16 %v1953, %v1949
          %v2194 = vpack.c.b16 %v1954, %v1950
          %v2195 = vpack.c.b16 %v1955, %v1951
          %v2196 = vpack.c.b16 %v1960, %v1956
          %v2197 = vpack.c.b16 %v1961, %v1957
          %v2198 = vpack.c.b16 %v1962, %v1958
          %v2199 = vpack.c.b16 %v1963, %v1959
          %v2200 = vpack.c.b16 %v1968, %v1964
          %v2201 = vpack.c.b16 %v1969, %v1965
          %v2202 = vpack.c.b16 %v1970, %v1966
          %v2203 = vpack.c.b16 %v1971, %v1967
          %v2204 = vpack.c.b16 %v1976, %v1972
          %v2205 = vpack.c.b16 %v1977, %v1973
          %v2206 = vpack.c.b16 %v1978, %v1974
          %v2207 = vpack.c.b16 %v1979, %v1975
          %v2208 = vpack.c.b16 %v1984, %v1980
          %v2209 = vpack.c.b16 %v1985, %v1981
          %v2210 = vpack.c.b16 %v1986, %v1982
          %v2211 = vpack.c.b16 %v1987, %v1983
          %v2212 = vpack.c.b16 %v1992, %v1988
          %v2213 = vpack.c.b16 %v1993, %v1989
          %v2214 = vpack.c.b16 %v1994, %v1990
          %v2215 = vpack.c.b16 %v1995, %v1991
          %v2216 = vpack.c.b16 %v2000, %v1996
          %v2217 = vpack.c.b16 %v2001, %v1997
          %v2218 = vpack.c.b16 %v2002, %v1998
          %v2219 = vpack.c.b16 %v2003, %v1999
          %v2220 = vpack.c.b16 %v2008, %v2004
          %v2221 = vpack.c.b16 %v2009, %v2005
          %v2222 = vpack.c.b16 %v2010, %v2006
          %v2223 = vpack.c.b16 %v2011, %v2007
          %v2224 = vpack.c.b16 %v2016, %v2012
          %v2225 = vpack.c.b16 %v2017, %v2013
          %v2226 = vpack.c.b16 %v2018, %v2014
          %v2227 = vpack.c.b16 %v2019, %v2015
          %v2228 = vpack.c.b16 %v2024, %v2020
          %v2229 = vpack.c.b16 %v2025, %v2021
          %v2230 = vpack.c.b16 %v2026, %v2022
          %v2231 = vpack.c.b16 %v2027, %v2023
          %v2232 = vpack.c.b16 %v2032, %v2028
          %v2233 = vpack.c.b16 %v2033, %v2029
          %v2234 = vpack.c.b16 %v2034, %v2030
          %v2235 = vpack.c.b16 %v2035, %v2031
          %v2236 = vpack.c.b16 %v2040, %v2036
          %v2237 = vpack.c.b16 %v2041, %v2037
          %v2238 = vpack.c.b16 %v2042, %v2038
          %v2239 = vpack.c.b16 %v2043, %v2039
          %v2240 = vpack.c.b16 %v2048, %v2044
          %v2241 = vpack.c.b16 %v2049, %v2045
          %v2242 = vpack.c.b16 %v2050, %v2046
          %v2243 = vpack.c.b16 %v2051, %v2047
          %v2244 = vpack.c.b16 %v2056, %v2052
          %v2245 = vpack.c.b16 %v2057, %v2053
          %v2246 = vpack.c.b16 %v2058, %v2054
          %v2247 = vpack.c.b16 %v2059, %v2055
          %v2248 = vpack.c.b16 %v2064, %v2060
          %v2249 = vpack.c.b16 %v2065, %v2061
          %v2250 = vpack.c.b16 %v2066, %v2062
          %v2251 = vpack.c.b16 %v2067, %v2063
          %v2252 = vpack.c.b16 %v2072, %v2068
          %v2253 = vpack.c.b16 %v2073, %v2069
          %v2254 = vpack.c.b16 %v2074, %v2070
          %v2255 = vpack.c.b16 %v2075, %v2071
          %v2256 = vpack.c.b16 %v2080, %v2076
          %v2257 = vpack.c.b16 %v2081, %v2077
          %v2258 = vpack.c.b16 %v2082, %v2078
          %v2259 = vpack.c.b16 %v2083, %v2079
          %v2260 = vpack.c.b16 %v2088, %v2084
          %v2261 = vpack.c.b16 %v2089, %v2085
          %v2262 = vpack.c.b16 %v2090, %v2086
          %v2263 = vpack.c.b16 %v2091, %v2087
          %v2264 = vpack.c.b16 %v2096, %v2092
          %v2265 = vpack.c.b16 %v2097, %v2093
          %v2266 = vpack.c.b16 %v2098, %v2094
          %v2267 = vpack.c.b16 %v2099, %v2095
          %v2268 = vpack.c.b16 %v2104, %v2100
          %v2269 = vpack.c.b16 %v2105, %v2101
          %v2270 = vpack.c.b16 %v2106, %v2102
          %v2271 = vpack.c.b16 %v2107, %v2103
          %v2272 = vpack.c.b16 %v2112, %v2108
          %v2273 = vpack.c.b16 %v2113, %v2109
          %v2274 = vpack.c.b16 %v2114, %v2110
          %v2275 = vpack.c.b16 %v2115, %v2111
          %v2276 = vpack.c.b16 %v2120, %v2116
          %v2277 = vpack.c.b16 %v2121, %v2117
          %v2278 = vpack.c.b16 %v2122, %v2118
          %v2279 = vpack.c.b16 %v2123, %v2119
          %v2280 = vpack.c.b16 %v2128, %v2124
          %v2281 = vpack.c.b16 %v2129, %v2125
          %v2282 = vpack.c.b16 %v2130, %v2126
          %v2283 = vpack.c.b16 %v2131, %v2127
          %v2284 = vpack.c.b16 %v2136, %v2132
          %v2285 = vpack.c.b16 %v2137, %v2133
          %v2286 = vpack.c.b16 %v2138, %v2134
          %v2287 = vpack.c.b16 %v2139, %v2135
          %v2288 = vpack.c.b16 %v2144, %v2140
          %v2289 = vpack.c.b16 %v2145, %v2141
          %v2290 = vpack.c.b16 %v2146, %v2142
          %v2291 = vpack.c.b16 %v2147, %v2143
          %v2292 = vpack.c.b16 %v2152, %v2148
          %v2293 = vpack.c.b16 %v2153, %v2149
          %v2294 = vpack.c.b16 %v2154, %v2150
          %v2295 = vpack.c.b16 %v2155, %v2151
          %v2296 = vpack.c.b16 %v2160, %v2156
          %v2297 = vpack.c.b16 %v2161, %v2157
          %v2298 = vpack.c.b16 %v2162, %v2158
          %v2299 = vpack.c.b16 %v2163, %v2159
          %v2300 = vpack.c.b16 %v2168, %v2164
          %v2301 = vpack.c.b16 %v2169, %v2165
          %v2302 = vpack.c.b16 %v2170, %v2166
          %v2303 = vpack.c.b16 %v2171, %v2167
          %v2304 = vpack.c.b16 %v2176, %v2172
          %v2305 = vpack.c.b16 %v2177, %v2173
          %v2306 = vpack.c.b16 %v2178, %v2174
          %v2307 = vpack.c.b16 %v2179, %v2175
          %2436 = vmatpush.bf16.msra.mxu0 %v2208
          %2437 = vmatpush.bf16.msra.mxu0 %v2204
          %2438 = vmatpush.bf16.msra.mxu0 %v2200
          %2439 = vmatpush.bf16.msra.mxu0 %v2196
          %2440 = vmatpush.bf16.msra.mxu0 %v2192
          %2441 = vmatpush.bf16.msra.mxu0 %v2188
          %2442 = vmatpush.bf16.msra.mxu0 %v2184
          %2443 = vmatpush.bf16.msra.mxu0 %v2180
          %2444 = vmatmul.bf16.gmra.mxu0 %v1654
          %v2445 = vpop.f32.mrf.mxu0
          %v2446 = vadd.f32 %v1788, %v2445
          %v2447 = vpop.f32.mrf.mxu0
          %2448 = vdwg.mxu0
          %2449 = vmatpush.bf16.msra.mxu0 %v2240
          %2450 = vmatpush.bf16.msra.mxu0 %v2236
          %2451 = vmatpush.bf16.msra.mxu0 %v2232
          %2452 = vmatpush.bf16.msra.mxu0 %v2228
          %2453 = vmatpush.bf16.msra.mxu0 %v2224
          %2454 = vmatpush.bf16.msra.mxu0 %v2220
          %2455 = vmatpush.bf16.msra.mxu0 %v2216
          %2456 = vmatpush.bf16.msra.mxu0 %v2212
          %2457 = vmatmul.bf16.gmra.mxu0 %v1655
          %v2458 = vpop.f32.mrf.mxu0
          %v2459 = vadd.f32 %v2446, %v2458
          %v2460 = vpop.f32.mrf.mxu0
          %2461 = vdwg.mxu0
          %2462 = vmatpush.bf16.msra.mxu0 %v2272
          %2463 = vmatpush.bf16.msra.mxu0 %v2268
          %2464 = vmatpush.bf16.msra.mxu0 %v2264
          %2465 = vmatpush.bf16.msra.mxu0 %v2260
          %2466 = vmatpush.bf16.msra.mxu0 %v2256
          %2467 = vmatpush.bf16.msra.mxu0 %v2252
          %2468 = vmatpush.bf16.msra.mxu0 %v2248
          %2469 = vmatpush.bf16.msra.mxu0 %v2244
          %2470 = vmatmul.bf16.gmra.mxu0 %v1656
          %v2471 = vpop.f32.mrf.mxu0
          %v2472 = vadd.f32 %v2459, %v2471
          %v2473 = vpop.f32.mrf.mxu0
          %2474 = vdwg.mxu0
          %2475 = vmatpush.bf16.msra.mxu0 %v2304
          %2476 = vmatpush.bf16.msra.mxu0 %v2300
          %2477 = vmatpush.bf16.msra.mxu0 %v2296
          %2478 = vmatpush.bf16.msra.mxu0 %v2292
          %2479 = vmatpush.bf16.msra.mxu0 %v2288
          %2480 = vmatpush.bf16.msra.mxu0 %v2284
          %2481 = vmatpush.bf16.msra.mxu0 %v2280
          %2482 = vmatpush.bf16.msra.mxu0 %v2276
          %2483 = vmatmul.bf16.gmra.mxu0 %v1657
          %v2484 = vpop.f32.mrf.mxu0
          %v2485 = vadd.f32 %v2472, %v2484
          %v2486 = vpop.f32.mrf.mxu0
          %2487 = vdwg.mxu0
          %2488 = vmatpush.bf16.msra.mxu0 %v2209
          %2489 = vmatpush.bf16.msra.mxu0 %v2205
          %2490 = vmatpush.bf16.msra.mxu0 %v2201
          %2491 = vmatpush.bf16.msra.mxu0 %v2197
          %2492 = vmatpush.bf16.msra.mxu0 %v2193
          %2493 = vmatpush.bf16.msra.mxu0 %v2189
          %2494 = vmatpush.bf16.msra.mxu0 %v2185
          %2495 = vmatpush.bf16.msra.mxu0 %v2181
          %2496 = vmatmul.bf16.gmra.mxu0 %v1654
          %v2497 = vpop.f32.mrf.mxu0
          %v2498 = vadd.f32 %v1789, %v2497
          %v2499 = vpop.f32.mrf.mxu0
          %2500 = vdwg.mxu0
          %2501 = vmatpush.bf16.msra.mxu0 %v2241
          %2502 = vmatpush.bf16.msra.mxu0 %v2237
          %2503 = vmatpush.bf16.msra.mxu0 %v2233
          %2504 = vmatpush.bf16.msra.mxu0 %v2229
          %2505 = vmatpush.bf16.msra.mxu0 %v2225
          %2506 = vmatpush.bf16.msra.mxu0 %v2221
          %2507 = vmatpush.bf16.msra.mxu0 %v2217
          %2508 = vmatpush.bf16.msra.mxu0 %v2213
          %2509 = vmatmul.bf16.gmra.mxu0 %v1655
          %v2510 = vpop.f32.mrf.mxu0
          %v2511 = vadd.f32 %v2498, %v2510
          %v2512 = vpop.f32.mrf.mxu0
          %2513 = vdwg.mxu0
          %2514 = vmatpush.bf16.msra.mxu0 %v2273
          %2515 = vmatpush.bf16.msra.mxu0 %v2269
          %2516 = vmatpush.bf16.msra.mxu0 %v2265
          %2517 = vmatpush.bf16.msra.mxu0 %v2261
          %2518 = vmatpush.bf16.msra.mxu0 %v2257
          %2519 = vmatpush.bf16.msra.mxu0 %v2253
          %2520 = vmatpush.bf16.msra.mxu0 %v2249
          %2521 = vmatpush.bf16.msra.mxu0 %v2245
          %2522 = vmatmul.bf16.gmra.mxu0 %v1656
          %v2523 = vpop.f32.mrf.mxu0
          %v2524 = vadd.f32 %v2511, %v2523
          %v2525 = vpop.f32.mrf.mxu0
          %2526 = vdwg.mxu0
          %2527 = vmatpush.bf16.msra.mxu0 %v2305
          %2528 = vmatpush.bf16.msra.mxu0 %v2301
          %2529 = vmatpush.bf16.msra.mxu0 %v2297
          %2530 = vmatpush.bf16.msra.mxu0 %v2293
          %2531 = vmatpush.bf16.msra.mxu0 %v2289
          %2532 = vmatpush.bf16.msra.mxu0 %v2285
          %2533 = vmatpush.bf16.msra.mxu0 %v2281
          %2534 = vmatpush.bf16.msra.mxu0 %v2277
          %2535 = vmatmul.bf16.gmra.mxu0 %v1657
          %v2536 = vpop.f32.mrf.mxu0
          %v2537 = vadd.f32 %v2524, %v2536
          %v2538 = vpop.f32.mrf.mxu0
          %2539 = vdwg.mxu0
          %2540 = vmatpush.bf16.msra.mxu0 %v2210
          %2541 = vmatpush.bf16.msra.mxu0 %v2206
          %2542 = vmatpush.bf16.msra.mxu0 %v2202
          %2543 = vmatpush.bf16.msra.mxu0 %v2198
          %2544 = vmatpush.bf16.msra.mxu0 %v2194
          %2545 = vmatpush.bf16.msra.mxu0 %v2190
          %2546 = vmatpush.bf16.msra.mxu0 %v2186
          %2547 = vmatpush.bf16.msra.mxu0 %v2182
          %2548 = vmatmul.bf16.gmra.mxu0 %v1654
          %v2549 = vpop.f32.mrf.mxu0
          %v2550 = vadd.f32 %v1790, %v2549
          %v2551 = vpop.f32.mrf.mxu0
          %2552 = vdwg.mxu0
          %2553 = vmatpush.bf16.msra.mxu0 %v2242
          %2554 = vmatpush.bf16.msra.mxu0 %v2238
          %2555 = vmatpush.bf16.msra.mxu0 %v2234
          %2556 = vmatpush.bf16.msra.mxu0 %v2230
          %2557 = vmatpush.bf16.msra.mxu0 %v2226
          %2558 = vmatpush.bf16.msra.mxu0 %v2222
          %2559 = vmatpush.bf16.msra.mxu0 %v2218
          %2560 = vmatpush.bf16.msra.mxu0 %v2214
          %2561 = vmatmul.bf16.gmra.mxu0 %v1655
          %v2562 = vpop.f32.mrf.mxu0
          %v2563 = vadd.f32 %v2550, %v2562
          %v2564 = vpop.f32.mrf.mxu0
          %2565 = vdwg.mxu0
          %2566 = vmatpush.bf16.msra.mxu0 %v2274
          %2567 = vmatpush.bf16.msra.mxu0 %v2270
          %2568 = vmatpush.bf16.msra.mxu0 %v2266
          %2569 = vmatpush.bf16.msra.mxu0 %v2262
          %2570 = vmatpush.bf16.msra.mxu0 %v2258
          %2571 = vmatpush.bf16.msra.mxu0 %v2254
          %2572 = vmatpush.bf16.msra.mxu0 %v2250
          %2573 = vmatpush.bf16.msra.mxu0 %v2246
          %2574 = vmatmul.bf16.gmra.mxu0 %v1656
          %v2575 = vpop.f32.mrf.mxu0
          %v2576 = vadd.f32 %v2563, %v2575
          %v2577 = vpop.f32.mrf.mxu0
          %2578 = vdwg.mxu0
          %2579 = vmatpush.bf16.msra.mxu0 %v2306
          %2580 = vmatpush.bf16.msra.mxu0 %v2302
          %2581 = vmatpush.bf16.msra.mxu0 %v2298
          %2582 = vmatpush.bf16.msra.mxu0 %v2294
          %2583 = vmatpush.bf16.msra.mxu0 %v2290
          %2584 = vmatpush.bf16.msra.mxu0 %v2286
          %2585 = vmatpush.bf16.msra.mxu0 %v2282
          %2586 = vmatpush.bf16.msra.mxu0 %v2278
          %2587 = vmatmul.bf16.gmra.mxu0 %v1657
          %v2588 = vpop.f32.mrf.mxu0
          %v2589 = vadd.f32 %v2576, %v2588
          %v2590 = vpop.f32.mrf.mxu0
          %2591 = vdwg.mxu0
          %2592 = vmatpush.bf16.msra.mxu0 %v2211
          %2593 = vmatpush.bf16.msra.mxu0 %v2207
          %2594 = vmatpush.bf16.msra.mxu0 %v2203
          %2595 = vmatpush.bf16.msra.mxu0 %v2199
          %2596 = vmatpush.bf16.msra.mxu0 %v2195
          %2597 = vmatpush.bf16.msra.mxu0 %v2191
          %2598 = vmatpush.bf16.msra.mxu0 %v2187
          %2599 = vmatpush.bf16.msra.mxu0 %v2183
          %2600 = vmatmul.bf16.gmra.mxu0 %v1654
          %v2601 = vpop.f32.mrf.mxu0
          %v2602 = vadd.f32 %v1791, %v2601
          %v2603 = vpop.f32.mrf.mxu0
          %2604 = vdwg.mxu0
          %2605 = vmatpush.bf16.msra.mxu0 %v2243
          %2606 = vmatpush.bf16.msra.mxu0 %v2239
          %2607 = vmatpush.bf16.msra.mxu0 %v2235
          %2608 = vmatpush.bf16.msra.mxu0 %v2231
          %2609 = vmatpush.bf16.msra.mxu0 %v2227
          %2610 = vmatpush.bf16.msra.mxu0 %v2223
          %2611 = vmatpush.bf16.msra.mxu0 %v2219
          %2612 = vmatpush.bf16.msra.mxu0 %v2215
          %2613 = vmatmul.bf16.gmra.mxu0 %v1655
          %v2614 = vpop.f32.mrf.mxu0
          %v2615 = vadd.f32 %v2602, %v2614
          %v2616 = vpop.f32.mrf.mxu0
          %2617 = vdwg.mxu0
          %2618 = vmatpush.bf16.msra.mxu0 %v2275
          %2619 = vmatpush.bf16.msra.mxu0 %v2271
          %2620 = vmatpush.bf16.msra.mxu0 %v2267
          %2621 = vmatpush.bf16.msra.mxu0 %v2263
          %2622 = vmatpush.bf16.msra.mxu0 %v2259
          %2623 = vmatpush.bf16.msra.mxu0 %v2255
          %2624 = vmatpush.bf16.msra.mxu0 %v2251
          %2625 = vmatpush.bf16.msra.mxu0 %v2247
          %2626 = vmatmul.bf16.gmra.mxu0 %v1656
          %v2627 = vpop.f32.mrf.mxu0
          %v2628 = vadd.f32 %v2615, %v2627
          %v2629 = vpop.f32.mrf.mxu0
          %2630 = vdwg.mxu0
          %2631 = vmatpush.bf16.msra.mxu0 %v2307
          %2632 = vmatpush.bf16.msra.mxu0 %v2303
          %2633 = vmatpush.bf16.msra.mxu0 %v2299
          %2634 = vmatpush.bf16.msra.mxu0 %v2295
          %2635 = vmatpush.bf16.msra.mxu0 %v2291
          %2636 = vmatpush.bf16.msra.mxu0 %v2287
          %2637 = vmatpush.bf16.msra.mxu0 %v2283
          %2638 = vmatpush.bf16.msra.mxu0 %v2279
          %2639 = vmatmul.bf16.gmra.mxu0 %v1657
          %v2640 = vpop.f32.mrf.mxu0
          %v2641 = vadd.f32 %v2628, %v2640
          %v2642 = vpop.f32.mrf.mxu0
          %2643 = vdwg.mxu0
          %v2644 = vmax.f32 %v2485, 0.0
          %v2645 = vmax.f32 %v2537, 0.0
          %v2646 = vmax.f32 %v2589, 0.0
          %v2647 = vmax.f32 %v2641, 0.0
          %v2648 = vpack.c.bf16 %v2644, %v2644
          %v2649 = vpack.c.bf16 %v2645, %v2645
          %v2650 = vpack.c.bf16 %v2646, %v2646
          %v2651 = vpack.c.bf16 %v2647, %v2647
          %v2652 = vld [vmem:[%s5] sm:$0xff]
          %v2653 = vld [vmem:[%s5 + $0x8] sm:$0xff]
          %v2654 = vld [vmem:[%s5 + $0x10] sm:$0xff]
          %v2655 = vld [vmem:[%s5 + $0x18] sm:$0xff]
          %v2656 = vld [vmem:[%s5 + $0x20] sm:$0xff]
          %v2657 = vld [vmem:[%s5 + $0x28] sm:$0xff]
          %v2658 = vld [vmem:[%s5 + $0x30] sm:$0xff]
          %v2659 = vld [vmem:[%s5 + $0x38] sm:$0xff]
          %v2660 = vld [vmem:[%s5 + $0x40] sm:$0xff]
          %v2661 = vld [vmem:[%s5 + $0x48] sm:$0xff]
          %v2662 = vld [vmem:[%s5 + $0x50] sm:$0xff]
          %v2663 = vld [vmem:[%s5 + $0x58] sm:$0xff]
          %v2664 = vld [vmem:[%s5 + $0x60] sm:$0xff]
          %v2665 = vld [vmem:[%s5 + $0x68] sm:$0xff]
          %v2666 = vld [vmem:[%s5 + $0x70] sm:$0xff]
          %v2667 = vld [vmem:[%s5 + $0x78] sm:$0xff]
          %v2668 = vld [vmem:[%s5 + $0x80] sm:$0xff]
          %v2669 = vld [vmem:[%s5 + $0x88] sm:$0xff]
          %v2670 = vld [vmem:[%s5 + $0x90] sm:$0xff]
          %v2671 = vld [vmem:[%s5 + $0x98] sm:$0xff]
          %v2672 = vld [vmem:[%s5 + $0xa0] sm:$0xff]
          %v2673 = vld [vmem:[%s5 + $0xa8] sm:$0xff]
          %v2674 = vld [vmem:[%s5 + $0xb0] sm:$0xff]
          %v2675 = vld [vmem:[%s5 + $0xb8] sm:$0xff]
          %v2676 = vld [vmem:[%s5 + $0xc0] sm:$0xff]
          %v2677 = vld [vmem:[%s5 + $0xc8] sm:$0xff]
          %v2678 = vld [vmem:[%s5 + $0xd0] sm:$0xff]
          %v2679 = vld [vmem:[%s5 + $0xd8] sm:$0xff]
          %v2680 = vld [vmem:[%s5 + $0xe0] sm:$0xff]
          %v2681 = vld [vmem:[%s5 + $0xe8] sm:$0xff]
          %v2682 = vld [vmem:[%s5 + $0xf0] sm:$0xff]
          %v2683 = vld [vmem:[%s5 + $0xf8] sm:$0xff]
          %v2684 = vld [vmem:[%s5 + $0x100] sm:$0xff]
          %v2685 = vld [vmem:[%s5 + $0x108] sm:$0xff]
          %v2686 = vld [vmem:[%s5 + $0x110] sm:$0xff]
          %v2687 = vld [vmem:[%s5 + $0x118] sm:$0xff]
          %v2688 = vld [vmem:[%s5 + $0x120] sm:$0xff]
          %v2689 = vld [vmem:[%s5 + $0x128] sm:$0xff]
          %v2690 = vld [vmem:[%s5 + $0x130] sm:$0xff]
          %v2691 = vld [vmem:[%s5 + $0x138] sm:$0xff]
          %v2692 = vld [vmem:[%s5 + $0x140] sm:$0xff]
          %v2693 = vld [vmem:[%s5 + $0x148] sm:$0xff]
          %v2694 = vld [vmem:[%s5 + $0x150] sm:$0xff]
          %v2695 = vld [vmem:[%s5 + $0x158] sm:$0xff]
          %v2696 = vld [vmem:[%s5 + $0x160] sm:$0xff]
          %v2697 = vld [vmem:[%s5 + $0x168] sm:$0xff]
          %v2698 = vld [vmem:[%s5 + $0x170] sm:$0xff]
          %v2699 = vld [vmem:[%s5 + $0x178] sm:$0xff]
          %v2700 = vld [vmem:[%s5 + $0x180] sm:$0xff]
          %v2701 = vld [vmem:[%s5 + $0x188] sm:$0xff]
          %v2702 = vld [vmem:[%s5 + $0x190] sm:$0xff]
          %v2703 = vld [vmem:[%s5 + $0x198] sm:$0xff]
          %v2704 = vld [vmem:[%s5 + $0x1a0] sm:$0xff]
          %v2705 = vld [vmem:[%s5 + $0x1a8] sm:$0xff]
          %v2706 = vld [vmem:[%s5 + $0x1b0] sm:$0xff]
          %v2707 = vld [vmem:[%s5 + $0x1b8] sm:$0xff]
          %v2708 = vld [vmem:[%s5 + $0x1c0] sm:$0xff]
          %v2709 = vld [vmem:[%s5 + $0x1c8] sm:$0xff]
          %v2710 = vld [vmem:[%s5 + $0x1d0] sm:$0xff]
          %v2711 = vld [vmem:[%s5 + $0x1d8] sm:$0xff]
          %v2712 = vld [vmem:[%s5 + $0x1e0] sm:$0xff]
          %v2713 = vld [vmem:[%s5 + $0x1e8] sm:$0xff]
          %v2714 = vld [vmem:[%s5 + $0x1f0] sm:$0xff]
          %v2715 = vld [vmem:[%s5 + $0x1f8] sm:$0xff]
          %v2716 = vld [vmem:[%s5 + $0x200] sm:$0xff]
          %v2717 = vld [vmem:[%s5 + $0x208] sm:$0xff]
          %v2718 = vld [vmem:[%s5 + $0x210] sm:$0xff]
          %v2719 = vld [vmem:[%s5 + $0x218] sm:$0xff]
          %v2720 = vld [vmem:[%s5 + $0x220] sm:$0xff]
          %v2721 = vld [vmem:[%s5 + $0x228] sm:$0xff]
          %v2722 = vld [vmem:[%s5 + $0x230] sm:$0xff]
          %v2723 = vld [vmem:[%s5 + $0x238] sm:$0xff]
          %v2724 = vld [vmem:[%s5 + $0x240] sm:$0xff]
          %v2725 = vld [vmem:[%s5 + $0x248] sm:$0xff]
          %v2726 = vld [vmem:[%s5 + $0x250] sm:$0xff]
          %v2727 = vld [vmem:[%s5 + $0x258] sm:$0xff]
          %v2728 = vld [vmem:[%s5 + $0x260] sm:$0xff]
          %v2729 = vld [vmem:[%s5 + $0x268] sm:$0xff]
          %v2730 = vld [vmem:[%s5 + $0x270] sm:$0xff]
          %v2731 = vld [vmem:[%s5 + $0x278] sm:$0xff]
          %v2732 = vld [vmem:[%s5 + $0x280] sm:$0xff]
          %v2733 = vld [vmem:[%s5 + $0x288] sm:$0xff]
          %v2734 = vld [vmem:[%s5 + $0x290] sm:$0xff]
          %v2735 = vld [vmem:[%s5 + $0x298] sm:$0xff]
          %v2736 = vld [vmem:[%s5 + $0x2a0] sm:$0xff]
          %v2737 = vld [vmem:[%s5 + $0x2a8] sm:$0xff]
          %v2738 = vld [vmem:[%s5 + $0x2b0] sm:$0xff]
          %v2739 = vld [vmem:[%s5 + $0x2b8] sm:$0xff]
          %v2740 = vld [vmem:[%s5 + $0x2c0] sm:$0xff]
          %v2741 = vld [vmem:[%s5 + $0x2c8] sm:$0xff]
          %v2742 = vld [vmem:[%s5 + $0x2d0] sm:$0xff]
          %v2743 = vld [vmem:[%s5 + $0x2d8] sm:$0xff]
          %v2744 = vld [vmem:[%s5 + $0x2e0] sm:$0xff]
          %v2745 = vld [vmem:[%s5 + $0x2e8] sm:$0xff]
          %v2746 = vld [vmem:[%s5 + $0x2f0] sm:$0xff]
          %v2747 = vld [vmem:[%s5 + $0x2f8] sm:$0xff]
          %v2748 = vld [vmem:[%s5 + $0x300] sm:$0xff]
          %v2749 = vld [vmem:[%s5 + $0x308] sm:$0xff]
          %v2750 = vld [vmem:[%s5 + $0x310] sm:$0xff]
          %v2751 = vld [vmem:[%s5 + $0x318] sm:$0xff]
          %v2752 = vld [vmem:[%s5 + $0x320] sm:$0xff]
          %v2753 = vld [vmem:[%s5 + $0x328] sm:$0xff]
          %v2754 = vld [vmem:[%s5 + $0x330] sm:$0xff]
          %v2755 = vld [vmem:[%s5 + $0x338] sm:$0xff]
          %v2756 = vld [vmem:[%s5 + $0x340] sm:$0xff]
          %v2757 = vld [vmem:[%s5 + $0x348] sm:$0xff]
          %v2758 = vld [vmem:[%s5 + $0x350] sm:$0xff]
          %v2759 = vld [vmem:[%s5 + $0x358] sm:$0xff]
          %v2760 = vld [vmem:[%s5 + $0x360] sm:$0xff]
          %v2761 = vld [vmem:[%s5 + $0x368] sm:$0xff]
          %v2762 = vld [vmem:[%s5 + $0x370] sm:$0xff]
          %v2763 = vld [vmem:[%s5 + $0x378] sm:$0xff]
          %v2764 = vld [vmem:[%s5 + $0x380] sm:$0xff]
          %v2765 = vld [vmem:[%s5 + $0x388] sm:$0xff]
          %v2766 = vld [vmem:[%s5 + $0x390] sm:$0xff]
          %v2767 = vld [vmem:[%s5 + $0x398] sm:$0xff]
          %v2768 = vld [vmem:[%s5 + $0x3a0] sm:$0xff]
          %v2769 = vld [vmem:[%s5 + $0x3a8] sm:$0xff]
          %v2770 = vld [vmem:[%s5 + $0x3b0] sm:$0xff]
          %v2771 = vld [vmem:[%s5 + $0x3b8] sm:$0xff]
          %v2772 = vld [vmem:[%s5 + $0x3c0] sm:$0xff]
          %v2773 = vld [vmem:[%s5 + $0x3c8] sm:$0xff]
          %v2774 = vld [vmem:[%s5 + $0x3d0] sm:$0xff]
          %v2775 = vld [vmem:[%s5 + $0x3d8] sm:$0xff]
          %v2776 = vld [vmem:[%s5 + $0x3e0] sm:$0xff]
          %v2777 = vld [vmem:[%s5 + $0x3e8] sm:$0xff]
          %v2778 = vld [vmem:[%s5 + $0x3f0] sm:$0xff]
          %v2779 = vld [vmem:[%s5 + $0x3f8] sm:$0xff]
          %v2780 = vld [vmem:[%s6] sm:$0xf]
          %v2782 = vperm.slane %v2780, 0
          %v2783 = vperm.slane %v2780, 1
          %v2784 = vperm.slane %v2780, 2
          %v2785 = vperm.slane %v2780, 3
          %v2918 = vunpack.c.l.b16 %v2652
          %v2919 = vunpack.c.h.b16 %v2652
          %v2920 = vunpack.c.l.b16 %v2653
          %v2921 = vunpack.c.h.b16 %v2653
          %v2922 = vunpack.c.l.b16 %v2654
          %v2923 = vunpack.c.h.b16 %v2654
          %v2924 = vunpack.c.l.b16 %v2655
          %v2925 = vunpack.c.h.b16 %v2655
          %v2926 = vunpack.c.l.b16 %v2656
          %v2927 = vunpack.c.h.b16 %v2656
          %v2928 = vunpack.c.l.b16 %v2657
          %v2929 = vunpack.c.h.b16 %v2657
          %v2930 = vunpack.c.l.b16 %v2658
          %v2931 = vunpack.c.h.b16 %v2658
          %v2932 = vunpack.c.l.b16 %v2659
          %v2933 = vunpack.c.h.b16 %v2659
          %v2934 = vunpack.c.l.b16 %v2660
          %v2935 = vunpack.c.h.b16 %v2660
          %v2936 = vunpack.c.l.b16 %v2661
          %v2937 = vunpack.c.h.b16 %v2661
          %v2938 = vunpack.c.l.b16 %v2662
          %v2939 = vunpack.c.h.b16 %v2662
          %v2940 = vunpack.c.l.b16 %v2663
          %v2941 = vunpack.c.h.b16 %v2663
          %v2942 = vunpack.c.l.b16 %v2664
          %v2943 = vunpack.c.h.b16 %v2664
          %v2944 = vunpack.c.l.b16 %v2665
          %v2945 = vunpack.c.h.b16 %v2665
          %v2946 = vunpack.c.l.b16 %v2666
          %v2947 = vunpack.c.h.b16 %v2666
          %v2948 = vunpack.c.l.b16 %v2667
          %v2949 = vunpack.c.h.b16 %v2667
          %v2950 = vunpack.c.l.b16 %v2668
          %v2951 = vunpack.c.h.b16 %v2668
          %v2952 = vunpack.c.l.b16 %v2669
          %v2953 = vunpack.c.h.b16 %v2669
          %v2954 = vunpack.c.l.b16 %v2670
          %v2955 = vunpack.c.h.b16 %v2670
          %v2956 = vunpack.c.l.b16 %v2671
          %v2957 = vunpack.c.h.b16 %v2671
          %v2958 = vunpack.c.l.b16 %v2672
          %v2959 = vunpack.c.h.b16 %v2672
          %v2960 = vunpack.c.l.b16 %v2673
          %v2961 = vunpack.c.h.b16 %v2673
          %v2962 = vunpack.c.l.b16 %v2674
          %v2963 = vunpack.c.h.b16 %v2674
          %v2964 = vunpack.c.l.b16 %v2675
          %v2965 = vunpack.c.h.b16 %v2675
          %v2966 = vunpack.c.l.b16 %v2676
          %v2967 = vunpack.c.h.b16 %v2676
          %v2968 = vunpack.c.l.b16 %v2677
          %v2969 = vunpack.c.h.b16 %v2677
          %v2970 = vunpack.c.l.b16 %v2678
          %v2971 = vunpack.c.h.b16 %v2678
          %v2972 = vunpack.c.l.b16 %v2679
          %v2973 = vunpack.c.h.b16 %v2679
          %v2974 = vunpack.c.l.b16 %v2680
          %v2975 = vunpack.c.h.b16 %v2680
          %v2976 = vunpack.c.l.b16 %v2681
          %v2977 = vunpack.c.h.b16 %v2681
          %v2978 = vunpack.c.l.b16 %v2682
          %v2979 = vunpack.c.h.b16 %v2682
          %v2980 = vunpack.c.l.b16 %v2683
          %v2981 = vunpack.c.h.b16 %v2683
          %v2982 = vunpack.c.l.b16 %v2684
          %v2983 = vunpack.c.h.b16 %v2684
          %v2984 = vunpack.c.l.b16 %v2685
          %v2985 = vunpack.c.h.b16 %v2685
          %v2986 = vunpack.c.l.b16 %v2686
          %v2987 = vunpack.c.h.b16 %v2686
          %v2988 = vunpack.c.l.b16 %v2687
          %v2989 = vunpack.c.h.b16 %v2687
          %v2990 = vunpack.c.l.b16 %v2688
          %v2991 = vunpack.c.h.b16 %v2688
          %v2992 = vunpack.c.l.b16 %v2689
          %v2993 = vunpack.c.h.b16 %v2689
          %v2994 = vunpack.c.l.b16 %v2690
          %v2995 = vunpack.c.h.b16 %v2690
          %v2996 = vunpack.c.l.b16 %v2691
          %v2997 = vunpack.c.h.b16 %v2691
          %v2998 = vunpack.c.l.b16 %v2692
          %v2999 = vunpack.c.h.b16 %v2692
          %v3000 = vunpack.c.l.b16 %v2693
          %v3001 = vunpack.c.h.b16 %v2693
          %v3002 = vunpack.c.l.b16 %v2694
          %v3003 = vunpack.c.h.b16 %v2694
          %v3004 = vunpack.c.l.b16 %v2695
          %v3005 = vunpack.c.h.b16 %v2695
          %v3006 = vunpack.c.l.b16 %v2696
          %v3007 = vunpack.c.h.b16 %v2696
          %v3008 = vunpack.c.l.b16 %v2697
          %v3009 = vunpack.c.h.b16 %v2697
          %v3010 = vunpack.c.l.b16 %v2698
          %v3011 = vunpack.c.h.b16 %v2698
          %v3012 = vunpack.c.l.b16 %v2699
          %v3013 = vunpack.c.h.b16 %v2699
          %v3014 = vunpack.c.l.b16 %v2700
          %v3015 = vunpack.c.h.b16 %v2700
          %v3016 = vunpack.c.l.b16 %v2701
          %v3017 = vunpack.c.h.b16 %v2701
          %v3018 = vunpack.c.l.b16 %v2702
          %v3019 = vunpack.c.h.b16 %v2702
          %v3020 = vunpack.c.l.b16 %v2703
          %v3021 = vunpack.c.h.b16 %v2703
          %v3022 = vunpack.c.l.b16 %v2704
          %v3023 = vunpack.c.h.b16 %v2704
          %v3024 = vunpack.c.l.b16 %v2705
          %v3025 = vunpack.c.h.b16 %v2705
          %v3026 = vunpack.c.l.b16 %v2706
          %v3027 = vunpack.c.h.b16 %v2706
          %v3028 = vunpack.c.l.b16 %v2707
          %v3029 = vunpack.c.h.b16 %v2707
          %v3030 = vunpack.c.l.b16 %v2708
          %v3031 = vunpack.c.h.b16 %v2708
          %v3032 = vunpack.c.l.b16 %v2709
          %v3033 = vunpack.c.h.b16 %v2709
          %v3034 = vunpack.c.l.b16 %v2710
          %v3035 = vunpack.c.h.b16 %v2710
          %v3036 = vunpack.c.l.b16 %v2711
          %v3037 = vunpack.c.h.b16 %v2711
          %v3038 = vunpack.c.l.b16 %v2712
          %v3039 = vunpack.c.h.b16 %v2712
          %v3040 = vunpack.c.l.b16 %v2713
          %v3041 = vunpack.c.h.b16 %v2713
          %v3042 = vunpack.c.l.b16 %v2714
          %v3043 = vunpack.c.h.b16 %v2714
          %v3044 = vunpack.c.l.b16 %v2715
          %v3045 = vunpack.c.h.b16 %v2715
          %v3046 = vunpack.c.l.b16 %v2716
          %v3047 = vunpack.c.h.b16 %v2716
          %v3048 = vunpack.c.l.b16 %v2717
          %v3049 = vunpack.c.h.b16 %v2717
          %v3050 = vunpack.c.l.b16 %v2718
          %v3051 = vunpack.c.h.b16 %v2718
          %v3052 = vunpack.c.l.b16 %v2719
          %v3053 = vunpack.c.h.b16 %v2719
          %v3054 = vunpack.c.l.b16 %v2720
          %v3055 = vunpack.c.h.b16 %v2720
          %v3056 = vunpack.c.l.b16 %v2721
          %v3057 = vunpack.c.h.b16 %v2721
          %v3058 = vunpack.c.l.b16 %v2722
          %v3059 = vunpack.c.h.b16 %v2722
          %v3060 = vunpack.c.l.b16 %v2723
          %v3061 = vunpack.c.h.b16 %v2723
          %v3062 = vunpack.c.l.b16 %v2724
          %v3063 = vunpack.c.h.b16 %v2724
          %v3064 = vunpack.c.l.b16 %v2725
          %v3065 = vunpack.c.h.b16 %v2725
          %v3066 = vunpack.c.l.b16 %v2726
          %v3067 = vunpack.c.h.b16 %v2726
          %v3068 = vunpack.c.l.b16 %v2727
          %v3069 = vunpack.c.h.b16 %v2727
          %v3070 = vunpack.c.l.b16 %v2728
          %v3071 = vunpack.c.h.b16 %v2728
          %v3072 = vunpack.c.l.b16 %v2729
          %v3073 = vunpack.c.h.b16 %v2729
          %v3074 = vunpack.c.l.b16 %v2730
          %v3075 = vunpack.c.h.b16 %v2730
          %v3076 = vunpack.c.l.b16 %v2731
          %v3077 = vunpack.c.h.b16 %v2731
          %v3078 = vunpack.c.l.b16 %v2732
          %v3079 = vunpack.c.h.b16 %v2732
          %v3080 = vunpack.c.l.b16 %v2733
          %v3081 = vunpack.c.h.b16 %v2733
          %v3082 = vunpack.c.l.b16 %v2734
          %v3083 = vunpack.c.h.b16 %v2734
          %v3084 = vunpack.c.l.b16 %v2735
          %v3085 = vunpack.c.h.b16 %v2735
          %v3086 = vunpack.c.l.b16 %v2736
          %v3087 = vunpack.c.h.b16 %v2736
          %v3088 = vunpack.c.l.b16 %v2737
          %v3089 = vunpack.c.h.b16 %v2737
          %v3090 = vunpack.c.l.b16 %v2738
          %v3091 = vunpack.c.h.b16 %v2738
          %v3092 = vunpack.c.l.b16 %v2739
          %v3093 = vunpack.c.h.b16 %v2739
          %v3094 = vunpack.c.l.b16 %v2740
          %v3095 = vunpack.c.h.b16 %v2740
          %v3096 = vunpack.c.l.b16 %v2741
          %v3097 = vunpack.c.h.b16 %v2741
          %v3098 = vunpack.c.l.b16 %v2742
          %v3099 = vunpack.c.h.b16 %v2742
          %v3100 = vunpack.c.l.b16 %v2743
          %v3101 = vunpack.c.h.b16 %v2743
          %v3102 = vunpack.c.l.b16 %v2744
          %v3103 = vunpack.c.h.b16 %v2744
          %v3104 = vunpack.c.l.b16 %v2745
          %v3105 = vunpack.c.h.b16 %v2745
          %v3106 = vunpack.c.l.b16 %v2746
          %v3107 = vunpack.c.h.b16 %v2746
          %v3108 = vunpack.c.l.b16 %v2747
          %v3109 = vunpack.c.h.b16 %v2747
          %v3110 = vunpack.c.l.b16 %v2748
          %v3111 = vunpack.c.h.b16 %v2748
          %v3112 = vunpack.c.l.b16 %v2749
          %v3113 = vunpack.c.h.b16 %v2749
          %v3114 = vunpack.c.l.b16 %v2750
          %v3115 = vunpack.c.h.b16 %v2750
          %v3116 = vunpack.c.l.b16 %v2751
          %v3117 = vunpack.c.h.b16 %v2751
          %v3118 = vunpack.c.l.b16 %v2752
          %v3119 = vunpack.c.h.b16 %v2752
          %v3120 = vunpack.c.l.b16 %v2753
          %v3121 = vunpack.c.h.b16 %v2753
          %v3122 = vunpack.c.l.b16 %v2754
          %v3123 = vunpack.c.h.b16 %v2754
          %v3124 = vunpack.c.l.b16 %v2755
          %v3125 = vunpack.c.h.b16 %v2755
          %v3126 = vunpack.c.l.b16 %v2756
          %v3127 = vunpack.c.h.b16 %v2756
          %v3128 = vunpack.c.l.b16 %v2757
          %v3129 = vunpack.c.h.b16 %v2757
          %v3130 = vunpack.c.l.b16 %v2758
          %v3131 = vunpack.c.h.b16 %v2758
          %v3132 = vunpack.c.l.b16 %v2759
          %v3133 = vunpack.c.h.b16 %v2759
          %v3134 = vunpack.c.l.b16 %v2760
          %v3135 = vunpack.c.h.b16 %v2760
          %v3136 = vunpack.c.l.b16 %v2761
          %v3137 = vunpack.c.h.b16 %v2761
          %v3138 = vunpack.c.l.b16 %v2762
          %v3139 = vunpack.c.h.b16 %v2762
          %v3140 = vunpack.c.l.b16 %v2763
          %v3141 = vunpack.c.h.b16 %v2763
          %v3142 = vunpack.c.l.b16 %v2764
          %v3143 = vunpack.c.h.b16 %v2764
          %v3144 = vunpack.c.l.b16 %v2765
          %v3145 = vunpack.c.h.b16 %v2765
          %v3146 = vunpack.c.l.b16 %v2766
          %v3147 = vunpack.c.h.b16 %v2766
          %v3148 = vunpack.c.l.b16 %v2767
          %v3149 = vunpack.c.h.b16 %v2767
          %v3150 = vunpack.c.l.b16 %v2768
          %v3151 = vunpack.c.h.b16 %v2768
          %v3152 = vunpack.c.l.b16 %v2769
          %v3153 = vunpack.c.h.b16 %v2769
          %v3154 = vunpack.c.l.b16 %v2770
          %v3155 = vunpack.c.h.b16 %v2770
          %v3156 = vunpack.c.l.b16 %v2771
          %v3157 = vunpack.c.h.b16 %v2771
          %v3158 = vunpack.c.l.b16 %v2772
          %v3159 = vunpack.c.h.b16 %v2772
          %v3160 = vunpack.c.l.b16 %v2773
          %v3161 = vunpack.c.h.b16 %v2773
          %v3162 = vunpack.c.l.b16 %v2774
          %v3163 = vunpack.c.h.b16 %v2774
          %v3164 = vunpack.c.l.b16 %v2775
          %v3165 = vunpack.c.h.b16 %v2775
          %v3166 = vunpack.c.l.b16 %v2776
          %v3167 = vunpack.c.h.b16 %v2776
          %v3168 = vunpack.c.l.b16 %v2777
          %v3169 = vunpack.c.h.b16 %v2777
          %v3170 = vunpack.c.l.b16 %v2778
          %v3171 = vunpack.c.h.b16 %v2778
          %v3172 = vunpack.c.l.b16 %v2779
          %v3173 = vunpack.c.h.b16 %v2779
          %v3174 = vpack.c.b16 %v2922, %v2918
          %v3175 = vpack.c.b16 %v2923, %v2919
          %v3176 = vpack.c.b16 %v2924, %v2920
          %v3177 = vpack.c.b16 %v2925, %v2921
          %v3178 = vpack.c.b16 %v2930, %v2926
          %v3179 = vpack.c.b16 %v2931, %v2927
          %v3180 = vpack.c.b16 %v2932, %v2928
          %v3181 = vpack.c.b16 %v2933, %v2929
          %v3182 = vpack.c.b16 %v2938, %v2934
          %v3183 = vpack.c.b16 %v2939, %v2935
          %v3184 = vpack.c.b16 %v2940, %v2936
          %v3185 = vpack.c.b16 %v2941, %v2937
          %v3186 = vpack.c.b16 %v2946, %v2942
          %v3187 = vpack.c.b16 %v2947, %v2943
          %v3188 = vpack.c.b16 %v2948, %v2944
          %v3189 = vpack.c.b16 %v2949, %v2945
          %v3190 = vpack.c.b16 %v2954, %v2950
          %v3191 = vpack.c.b16 %v2955, %v2951
          %v3192 = vpack.c.b16 %v2956, %v2952
          %v3193 = vpack.c.b16 %v2957, %v2953
          %v3194 = vpack.c.b16 %v2962, %v2958
          %v3195 = vpack.c.b16 %v2963, %v2959
          %v3196 = vpack.c.b16 %v2964, %v2960
          %v3197 = vpack.c.b16 %v2965, %v2961
          %v3198 = vpack.c.b16 %v2970, %v2966
          %v3199 = vpack.c.b16 %v2971, %v2967
          %v3200 = vpack.c.b16 %v2972, %v2968
          %v3201 = vpack.c.b16 %v2973, %v2969
          %v3202 = vpack.c.b16 %v2978, %v2974
          %v3203 = vpack.c.b16 %v2979, %v2975
          %v3204 = vpack.c.b16 %v2980, %v2976
          %v3205 = vpack.c.b16 %v2981, %v2977
          %v3206 = vpack.c.b16 %v2986, %v2982
          %v3207 = vpack.c.b16 %v2987, %v2983
          %v3208 = vpack.c.b16 %v2988, %v2984
          %v3209 = vpack.c.b16 %v2989, %v2985
          %v3210 = vpack.c.b16 %v2994, %v2990
          %v3211 = vpack.c.b16 %v2995, %v2991
          %v3212 = vpack.c.b16 %v2996, %v2992
          %v3213 = vpack.c.b16 %v2997, %v2993
          %v3214 = vpack.c.b16 %v3002, %v2998
          %v3215 = vpack.c.b16 %v3003, %v2999
          %v3216 = vpack.c.b16 %v3004, %v3000
          %v3217 = vpack.c.b16 %v3005, %v3001
          %v3218 = vpack.c.b16 %v3010, %v3006
          %v3219 = vpack.c.b16 %v3011, %v3007
          %v3220 = vpack.c.b16 %v3012, %v3008
          %v3221 = vpack.c.b16 %v3013, %v3009
          %v3222 = vpack.c.b16 %v3018, %v3014
          %v3223 = vpack.c.b16 %v3019, %v3015
          %v3224 = vpack.c.b16 %v3020, %v3016
          %v3225 = vpack.c.b16 %v3021, %v3017
          %v3226 = vpack.c.b16 %v3026, %v3022
          %v3227 = vpack.c.b16 %v3027, %v3023
          %v3228 = vpack.c.b16 %v3028, %v3024
          %v3229 = vpack.c.b16 %v3029, %v3025
          %v3230 = vpack.c.b16 %v3034, %v3030
          %v3231 = vpack.c.b16 %v3035, %v3031
          %v3232 = vpack.c.b16 %v3036, %v3032
          %v3233 = vpack.c.b16 %v3037, %v3033
          %v3234 = vpack.c.b16 %v3042, %v3038
          %v3235 = vpack.c.b16 %v3043, %v3039
          %v3236 = vpack.c.b16 %v3044, %v3040
          %v3237 = vpack.c.b16 %v3045, %v3041
          %v3238 = vpack.c.b16 %v3050, %v3046
          %v3239 = vpack.c.b16 %v3051, %v3047
          %v3240 = vpack.c.b16 %v3052, %v3048
          %v3241 = vpack.c.b16 %v3053, %v3049
          %v3242 = vpack.c.b16 %v3058, %v3054
          %v3243 = vpack.c.b16 %v3059, %v3055
          %v3244 = vpack.c.b16 %v3060, %v3056
          %v3245 = vpack.c.b16 %v3061, %v3057
          %v3246 = vpack.c.b16 %v3066, %v3062
          %v3247 = vpack.c.b16 %v3067, %v3063
          %v3248 = vpack.c.b16 %v3068, %v3064
          %v3249 = vpack.c.b16 %v3069, %v3065
          %v3250 = vpack.c.b16 %v3074, %v3070
          %v3251 = vpack.c.b16 %v3075, %v3071
          %v3252 = vpack.c.b16 %v3076, %v3072
          %v3253 = vpack.c.b16 %v3077, %v3073
          %v3254 = vpack.c.b16 %v3082, %v3078
          %v3255 = vpack.c.b16 %v3083, %v3079
          %v3256 = vpack.c.b16 %v3084, %v3080
          %v3257 = vpack.c.b16 %v3085, %v3081
          %v3258 = vpack.c.b16 %v3090, %v3086
          %v3259 = vpack.c.b16 %v3091, %v3087
          %v3260 = vpack.c.b16 %v3092, %v3088
          %v3261 = vpack.c.b16 %v3093, %v3089
          %v3262 = vpack.c.b16 %v3098, %v3094
          %v3263 = vpack.c.b16 %v3099, %v3095
          %v3264 = vpack.c.b16 %v3100, %v3096
          %v3265 = vpack.c.b16 %v3101, %v3097
          %v3266 = vpack.c.b16 %v3106, %v3102
          %v3267 = vpack.c.b16 %v3107, %v3103
          %v3268 = vpack.c.b16 %v3108, %v3104
          %v3269 = vpack.c.b16 %v3109, %v3105
          %v3270 = vpack.c.b16 %v3114, %v3110
          %v3271 = vpack.c.b16 %v3115, %v3111
          %v3272 = vpack.c.b16 %v3116, %v3112
          %v3273 = vpack.c.b16 %v3117, %v3113
          %v3274 = vpack.c.b16 %v3122, %v3118
          %v3275 = vpack.c.b16 %v3123, %v3119
          %v3276 = vpack.c.b16 %v3124, %v3120
          %v3277 = vpack.c.b16 %v3125, %v3121
          %v3278 = vpack.c.b16 %v3130, %v3126
          %v3279 = vpack.c.b16 %v3131, %v3127
          %v3280 = vpack.c.b16 %v3132, %v3128
          %v3281 = vpack.c.b16 %v3133, %v3129
          %v3282 = vpack.c.b16 %v3138, %v3134
          %v3283 = vpack.c.b16 %v3139, %v3135
          %v3284 = vpack.c.b16 %v3140, %v3136
          %v3285 = vpack.c.b16 %v3141, %v3137
          %v3286 = vpack.c.b16 %v3146, %v3142
          %v3287 = vpack.c.b16 %v3147, %v3143
          %v3288 = vpack.c.b16 %v3148, %v3144
          %v3289 = vpack.c.b16 %v3149, %v3145
          %v3290 = vpack.c.b16 %v3154, %v3150
          %v3291 = vpack.c.b16 %v3155, %v3151
          %v3292 = vpack.c.b16 %v3156, %v3152
          %v3293 = vpack.c.b16 %v3157, %v3153
          %v3294 = vpack.c.b16 %v3162, %v3158
          %v3295 = vpack.c.b16 %v3163, %v3159
          %v3296 = vpack.c.b16 %v3164, %v3160
          %v3297 = vpack.c.b16 %v3165, %v3161
          %v3298 = vpack.c.b16 %v3170, %v3166
          %v3299 = vpack.c.b16 %v3171, %v3167
          %v3300 = vpack.c.b16 %v3172, %v3168
          %v3301 = vpack.c.b16 %v3173, %v3169
          %3430 = vmatpush.bf16.msra.mxu0 %v3202
          %3431 = vmatpush.bf16.msra.mxu0 %v3198
          %3432 = vmatpush.bf16.msra.mxu0 %v3194
          %3433 = vmatpush.bf16.msra.mxu0 %v3190
          %3434 = vmatpush.bf16.msra.mxu0 %v3186
          %3435 = vmatpush.bf16.msra.mxu0 %v3182
          %3436 = vmatpush.bf16.msra.mxu0 %v3178
          %3437 = vmatpush.bf16.msra.mxu0 %v3174
          %3438 = vmatmul.bf16.gmra.mxu0 %v2648
          %v3439 = vpop.f32.mrf.mxu0
          %v3440 = vadd.f32 %v2782, %v3439
          %v3441 = vpop.f32.mrf.mxu0
          %3442 = vdwg.mxu0
          %3443 = vmatpush.bf16.msra.mxu0 %v3234
          %3444 = vmatpush.bf16.msra.mxu0 %v3230
          %3445 = vmatpush.bf16.msra.mxu0 %v3226
          %3446 = vmatpush.bf16.msra.mxu0 %v3222
          %3447 = vmatpush.bf16.msra.mxu0 %v3218
          %3448 = vmatpush.bf16.msra.mxu0 %v3214
          %3449 = vmatpush.bf16.msra.mxu0 %v3210
          %3450 = vmatpush.bf16.msra.mxu0 %v3206
          %3451 = vmatmul.bf16.gmra.mxu0 %v2649
          %v3452 = vpop.f32.mrf.mxu0
          %v3453 = vadd.f32 %v3440, %v3452
          %v3454 = vpop.f32.mrf.mxu0
          %3455 = vdwg.mxu0
          %3456 = vmatpush.bf16.msra.mxu0 %v3266
          %3457 = vmatpush.bf16.msra.mxu0 %v3262
          %3458 = vmatpush.bf16.msra.mxu0 %v3258
          %3459 = vmatpush.bf16.msra.mxu0 %v3254
          %3460 = vmatpush.bf16.msra.mxu0 %v3250
          %3461 = vmatpush.bf16.msra.mxu0 %v3246
          %3462 = vmatpush.bf16.msra.mxu0 %v3242
          %3463 = vmatpush.bf16.msra.mxu0 %v3238
          %3464 = vmatmul.bf16.gmra.mxu0 %v2650
          %v3465 = vpop.f32.mrf.mxu0
          %v3466 = vadd.f32 %v3453, %v3465
          %v3467 = vpop.f32.mrf.mxu0
          %3468 = vdwg.mxu0
          %3469 = vmatpush.bf16.msra.mxu0 %v3298
          %3470 = vmatpush.bf16.msra.mxu0 %v3294
          %3471 = vmatpush.bf16.msra.mxu0 %v3290
          %3472 = vmatpush.bf16.msra.mxu0 %v3286
          %3473 = vmatpush.bf16.msra.mxu0 %v3282
          %3474 = vmatpush.bf16.msra.mxu0 %v3278
          %3475 = vmatpush.bf16.msra.mxu0 %v3274
          %3476 = vmatpush.bf16.msra.mxu0 %v3270
          %3477 = vmatmul.bf16.gmra.mxu0 %v2651
          %v3478 = vpop.f32.mrf.mxu0
          %v3479 = vadd.f32 %v3466, %v3478
          %v3480 = vpop.f32.mrf.mxu0
          %3481 = vdwg.mxu0
          %3482 = vmatpush.bf16.msra.mxu0 %v3203
          %3483 = vmatpush.bf16.msra.mxu0 %v3199
          %3484 = vmatpush.bf16.msra.mxu0 %v3195
          %3485 = vmatpush.bf16.msra.mxu0 %v3191
          %3486 = vmatpush.bf16.msra.mxu0 %v3187
          %3487 = vmatpush.bf16.msra.mxu0 %v3183
          %3488 = vmatpush.bf16.msra.mxu0 %v3179
          %3489 = vmatpush.bf16.msra.mxu0 %v3175
          %3490 = vmatmul.bf16.gmra.mxu0 %v2648
          %v3491 = vpop.f32.mrf.mxu0
          %v3492 = vadd.f32 %v2783, %v3491
          %v3493 = vpop.f32.mrf.mxu0
          %3494 = vdwg.mxu0
          %3495 = vmatpush.bf16.msra.mxu0 %v3235
          %3496 = vmatpush.bf16.msra.mxu0 %v3231
          %3497 = vmatpush.bf16.msra.mxu0 %v3227
          %3498 = vmatpush.bf16.msra.mxu0 %v3223
          %3499 = vmatpush.bf16.msra.mxu0 %v3219
          %3500 = vmatpush.bf16.msra.mxu0 %v3215
          %3501 = vmatpush.bf16.msra.mxu0 %v3211
          %3502 = vmatpush.bf16.msra.mxu0 %v3207
          %3503 = vmatmul.bf16.gmra.mxu0 %v2649
          %v3504 = vpop.f32.mrf.mxu0
          %v3505 = vadd.f32 %v3492, %v3504
          %v3506 = vpop.f32.mrf.mxu0
          %3507 = vdwg.mxu0
          %3508 = vmatpush.bf16.msra.mxu0 %v3267
          %3509 = vmatpush.bf16.msra.mxu0 %v3263
          %3510 = vmatpush.bf16.msra.mxu0 %v3259
          %3511 = vmatpush.bf16.msra.mxu0 %v3255
          %3512 = vmatpush.bf16.msra.mxu0 %v3251
          %3513 = vmatpush.bf16.msra.mxu0 %v3247
          %3514 = vmatpush.bf16.msra.mxu0 %v3243
          %3515 = vmatpush.bf16.msra.mxu0 %v3239
          %3516 = vmatmul.bf16.gmra.mxu0 %v2650
          %v3517 = vpop.f32.mrf.mxu0
          %v3518 = vadd.f32 %v3505, %v3517
          %v3519 = vpop.f32.mrf.mxu0
          %3520 = vdwg.mxu0
          %3521 = vmatpush.bf16.msra.mxu0 %v3299
          %3522 = vmatpush.bf16.msra.mxu0 %v3295
          %3523 = vmatpush.bf16.msra.mxu0 %v3291
          %3524 = vmatpush.bf16.msra.mxu0 %v3287
          %3525 = vmatpush.bf16.msra.mxu0 %v3283
          %3526 = vmatpush.bf16.msra.mxu0 %v3279
          %3527 = vmatpush.bf16.msra.mxu0 %v3275
          %3528 = vmatpush.bf16.msra.mxu0 %v3271
          %3529 = vmatmul.bf16.gmra.mxu0 %v2651
          %v3530 = vpop.f32.mrf.mxu0
          %v3531 = vadd.f32 %v3518, %v3530
          %v3532 = vpop.f32.mrf.mxu0
          %3533 = vdwg.mxu0
          %3534 = vmatpush.bf16.msra.mxu0 %v3204
          %3535 = vmatpush.bf16.msra.mxu0 %v3200
          %3536 = vmatpush.bf16.msra.mxu0 %v3196
          %3537 = vmatpush.bf16.msra.mxu0 %v3192
          %3538 = vmatpush.bf16.msra.mxu0 %v3188
          %3539 = vmatpush.bf16.msra.mxu0 %v3184
          %3540 = vmatpush.bf16.msra.mxu0 %v3180
          %3541 = vmatpush.bf16.msra.mxu0 %v3176
          %3542 = vmatmul.bf16.gmra.mxu0 %v2648
          %v3543 = vpop.f32.mrf.mxu0
          %v3544 = vadd.f32 %v2784, %v3543
          %v3545 = vpop.f32.mrf.mxu0
          %3546 = vdwg.mxu0
          %3547 = vmatpush.bf16.msra.mxu0 %v3236
          %3548 = vmatpush.bf16.msra.mxu0 %v3232
          %3549 = vmatpush.bf16.msra.mxu0 %v3228
          %3550 = vmatpush.bf16.msra.mxu0 %v3224
          %3551 = vmatpush.bf16.msra.mxu0 %v3220
          %3552 = vmatpush.bf16.msra.mxu0 %v3216
          %3553 = vmatpush.bf16.msra.mxu0 %v3212
          %3554 = vmatpush.bf16.msra.mxu0 %v3208
          %3555 = vmatmul.bf16.gmra.mxu0 %v2649
          %v3556 = vpop.f32.mrf.mxu0
          %v3557 = vadd.f32 %v3544, %v3556
          %v3558 = vpop.f32.mrf.mxu0
          %3559 = vdwg.mxu0
          %3560 = vmatpush.bf16.msra.mxu0 %v3268
          %3561 = vmatpush.bf16.msra.mxu0 %v3264
          %3562 = vmatpush.bf16.msra.mxu0 %v3260
          %3563 = vmatpush.bf16.msra.mxu0 %v3256
          %3564 = vmatpush.bf16.msra.mxu0 %v3252
          %3565 = vmatpush.bf16.msra.mxu0 %v3248
          %3566 = vmatpush.bf16.msra.mxu0 %v3244
          %3567 = vmatpush.bf16.msra.mxu0 %v3240
          %3568 = vmatmul.bf16.gmra.mxu0 %v2650
          %v3569 = vpop.f32.mrf.mxu0
          %v3570 = vadd.f32 %v3557, %v3569
          %v3571 = vpop.f32.mrf.mxu0
          %3572 = vdwg.mxu0
          %3573 = vmatpush.bf16.msra.mxu0 %v3300
          %3574 = vmatpush.bf16.msra.mxu0 %v3296
          %3575 = vmatpush.bf16.msra.mxu0 %v3292
          %3576 = vmatpush.bf16.msra.mxu0 %v3288
          %3577 = vmatpush.bf16.msra.mxu0 %v3284
          %3578 = vmatpush.bf16.msra.mxu0 %v3280
          %3579 = vmatpush.bf16.msra.mxu0 %v3276
          %3580 = vmatpush.bf16.msra.mxu0 %v3272
          %3581 = vmatmul.bf16.gmra.mxu0 %v2651
          %v3582 = vpop.f32.mrf.mxu0
          %v3583 = vadd.f32 %v3570, %v3582
          %v3584 = vpop.f32.mrf.mxu0
          %3585 = vdwg.mxu0
          %3586 = vmatpush.bf16.msra.mxu0 %v3205
          %3587 = vmatpush.bf16.msra.mxu0 %v3201
          %3588 = vmatpush.bf16.msra.mxu0 %v3197
          %3589 = vmatpush.bf16.msra.mxu0 %v3193
          %3590 = vmatpush.bf16.msra.mxu0 %v3189
          %3591 = vmatpush.bf16.msra.mxu0 %v3185
          %3592 = vmatpush.bf16.msra.mxu0 %v3181
          %3593 = vmatpush.bf16.msra.mxu0 %v3177
          %3594 = vmatmul.bf16.gmra.mxu0 %v2648
          %v3595 = vpop.f32.mrf.mxu0
          %v3596 = vadd.f32 %v2785, %v3595
          %v3597 = vpop.f32.mrf.mxu0
          %3598 = vdwg.mxu0
          %3599 = vmatpush.bf16.msra.mxu0 %v3237
          %3600 = vmatpush.bf16.msra.mxu0 %v3233
          %3601 = vmatpush.bf16.msra.mxu0 %v3229
          %3602 = vmatpush.bf16.msra.mxu0 %v3225
          %3603 = vmatpush.bf16.msra.mxu0 %v3221
          %3604 = vmatpush.bf16.msra.mxu0 %v3217
          %3605 = vmatpush.bf16.msra.mxu0 %v3213
          %3606 = vmatpush.bf16.msra.mxu0 %v3209
          %3607 = vmatmul.bf16.gmra.mxu0 %v2649
          %v3608 = vpop.f32.mrf.mxu0
          %v3609 = vadd.f32 %v3596, %v3608
          %v3610 = vpop.f32.mrf.mxu0
          %3611 = vdwg.mxu0
          %3612 = vmatpush.bf16.msra.mxu0 %v3269
          %3613 = vmatpush.bf16.msra.mxu0 %v3265
          %3614 = vmatpush.bf16.msra.mxu0 %v3261
          %3615 = vmatpush.bf16.msra.mxu0 %v3257
          %3616 = vmatpush.bf16.msra.mxu0 %v3253
          %3617 = vmatpush.bf16.msra.mxu0 %v3249
          %3618 = vmatpush.bf16.msra.mxu0 %v3245
          %3619 = vmatpush.bf16.msra.mxu0 %v3241
          %3620 = vmatmul.bf16.gmra.mxu0 %v2650
          %v3621 = vpop.f32.mrf.mxu0
          %v3622 = vadd.f32 %v3609, %v3621
          %v3623 = vpop.f32.mrf.mxu0
          %3624 = vdwg.mxu0
          %3625 = vmatpush.bf16.msra.mxu0 %v3301
          %3626 = vmatpush.bf16.msra.mxu0 %v3297
          %3627 = vmatpush.bf16.msra.mxu0 %v3293
          %3628 = vmatpush.bf16.msra.mxu0 %v3289
          %3629 = vmatpush.bf16.msra.mxu0 %v3285
          %3630 = vmatpush.bf16.msra.mxu0 %v3281
          %3631 = vmatpush.bf16.msra.mxu0 %v3277
          %3632 = vmatpush.bf16.msra.mxu0 %v3273
          %3633 = vmatmul.bf16.gmra.mxu0 %v2651
          %v3634 = vpop.f32.mrf.mxu0
          %v3635 = vadd.f32 %v3622, %v3634
          %v3636 = vpop.f32.mrf.mxu0
          %3637 = vdwg.mxu0
          %3638 = vst [vmem:[%s362] sm:$0xff] %v3479
          %3639 = vst [vmem:[%s362 + $0x8] sm:$0xff] %v3531
          %3640 = vst [vmem:[%s362 + $0x10] sm:$0xff] %v3583
          %3641 = vst [vmem:[%s362 + $0x18] sm:$0xff] %v3635
        $region60: #{rnd_forward.7} parent=55 // pred_fallthru
          _
        %p3642 = scmp.eq.s32.totalorder %s22, 1
        // Predicated region
        $region61: #{rnd_forward.7} parent=55 // pred_check
          %p3643 = pneg %p3642
        $region62: #{rnd_forward.7} parent=55 // pred_check_branch
          %3645 = sbr.rel (%p3643) target = $region64
        $region63: #{rnd_forward.7} parent=55 // pred_region
          %3646 = vst [vmem:[%s362] sm:$0xff] %v1642
          %3647 = vst [vmem:[%s362 + $0x8] sm:$0xff] %v1643
          %3648 = vst [vmem:[%s362 + $0x10] sm:$0xff] %v1644
          %3649 = vst [vmem:[%s362 + $0x18] sm:$0xff] %v1645
        $region64: #{rnd_forward.7} parent=55 // pred_fallthru
          _
      $region56: #{rnd_forward.7} parent=47 // pred_fallthru
        _
      %p3650 = scmp.lt.s32.totalorder %s22, 1
      %s3651 = scalar_select %p3650, %s22, 1
      %s3652 = smul.addr %s3651, 4
      %s3653 = smul.addr %s3652, 8
      %s3654 = scalar_lea.vmem %s7, %s3653
      // Predicated region
      $region65: #{rnd_forward.7} parent=47 // pred_check
        %p3655 = pneg %p214
      $region66: #{rnd_forward.7} parent=47 // pred_check_branch
        %3657 = sbr.rel (%p3655) target = $region68
      $region67: #{rnd_forward.7} parent=47 // pred_region
        _
      $region68: #{rnd_forward.7} parent=47 // pred_fallthru
        _
    $region48: #{rnd_forward.7} parent=5 // pred_fallthru
      _
    %p3658 = scmp.le.s32.totalorder 2, %s13
    // Predicated region
    $region69: #{rnd_forward.7} parent=5 // pred_check
      %p3659 = pneg %p3658
    $region70: #{rnd_forward.7} parent=5 // pred_check_branch
      %3661 = sbr.rel (%p3659) target = $region72
    $region71: #{rnd_forward.7} parent=5 // pred_region
      %s3662 = ssub.s32 %s13, 2
      // Predicated region
      $region73: #{rnd_forward.7} parent=71 // pred_check
        %p3663 = pneg %p220
      $region74: #{rnd_forward.7} parent=71 // pred_check_branch
        %3665 = sbr.rel (%p3663) target = $region76
      $region75: #{rnd_forward.7} parent=71 // pred_region
        %p3666 = scmp.lt.s32.totalorder %s24, 1
        %s3667 = scalar_select %p3666, %s24, 1
        %s3668 = smul.addr %s3667, 4
        %s3669 = smul.addr %s3668, 8
        %s3670 = scalar_lea.vmem %s7, %s3669
      $region76: #{rnd_forward.7} parent=71 // pred_fallthru
        _
    $region72: #{rnd_forward.7} parent=5 // pred_fallthru
      _
  $region6: #{rnd_forward.7} parent=0 // loop_footer
    %s17 = sadd.s32 1, %s13
  $region7: #{rnd_forward.7} parent=0 // loop_footer_branch
    %12 = sbr.rel target = $region3
  $region8: #{rnd_forward.7} parent=0 // loop_exit
    _

</llo_original>
